<compile_context>
chip_gen: v6e
topology: v6e:2x2x1
jax: 0.10.0
libtpu: 0.0.40
codegen_flags: <defaults>
</compile_context>

<pallas_src>
from functools import partial

import numpy as np
import jax
import jax.numpy as jnp
from jax import lax
from jax.experimental import pallas as pl
from jax.experimental.pallas import tpu as pltpu

ELEM_LIST_LEN = 23
ATOM_FDIM = ELEM_LIST_LEN + 6 + 5 + 1   # 35
BOND_FDIM = 5                           # fbonds feature dim = 40
MAX_NB = 30

LANE = 128
SUBLANE = 8
PAD_NB = 32                             # neighbour-index columns padded 30 -> 32


def _round_up(x, m):
    return ((x + m - 1) // m) * m


def _pad2(x, rows, cols, dtype):
    x = x.astype(dtype)
    return jnp.pad(x, ((0, rows - x.shape[0]), (0, cols - x.shape[1])))


def _vmem_limit_bytes():
    """Generation-aware scoped-VMEM limit (leave ~25% headroom, cap at 100 MiB)."""
    try:
        cap = int(pltpu.get_tpu_info().vmem_capacity_bytes)
    except Exception:
        cap = 64 * 1024 * 1024
    return int(min(cap * 3 // 4, 100 * 1024 * 1024))


# ---------------------------------------------------------------------------
# In-kernel helpers
# ---------------------------------------------------------------------------
def _count_matrix(idx, offset, n_cols):
    """idx: [rows, PAD_NB] int32 -> bf16 [rows, n_cols] count matrix.

    cnt[r, c] = #{ j < MAX_NB : idx[r, j] - offset == c }.
    Counts <= 30 are exact in bf16.  Built with 30 lane-broadcast compares on the
    VPU (no O(N^2) HBM object, working set is one row tile).
    """
    rows = idx.shape[0]
    iota = lax.broadcasted_iota(jnp.int32, (rows, n_cols), 1)
    cnt = jnp.zeros((rows, n_cols), jnp.float32)
    for j in range(MAX_NB):                     # static unroll, 30 iterations
        col = idx[:, j:j + 1] - offset          # [rows, 1]
        cnt = cnt + (col == iota).astype(jnp.float32)
    return cnt.astype(jnp.bfloat16)


# ---------------------------------------------------------------------------
# Kernels
# ---------------------------------------------------------------------------
def _bond_init_kernel(bgraph_ref, fbonds_ref, tmsg_ref, w_i_ref,
                      binput_ref, gm_ref, neitree_ref):
    """binput = W_i(fbonds); gm0 = relu(binput); nei_tree = sum of tree messages."""
    f32 = jnp.float32
    binput = jnp.dot(fbonds_ref[...], w_i_ref[...], preferred_element_type=f32)
    binput_ref[...] = binput
    gm_ref[...] = jnp.maximum(binput, 0.0).astype(jnp.bfloat16)
    # tree-message part of the neighbour sum is constant across depth iterations
    cnt_t = _count_matrix(bgraph_ref[...], 0, tmsg_ref.shape[0])
    neitree_ref[...] = jnp.dot(cnt_t, tmsg_ref[...], preferred_element_type=f32)


def _mp_step_kernel(total_mess, bgraph_ref, binput_ref, neitree_ref,
                    gm_prev_ref, w_h_ref, gm_new_ref):
    """One message-passing step: gm_new = relu(binput + W_h(nei_tree + nei_graph))."""
    f32 = jnp.float32
    cnt_g = _count_matrix(bgraph_ref[...], total_mess, gm_prev_ref.shape[0])
    nei = neitree_ref[...] + jnp.dot(cnt_g, gm_prev_ref[...],
                                     preferred_element_type=f32)
    nei = jnp.dot(nei.astype(jnp.bfloat16), w_h_ref[...],
                  preferred_element_type=f32)
    gm_new_ref[...] = jnp.maximum(binput_ref[...] + nei, 0.0).astype(jnp.bfloat16)


def _atom_kernel(total_mess, agraph_ref, fatoms1_ref, tmsg_ref, gm_ref,
                 w_o_a_ref, w_o_n_ref, ah_ref):
    """atom_hiddens = relu(W_o([fatoms | nei])), bias folded into the atom block."""
    f32 = jnp.float32
    idx = agraph_ref[...]
    cnt_t = _count_matrix(idx, 0, tmsg_ref.shape[0])
    cnt_g = _count_matrix(idx, total_mess, gm_ref.shape[0])
    nei = (jnp.dot(cnt_t, tmsg_ref[...], preferred_element_type=f32)
           + jnp.dot(cnt_g, gm_ref[...], preferred_element_type=f32))
    ah = (jnp.dot(fatoms1_ref[...], w_o_a_ref[...], preferred_element_type=f32)
          + jnp.dot(nei.astype(jnp.bfloat16), w_o_n_ref[...],
                    preferred_element_type=f32))
    ah_ref[...] = jnp.maximum(ah, 0.0)          # f32 output (pooling stays f32)


def _pool_kernel(pool_ref, ah_ref, out_ref):
    """Per-molecule mean pooling, fully in f32 (accuracy-critical final step)."""
    out_ref[...] = jnp.dot(pool_ref[...], ah_ref[...],
                           preferred_element_type=jnp.float32)


# ---------------------------------------------------------------------------
# Wrapper
# ---------------------------------------------------------------------------
def jtmpn_forward(params, fatoms, fbonds, agraph, bgraph, scope, tree_message, depth):
    num_atoms = fatoms.shape[0]
    num_bonds = fbonds.shape[0]
    total_mess = tree_message.shape[0]
    hidden = params["W_i"].shape[0]
    num_mols = len(scope)
    bf16, f32 = jnp.bfloat16, jnp.float32

    # Row tiles: large enough to keep the MXU's M extent busy, capped for VMEM.
    TB = min(256, _round_up(num_bonds, LANE))
    TA = min(256, _round_up(num_atoms, LANE))
    NBp = _round_up(num_bonds, TB)
    NAp = _round_up(num_atoms, TA)
    NTp = _round_up(total_mess, LANE)
    NMp = _round_up(num_mols, SUBLANE)
    Hp = _round_up(hidden, LANE)
    FBp = _round_up(fbonds.shape[1], LANE)       # 40   -> 128
    FAp = _round_up(ATOM_FDIM + 1, LANE)         # 35+1 -> 128
    n_btiles, n_atiles = NBp // TB, NAp // TA

    # --- index tables (raw int32; NO dense count matrices in HBM) ---
    bgraph_p = _pad2(jnp.asarray(bgraph, jnp.int32), NBp, PAD_NB, jnp.int32)
    agraph_p = _pad2(jnp.asarray(agraph, jnp.int32), NAp, PAD_NB, jnp.int32)

    # --- features / messages (bf16 MXU operands; ones column folds W_o bias) ---
    fatoms1 = jnp.concatenate(
        [fatoms.astype(f32), jnp.ones((num_atoms, 1), f32)], axis=1)
    fatoms1_p = _pad2(fatoms1, NAp, FAp, bf16)
    fbonds_p = _pad2(fbonds, NBp, FBp, bf16)
    tmsg_p = _pad2(tree_message, NTp, Hp, bf16)

    # --- weights, transposed for x @ W.T, bias folded into the atom block of W_o ---
    w_i_t = _pad2(params["W_i"].T, FBp, Hp, bf16)
    w_h_t = _pad2(params["W_h"].T, Hp, Hp, bf16)
    w_o_t = params["W_o"].T
    w_o_a = _pad2(jnp.concatenate([w_o_t[:ATOM_FDIM], params["b_o"][None, :]], 0),
                  FAp, Hp, bf16)
    w_o_n = _pad2(w_o_t[ATOM_FDIM:], Hp, Hp, bf16)

    vmem_limit = _vmem_limit_bytes()
    grid_params = pltpu.CompilerParams(dimension_semantics=("parallel",),
                                       vmem_limit_bytes=vmem_limit)

    # -------------------- call A: bond init (grid over bond tiles) --------------------
    flops_a = int(2 * NBp * FBp * Hp + 2 * NBp * NTp * Hp + NBp * MAX_NB * NTp)
    bytes_a = int(bgraph_p.size * 4 + fbonds_p.size * 2 + tmsg_p.size * 2
                  + w_i_t.size * 2 + NBp * Hp * (4 + 2 + 4))
    bond_init = pl.pallas_call(
        _bond_init_kernel,
        grid=(n_btiles,),
        in_specs=[
            pl.BlockSpec((TB, PAD_NB), lambda t: (t, 0)),
            pl.BlockSpec((TB, FBp), lambda t: (t, 0)),
            pl.BlockSpec((NTp, Hp), lambda t: (0, 0)),
            pl.BlockSpec((FBp, Hp), lambda t: (0, 0)),
        ],
        out_specs=(
            pl.BlockSpec((TB, Hp), lambda t: (t, 0)),
            pl.BlockSpec((TB, Hp), lambda t: (t, 0)),
            pl.BlockSpec((TB, Hp), lambda t: (t, 0)),
        ),
        out_shape=(
            jax.ShapeDtypeStruct((NBp, Hp), f32),    # binput
            jax.ShapeDtypeStruct((NBp, Hp), bf16),   # graph_message (bf16)
            jax.ShapeDtypeStruct((NBp, Hp), f32),    # nei_tree (hoisted, constant)
        ),
        compiler_params=grid_params,
        cost_estimate=pl.CostEstimate(flops=flops_a, transcendentals=0,
                                      bytes_accessed=bytes_a),
    )
    binput, gm, nei_tree_b = bond_init(bgraph_p, fbonds_p, tmsg_p, w_i_t)

    # -------------------- call B: message passing, depth-1 steps --------------------
    flops_b = int(2 * NBp * NBp * Hp + 2 * NBp * Hp * Hp + NBp * MAX_NB * NBp)
    bytes_b = int(bgraph_p.size * 4 + NBp * Hp * (4 + 4 + 2 + 2) + w_h_t.size * 2)
    mp_step = pl.pallas_call(
        partial(_mp_step_kernel, total_mess),
        grid=(n_btiles,),
        in_specs=[
            pl.BlockSpec((TB, PAD_NB), lambda t: (t, 0)),
            pl.BlockSpec((TB, Hp), lambda t: (t, 0)),
            pl.BlockSpec((TB, Hp), lambda t: (t, 0)),
            pl.BlockSpec((NBp, Hp), lambda t: (0, 0)),   # full prev message, bf16
            pl.BlockSpec((Hp, Hp), lambda t: (0, 0)),
        ],
        out_specs=pl.BlockSpec((TB, Hp), lambda t: (t, 0)),
        out_shape=jax.ShapeDtypeStruct((NBp, Hp), bf16),
        compiler_params=grid_params,
        cost_estimate=pl.CostEstimate(flops=flops_b, transcendentals=0,
                                      bytes_accessed=bytes_b),
    )
    for _ in range(depth - 1):
        gm = mp_step(bgraph_p, binput, nei_tree_b, gm, w_h_t)

    # -------------------- call C: atom aggregation + W_o (grid over atom tiles) ------
    flops_c = int(2 * NAp * (NTp + NBp) * Hp + 2 * NAp * (FAp + Hp) * Hp
                  + NAp * MAX_NB * (NTp + NBp))
    bytes_c = int(agraph_p.size * 4 + fatoms1_p.size * 2 + tmsg_p.size * 2
                  + NBp * Hp * 2 + w_o_a.size * 2 + w_o_n.size * 2 + NAp * Hp * 4)
    atom_stage = pl.pallas_call(
        partial(_atom_kernel, total_mess),
        grid=(n_atiles,),
        in_specs=[
            pl.BlockSpec((TA, PAD_NB), lambda t: (t, 0)),
            pl.BlockSpec((TA, FAp), lambda t: (t, 0)),
            pl.BlockSpec((NTp, Hp), lambda t: (0, 0)),
            pl.BlockSpec((NBp, Hp), lambda t: (0, 0)),
            pl.BlockSpec((FAp, Hp), lambda t: (0, 0)),
            pl.BlockSpec((Hp, Hp), lambda t: (0, 0)),
        ],
        out_specs=pl.BlockSpec((TA, Hp), lambda t: (t, 0)),
        out_shape=jax.ShapeDtypeStruct((NAp, Hp), f32),
        compiler_params=grid_params,
        cost_estimate=pl.CostEstimate(flops=flops_c, transcendentals=0,
                                      bytes_accessed=bytes_c),
    )
    atom_hidden = atom_stage(agraph_p, fatoms1_p, tmsg_p, gm, w_o_a, w_o_n)

    # -------------------- call D: per-molecule mean pooling, f32 ---------------------
    pool_np = np.zeros((num_mols, num_atoms), np.float32)
    for m, (st, le) in enumerate(scope):
        pool_np[m, st:st + le] = 1.0 / float(le)
    pool = _pad2(jnp.asarray(pool_np), NMp, NAp, f32)

    out_padded = pl.pallas_call(
        _pool_kernel,
        out_shape=jax.ShapeDtypeStruct((NMp, Hp), f32),
        in_specs=[pl.BlockSpec(memory_space=pltpu.MemorySpace.VMEM)] * 2,
        out_specs=pl.BlockSpec(memory_space=pltpu.MemorySpace.VMEM),
        compiler_params=pltpu.CompilerParams(vmem_limit_bytes=vmem_limit),
        cost_estimate=pl.CostEstimate(
            flops=int(2 * NMp * NAp * Hp), transcendentals=0,
            bytes_accessed=int(pool.size * 4 + NAp * Hp * 4 + NMp * Hp * 4)),
    )(pool, atom_hidden)

    return out_padded[:num_mols, :hidden]


# ---------------------------------------------------------------------------
# Pure-JAX f32 mirror of the PyTorch forward (sanity check)
# ---------------------------------------------------------------------------
def jtmpn_reference(params, fatoms, fbonds, agraph, bgraph, scope, tree_message, depth):
    W_i, W_h, W_o, b_o = params["W_i"], params["W_h"], params["W_o"], params["b_o"]
    binput = fbonds @ W_i.T
    graph_message = jax.nn.relu(binput)
    for _ in range(depth - 1):
        message = jnp.concatenate([tree_message, graph_message], axis=0)
        nei = message[bgraph].sum(axis=1)
        nei = nei @ W_h.T
        graph_message = jax.nn.relu(binput + nei)
    message = jnp.concatenate([tree_message, graph_message], axis=0)
    nei = message[agraph].sum(axis=1)
    ainput = jnp.concatenate([fatoms, nei], axis=1)
    atom_hiddens = jax.nn.relu(ainput @ W_o.T + b_o)
    mol_vecs = [atom_hiddens[st:st + le].sum(axis=0) / le for st, le in scope]
    return jnp.stack(mol_vecs, axis=0)


if __name__ == "__main__":
    hidden_size = 64
    depth = 3
    num_atoms = 90
    num_bonds = 120
    num_tree_mess = 20         # includes the zero padding row at index 0
    scope = [(0, 14), (14, 16), (30, 15), (45, 12), (57, 18), (75, 15)]  # 6 molecules

    key = jax.random.PRNGKey(0)
    keys = jax.random.split(key, 10)

    def lin_init(k, out_dim, in_dim):
        bound = 1.0 / np.sqrt(in_dim)
        return jax.random.uniform(k, (out_dim, in_dim), jnp.float32, -bound, bound)

    params = {
        "W_i": lin_init(keys[0], hidden_size, ATOM_FDIM + BOND_FDIM),
        "W_h": lin_init(keys[1], hidden_size, hidden_size),
        "W_o": lin_init(keys[2], hidden_size, ATOM_FDIM + hidden_size),
        "b_o": jax.random.uniform(keys[3], (hidden_size,), jnp.float32,
                                  -1.0 / np.sqrt(ATOM_FDIM + hidden_size),
                                  1.0 / np.sqrt(ATOM_FDIM + hidden_size)),
    }

    fatoms = jax.random.bernoulli(keys[4], 0.3, (num_atoms, ATOM_FDIM)).astype(jnp.float32)
    fbonds = jax.random.bernoulli(keys[5], 0.3,
                                  (num_bonds, ATOM_FDIM + BOND_FDIM)).astype(jnp.float32)

    total_msg = num_tree_mess + num_bonds
    agraph = jax.random.randint(keys[6], (num_atoms, MAX_NB), 0, total_msg, jnp.int32)
    bgraph = jax.random.randint(keys[7], (num_bonds, MAX_NB), 0, total_msg, jnp.int32)
    # only a few real neighbours per row; the rest are padding index 0
    col = jnp.arange(MAX_NB)[None, :]
    agraph = jnp.where(col < 4, agraph, 0)
    bgraph = jnp.where(col < 3, bgraph, 0)

    tree_message = jax.random.normal(keys[8], (num_tree_mess, hidden_size), jnp.float32)
    tree_message = tree_message.at[0].set(0.0)   # padding row, as in JTMPN.tensorize

    out = jtmpn_forward(params, fatoms, fbonds, agraph, bgraph, scope, tree_message, depth)
    out = jax.block_until_ready(out)

    ref = jtmpn_reference(params, fatoms, fbonds, agraph, bgraph, scope, tree_message, depth)
    ref = jax.block_until_ready(ref)

    assert out.shape == (len(scope), hidden_size)
    # bf16 MXU operands with f32 accumulation; pooling now fully f32
    np.testing.assert_allclose(np.asarray(out), np.asarray(ref), rtol=3e-2, atol=3e-2)

    print("KERNEL_OK")
</pallas_src>

<mosaic_0001>
module attributes {stable_mosaic.version = 11 : i64} {
  func.func @_bond_init_kernel(%arg0: i32, %arg1: memref<128x32xi32, #tpu.memory_space<vmem>>, %arg2: memref<128x128xbf16, #tpu.memory_space<vmem>>, %arg3: memref<128x128xbf16, #tpu.memory_space<vmem>>, %arg4: memref<128x128xbf16, #tpu.memory_space<vmem>>, %arg5: memref<128x128xf32, #tpu.memory_space<vmem>>, %arg6: memref<128x128xbf16, #tpu.memory_space<vmem>>, %arg7: memref<128x128xf32, #tpu.memory_space<vmem>>) attributes {dimension_semantics = [#tpu.dimension_semantics<parallel>], iteration_bounds = array<i64: 1>, scalar_prefetch = 0 : i64, scratch_operands = 0 : i64, tpu.core_type = #tpu.core_type<tc>, window_params = [{transform_indices = @transform_0, window_bounds = array<i64: 128, 32>}, {transform_indices = @transform_1, window_bounds = array<i64: 128, 128>}, {pipeline_mode = #tpu.pipeline_mode<synchronous>, transform_indices = @transform_2, window_bounds = array<i64: 128, 128>}, {pipeline_mode = #tpu.pipeline_mode<synchronous>, transform_indices = @transform_3, window_bounds = array<i64: 128, 128>}, {transform_indices = @transform_4, window_bounds = array<i64: 128, 128>}, {transform_indices = @transform_5, window_bounds = array<i64: 128, 128>}, {transform_indices = @transform_6, window_bounds = array<i64: 128, 128>}]} {
    %c0 = arith.constant 0 : index
    %c0_0 = arith.constant 0 : index
    %0 = vector.load %arg2[%c0, %c0_0] : memref<128x128xbf16, #tpu.memory_space<vmem>>, vector<128x128xbf16>
    %c0_1 = arith.constant 0 : index
    %c0_2 = arith.constant 0 : index
    %1 = vector.load %arg4[%c0_1, %c0_2] : memref<128x128xbf16, #tpu.memory_space<vmem>>, vector<128x128xbf16>
    %cst = arith.constant dense<0.000000e+00> : vector<128x128xf32>
    %2 = tpu.matmul %0, %1, %cst {dimension_numbers = #tpu.dot_dimension_numbers<[1], [0], [0], [1], [0, 0, 1, 1], [], []>} : vector<128x128xbf16>, vector<128x128xbf16>, vector<128x128xf32> -> vector<128x128xf32>
    %c0_3 = arith.constant 0 : index
    %c0_4 = arith.constant 0 : index
    %3 = vector.load %arg5[%c0_3, %c0_4] : memref<128x128xf32, #tpu.memory_space<vmem>>, vector<128x128xf32>
    tpu.vector_store %arg5[%c0_3, %c0_4], %2 {strides = array<i32>} : memref<128x128xf32, #tpu.memory_space<vmem>>, vector<128x128xf32>,
    %cst_5 = arith.constant 0.000000e+00 : f32
    %4 = vector.broadcast %cst_5 : f32 to vector<128x128xf32>
    %5 = arith.maximumf %2, %4 : vector<128x128xf32>
    %6 = arith.truncf %5 : vector<128x128xf32> to vector<128x128xbf16>
    %c0_6 = arith.constant 0 : index
    %c0_7 = arith.constant 0 : index
    %7 = vector.load %arg6[%c0_6, %c0_7] : memref<128x128xbf16, #tpu.memory_space<vmem>>, vector<128x128xbf16>
    tpu.vector_store %arg6[%c0_6, %c0_7], %6 {strides = array<i32>} : memref<128x128xbf16, #tpu.memory_space<vmem>>, vector<128x128xbf16>,
    %c0_8 = arith.constant 0 : index
    %c0_9 = arith.constant 0 : index
    %8 = vector.load %arg1[%c0_8, %c0_9] : memref<128x32xi32, #tpu.memory_space<vmem>>, vector<128x32xi32>
    %9 = tpu.iota {dimensions = array<i32: 1>} : vector<128x128xi32>
    %cst_10 = arith.constant 0.000000e+00 : f32
    %10 = vector.broadcast %cst_10 : f32 to vector<128x128xf32>
    %11 = vector.extract_strided_slice %8 {offsets = [0, 0], sizes = [128, 1], strides = [1, 1]} : vector<128x32xi32> to vector<128x1xi32>
    %c0_i32 = arith.constant 0 : i32
    %12 = vector.broadcast %c0_i32 : i32 to vector<128x1xi32>
    %13 = arith.subi %11, %12 : vector<128x1xi32>
    %14 = vector.broadcast %13 : vector<128x1xi32> to vector<128x128xi32>
    %15 = arith.cmpi eq, %14, %9 : vector<128x128xi32>
    %16 = arith.extui %15 : vector<128x128xi1> to vector<128x128xi32>
    %17 = arith.sitofp %16 : vector<128x128xi32> to vector<128x128xf32>
    %18 = arith.addf %10, %17 : vector<128x128xf32>
    %19 = vector.extract_strided_slice %8 {offsets = [0, 1], sizes = [128, 1], strides = [1, 1]} : vector<128x32xi32> to vector<128x1xi32>
    %c0_i32_11 = arith.constant 0 : i32
    %20 = vector.broadcast %c0_i32_11 : i32 to vector<128x1xi32>
    %21 = arith.subi %19, %20 : vector<128x1xi32>
    %22 = vector.broadcast %21 : vector<128x1xi32> to vector<128x128xi32>
    %23 = arith.cmpi eq, %22, %9 : vector<128x128xi32>
    %24 = arith.extui %23 : vector<128x128xi1> to vector<128x128xi32>
    %25 = arith.sitofp %24 : vector<128x128xi32> to vector<128x128xf32>
    %26 = arith.addf %18, %25 : vector<128x128xf32>
    %27 = vector.extract_strided_slice %8 {offsets = [0, 2], sizes = [128, 1], strides = [1, 1]} : vector<128x32xi32> to vector<128x1xi32>
    %c0_i32_12 = arith.constant 0 : i32
    %28 = vector.broadcast %c0_i32_12 : i32 to vector<128x1xi32>
    %29 = arith.subi %27, %28 : vector<128x1xi32>
    %30 = vector.broadcast %29 : vector<128x1xi32> to vector<128x128xi32>
    %31 = arith.cmpi eq, %30, %9 : vector<128x128xi32>
    %32 = arith.extui %31 : vector<128x128xi1> to vector<128x128xi32>
    %33 = arith.sitofp %32 : vector<128x128xi32> to vector<128x128xf32>
    %34 = arith.addf %26, %33 : vector<128x128xf32>
    %35 = vector.extract_strided_slice %8 {offsets = [0, 3], sizes = [128, 1], strides = [1, 1]} : vector<128x32xi32> to vector<128x1xi32>
    %c0_i32_13 = arith.constant 0 : i32
    %36 = vector.broadcast %c0_i32_13 : i32 to vector<128x1xi32>
    %37 = arith.subi %35, %36 : vector<128x1xi32>
    %38 = vector.broadcast %37 : vector<128x1xi32> to vector<128x128xi32>
    %39 = arith.cmpi eq, %38, %9 : vector<128x128xi32>
    %40 = arith.extui %39 : vector<128x128xi1> to vector<128x128xi32>
    %41 = arith.sitofp %40 : vector<128x128xi32> to vector<128x128xf32>
    %42 = arith.addf %34, %41 : vector<128x128xf32>
    %43 = vector.extract_strided_slice %8 {offsets = [0, 4], sizes = [128, 1], strides = [1, 1]} : vector<128x32xi32> to vector<128x1xi32>
    %c0_i32_14 = arith.constant 0 : i32
    %44 = vector.broadcast %c0_i32_14 : i32 to vector<128x1xi32>
    %45 = arith.subi %43, %44 : vector<128x1xi32>
    %46 = vector.broadcast %45 : vector<128x1xi32> to vector<128x128xi32>
    %47 = arith.cmpi eq, %46, %9 : vector<128x128xi32>
    %48 = arith.extui %47 : vector<128x128xi1> to vector<128x128xi32>
    %49 = arith.sitofp %48 : vector<128x128xi32> to vector<128x128xf32>
    %50 = arith.addf %42, %49 : vector<128x128xf32>
    %51 = vector.extract_strided_slice %8 {offsets = [0, 5], sizes = [128, 1], strides = [1, 1]} : vector<128x32xi32> to vector<128x1xi32>
    %c0_i32_15 = arith.constant 0 : i32
    %52 = vector.broadcast %c0_i32_15 : i32 to vector<128x1xi32>
    %53 = arith.subi %51, %52 : vector<128x1xi32>
    %54 = vector.broadcast %53 : vector<128x1xi32> to vector<128x128xi32>
    %55 = arith.cmpi eq, %54, %9 : vector<128x128xi32>
    %56 = arith.extui %55 : vector<128x128xi1> to vector<128x128xi32>
    %57 = arith.sitofp %56 : vector<128x128xi32> to vector<128x128xf32>
    %58 = arith.addf %50, %57 : vector<128x128xf32>
    %59 = vector.extract_strided_slice %8 {offsets = [0, 6], sizes = [128, 1], strides = [1, 1]} : vector<128x32xi32> to vector<128x1xi32>
    %c0_i32_16 = arith.constant 0 : i32
    %60 = vector.broadcast %c0_i32_16 : i32 to vector<128x1xi32>
    %61 = arith.subi %59, %60 : vector<128x1xi32>
    %62 = vector.broadcast %61 : vector<128x1xi32> to vector<128x128xi32>
    %63 = arith.cmpi eq, %62, %9 : vector<128x128xi32>
    %64 = arith.extui %63 : vector<128x128xi1> to vector<128x128xi32>
    %65 = arith.sitofp %64 : vector<128x128xi32> to vector<128x128xf32>
    %66 = arith.addf %58, %65 : vector<128x128xf32>
    %67 = vector.extract_strided_slice %8 {offsets = [0, 7], sizes = [128, 1], strides = [1, 1]} : vector<128x32xi32> to vector<128x1xi32>
    %c0_i32_17 = arith.constant 0 : i32
    %68 = vector.broadcast %c0_i32_17 : i32 to vector<128x1xi32>
    %69 = arith.subi %67, %68 : vector<128x1xi32>
    %70 = vector.broadcast %69 : vector<128x1xi32> to vector<128x128xi32>
    %71 = arith.cmpi eq, %70, %9 : vector<128x128xi32>
    %72 = arith.extui %71 : vector<128x128xi1> to vector<128x128xi32>
    %73 = arith.sitofp %72 : vector<128x128xi32> to vector<128x128xf32>
    %74 = arith.addf %66, %73 : vector<128x128xf32>
    %75 = vector.extract_strided_slice %8 {offsets = [0, 8], sizes = [128, 1], strides = [1, 1]} : vector<128x32xi32> to vector<128x1xi32>
    %c0_i32_18 = arith.constant 0 : i32
    %76 = vector.broadcast %c0_i32_18 : i32 to vector<128x1xi32>
    %77 = arith.subi %75, %76 : vector<128x1xi32>
    %78 = vector.broadcast %77 : vector<128x1xi32> to vector<128x128xi32>
    %79 = arith.cmpi eq, %78, %9 : vector<128x128xi32>
    %80 = arith.extui %79 : vector<128x128xi1> to vector<128x128xi32>
    %81 = arith.sitofp %80 : vector<128x128xi32> to vector<128x128xf32>
    %82 = arith.addf %74, %81 : vector<128x128xf32>
    %83 = vector.extract_strided_slice %8 {offsets = [0, 9], sizes = [128, 1], strides = [1, 1]} : vector<128x32xi32> to vector<128x1xi32>
    %c0_i32_19 = arith.constant 0 : i32
    %84 = vector.broadcast %c0_i32_19 : i32 to vector<128x1xi32>
    %85 = arith.subi %83, %84 : vector<128x1xi32>
    %86 = vector.broadcast %85 : vector<128x1xi32> to vector<128x128xi32>
    %87 = arith.cmpi eq, %86, %9 : vector<128x128xi32>
    %88 = arith.extui %87 : vector<128x128xi1> to vector<128x128xi32>
    %89 = arith.sitofp %88 : vector<128x128xi32> to vector<128x128xf32>
    %90 = arith.addf %82, %89 : vector<128x128xf32>
    %91 = vector.extract_strided_slice %8 {offsets = [0, 10], sizes = [128, 1], strides = [1, 1]} : vector<128x32xi32> to vector<128x1xi32>
    %c0_i32_20 = arith.constant 0 : i32
    %92 = vector.broadcast %c0_i32_20 : i32 to vector<128x1xi32>
    %93 = arith.subi %91, %92 : vector<128x1xi32>
    %94 = vector.broadcast %93 : vector<128x1xi32> to vector<128x128xi32>
    %95 = arith.cmpi eq, %94, %9 : vector<128x128xi32>
    %96 = arith.extui %95 : vector<128x128xi1> to vector<128x128xi32>
    %97 = arith.sitofp %96 : vector<128x128xi32> to vector<128x128xf32>
    %98 = arith.addf %90, %97 : vector<128x128xf32>
    %99 = vector.extract_strided_slice %8 {offsets = [0, 11], sizes = [128, 1], strides = [1, 1]} : vector<128x32xi32> to vector<128x1xi32>
    %c0_i32_21 = arith.constant 0 : i32
    %100 = vector.broadcast %c0_i32_21 : i32 to vector<128x1xi32>
    %101 = arith.subi %99, %100 : vector<128x1xi32>
    %102 = vector.broadcast %101 : vector<128x1xi32> to vector<128x128xi32>
    %103 = arith.cmpi eq, %102, %9 : vector<128x128xi32>
    %104 = arith.extui %103 : vector<128x128xi1> to vector<128x128xi32>
    %105 = arith.sitofp %104 : vector<128x128xi32> to vector<128x128xf32>
    %106 = arith.addf %98, %105 : vector<128x128xf32>
    %107 = vector.extract_strided_slice %8 {offsets = [0, 12], sizes = [128, 1], strides = [1, 1]} : vector<128x32xi32> to vector<128x1xi32>
    %c0_i32_22 = arith.constant 0 : i32
    %108 = vector.broadcast %c0_i32_22 : i32 to vector<128x1xi32>
    %109 = arith.subi %107, %108 : vector<128x1xi32>
    %110 = vector.broadcast %109 : vector<128x1xi32> to vector<128x128xi32>
    %111 = arith.cmpi eq, %110, %9 : vector<128x128xi32>
    %112 = arith.extui %111 : vector<128x128xi1> to vector<128x128xi32>
    %113 = arith.sitofp %112 : vector<128x128xi32> to vector<128x128xf32>
    %114 = arith.addf %106, %113 : vector<128x128xf32>
    %115 = vector.extract_strided_slice %8 {offsets = [0, 13], sizes = [128, 1], strides = [1, 1]} : vector<128x32xi32> to vector<128x1xi32>
    %c0_i32_23 = arith.constant 0 : i32
    %116 = vector.broadcast %c0_i32_23 : i32 to vector<128x1xi32>
    %117 = arith.subi %115, %116 : vector<128x1xi32>
    %118 = vector.broadcast %117 : vector<128x1xi32> to vector<128x128xi32>
    %119 = arith.cmpi eq, %118, %9 : vector<128x128xi32>
    %120 = arith.extui %119 : vector<128x128xi1> to vector<128x128xi32>
    %121 = arith.sitofp %120 : vector<128x128xi32> to vector<128x128xf32>
    %122 = arith.addf %114, %121 : vector<128x128xf32>
    %123 = vector.extract_strided_slice %8 {offsets = [0, 14], sizes = [128, 1], strides = [1, 1]} : vector<128x32xi32> to vector<128x1xi32>
    %c0_i32_24 = arith.constant 0 : i32
    %124 = vector.broadcast %c0_i32_24 : i32 to vector<128x1xi32>
    %125 = arith.subi %123, %124 : vector<128x1xi32>
    %126 = vector.broadcast %125 : vector<128x1xi32> to vector<128x128xi32>
    %127 = arith.cmpi eq, %126, %9 : vector<128x128xi32>
    %128 = arith.extui %127 : vector<128x128xi1> to vector<128x128xi32>
    %129 = arith.sitofp %128 : vector<128x128xi32> to vector<128x128xf32>
    %130 = arith.addf %122, %129 : vector<128x128xf32>
    %131 = vector.extract_strided_slice %8 {offsets = [0, 15], sizes = [128, 1], strides = [1, 1]} : vector<128x32xi32> to vector<128x1xi32>
    %c0_i32_25 = arith.constant 0 : i32
    %132 = vector.broadcast %c0_i32_25 : i32 to vector<128x1xi32>
    %133 = arith.subi %131, %132 : vector<128x1xi32>
    %134 = vector.broadcast %133 : vector<128x1xi32> to vector<128x128xi32>
    %135 = arith.cmpi eq, %134, %9 : vector<128x128xi32>
    %136 = arith.extui %135 : vector<128x128xi1> to vector<128x128xi32>
    %137 = arith.sitofp %136 : vector<128x128xi32> to vector<128x128xf32>
    %138 = arith.addf %130, %137 : vector<128x128xf32>
    %139 = vector.extract_strided_slice %8 {offsets = [0, 16], sizes = [128, 1], strides = [1, 1]} : vector<128x32xi32> to vector<128x1xi32>
    %c0_i32_26 = arith.constant 0 : i32
    %140 = vector.broadcast %c0_i32_26 : i32 to vector<128x1xi32>
    %141 = arith.subi %139, %140 : vector<128x1xi32>
    %142 = vector.broadcast %141 : vector<128x1xi32> to vector<128x128xi32>
    %143 = arith.cmpi eq, %142, %9 : vector<128x128xi32>
    %144 = arith.extui %143 : vector<128x128xi1> to vector<128x128xi32>
    %145 = arith.sitofp %144 : vector<128x128xi32> to vector<128x128xf32>
    %146 = arith.addf %138, %145 : vector<128x128xf32>
    %147 = vector.extract_strided_slice %8 {offsets = [0, 17], sizes = [128, 1], strides = [1, 1]} : vector<128x32xi32> to vector<128x1xi32>
    %c0_i32_27 = arith.constant 0 : i32
    %148 = vector.broadcast %c0_i32_27 : i32 to vector<128x1xi32>
    %149 = arith.subi %147, %148 : vector<128x1xi32>
    %150 = vector.broadcast %149 : vector<128x1xi32> to vector<128x128xi32>
    %151 = arith.cmpi eq, %150, %9 : vector<128x128xi32>
    %152 = arith.extui %151 : vector<128x128xi1> to vector<128x128xi32>
    %153 = arith.sitofp %152 : vector<128x128xi32> to vector<128x128xf32>
    %154 = arith.addf %146, %153 : vector<128x128xf32>
    %155 = vector.extract_strided_slice %8 {offsets = [0, 18], sizes = [128, 1], strides = [1, 1]} : vector<128x32xi32> to vector<128x1xi32>
    %c0_i32_28 = arith.constant 0 : i32
    %156 = vector.broadcast %c0_i32_28 : i32 to vector<128x1xi32>
    %157 = arith.subi %155, %156 : vector<128x1xi32>
    %158 = vector.broadcast %157 : vector<128x1xi32> to vector<128x128xi32>
    %159 = arith.cmpi eq, %158, %9 : vector<128x128xi32>
    %160 = arith.extui %159 : vector<128x128xi1> to vector<128x128xi32>
    %161 = arith.sitofp %160 : vector<128x128xi32> to vector<128x128xf32>
    %162 = arith.addf %154, %161 : vector<128x128xf32>
    %163 = vector.extract_strided_slice %8 {offsets = [0, 19], sizes = [128, 1], strides = [1, 1]} : vector<128x32xi32> to vector<128x1xi32>
    %c0_i32_29 = arith.constant 0 : i32
    %164 = vector.broadcast %c0_i32_29 : i32 to vector<128x1xi32>
    %165 = arith.subi %163, %164 : vector<128x1xi32>
    %166 = vector.broadcast %165 : vector<128x1xi32> to vector<128x128xi32>
    %167 = arith.cmpi eq, %166, %9 : vector<128x128xi32>
    %168 = arith.extui %167 : vector<128x128xi1> to vector<128x128xi32>
    %169 = arith.sitofp %168 : vector<128x128xi32> to vector<128x128xf32>
    %170 = arith.addf %162, %169 : vector<128x128xf32>
    %171 = vector.extract_strided_slice %8 {offsets = [0, 20], sizes = [128, 1], strides = [1, 1]} : vector<128x32xi32> to vector<128x1xi32>
    %c0_i32_30 = arith.constant 0 : i32
    %172 = vector.broadcast %c0_i32_30 : i32 to vector<128x1xi32>
    %173 = arith.subi %171, %172 : vector<128x1xi32>
    %174 = vector.broadcast %173 : vector<128x1xi32> to vector<128x128xi32>
    %175 = arith.cmpi eq, %174, %9 : vector<128x128xi32>
    %176 = arith.extui %175 : vector<128x128xi1> to vector<128x128xi32>
    %177 = arith.sitofp %176 : vector<128x128xi32> to vector<128x128xf32>
    %178 = arith.addf %170, %177 : vector<128x128xf32>
    %179 = vector.extract_strided_slice %8 {offsets = [0, 21], sizes = [128, 1], strides = [1, 1]} : vector<128x32xi32> to vector<128x1xi32>
    %c0_i32_31 = arith.constant 0 : i32
    %180 = vector.broadcast %c0_i32_31 : i32 to vector<128x1xi32>
    %181 = arith.subi %179, %180 : vector<128x1xi32>
    %182 = vector.broadcast %181 : vector<128x1xi32> to vector<128x128xi32>
    %183 = arith.cmpi eq, %182, %9 : vector<128x128xi32>
    %184 = arith.extui %183 : vector<128x128xi1> to vector<128x128xi32>
    %185 = arith.sitofp %184 : vector<128x128xi32> to vector<128x128xf32>
    %186 = arith.addf %178, %185 : vector<128x128xf32>
    %187 = vector.extract_strided_slice %8 {offsets = [0, 22], sizes = [128, 1], strides = [1, 1]} : vector<128x32xi32> to vector<128x1xi32>
    %c0_i32_32 = arith.constant 0 : i32
    %188 = vector.broadcast %c0_i32_32 : i32 to vector<128x1xi32>
    %189 = arith.subi %187, %188 : vector<128x1xi32>
    %190 = vector.broadcast %189 : vector<128x1xi32> to vector<128x128xi32>
    %191 = arith.cmpi eq, %190, %9 : vector<128x128xi32>
    %192 = arith.extui %191 : vector<128x128xi1> to vector<128x128xi32>
    %193 = arith.sitofp %192 : vector<128x128xi32> to vector<128x128xf32>
    %194 = arith.addf %186, %193 : vector<128x128xf32>
    %195 = vector.extract_strided_slice %8 {offsets = [0, 23], sizes = [128, 1], strides = [1, 1]} : vector<128x32xi32> to vector<128x1xi32>
    %c0_i32_33 = arith.constant 0 : i32
    %196 = vector.broadcast %c0_i32_33 : i32 to vector<128x1xi32>
    %197 = arith.subi %195, %196 : vector<128x1xi32>
    %198 = vector.broadcast %197 : vector<128x1xi32> to vector<128x128xi32>
    %199 = arith.cmpi eq, %198, %9 : vector<128x128xi32>
    %200 = arith.extui %199 : vector<128x128xi1> to vector<128x128xi32>
    %201 = arith.sitofp %200 : vector<128x128xi32> to vector<128x128xf32>
    %202 = arith.addf %194, %201 : vector<128x128xf32>
    %203 = vector.extract_strided_slice %8 {offsets = [0, 24], sizes = [128, 1], strides = [1, 1]} : vector<128x32xi32> to vector<128x1xi32>
    %c0_i32_34 = arith.constant 0 : i32
    %204 = vector.broadcast %c0_i32_34 : i32 to vector<128x1xi32>
    %205 = arith.subi %203, %204 : vector<128x1xi32>
    %206 = vector.broadcast %205 : vector<128x1xi32> to vector<128x128xi32>
    %207 = arith.cmpi eq, %206, %9 : vector<128x128xi32>
    %208 = arith.extui %207 : vector<128x128xi1> to vector<128x128xi32>
    %209 = arith.sitofp %208 : vector<128x128xi32> to vector<128x128xf32>
    %210 = arith.addf %202, %209 : vector<128x128xf32>
    %211 = vector.extract_strided_slice %8 {offsets = [0, 25], sizes = [128, 1], strides = [1, 1]} : vector<128x32xi32> to vector<128x1xi32>
    %c0_i32_35 = arith.constant 0 : i32
    %212 = vector.broadcast %c0_i32_35 : i32 to vector<128x1xi32>
    %213 = arith.subi %211, %212 : vector<128x1xi32>
    %214 = vector.broadcast %213 : vector<128x1xi32> to vector<128x128xi32>
    %215 = arith.cmpi eq, %214, %9 : vector<128x128xi32>
    %216 = arith.extui %215 : vector<128x128xi1> to vector<128x128xi32>
    %217 = arith.sitofp %216 : vector<128x128xi32> to vector<128x128xf32>
    %218 = arith.addf %210, %217 : vector<128x128xf32>
    %219 = vector.extract_strided_slice %8 {offsets = [0, 26], sizes = [128, 1], strides = [1, 1]} : vector<128x32xi32> to vector<128x1xi32>
    %c0_i32_36 = arith.constant 0 : i32
    %220 = vector.broadcast %c0_i32_36 : i32 to vector<128x1xi32>
    %221 = arith.subi %219, %220 : vector<128x1xi32>
    %222 = vector.broadcast %221 : vector<128x1xi32> to vector<128x128xi32>
    %223 = arith.cmpi eq, %222, %9 : vector<128x128xi32>
    %224 = arith.extui %223 : vector<128x128xi1> to vector<128x128xi32>
    %225 = arith.sitofp %224 : vector<128x128xi32> to vector<128x128xf32>
    %226 = arith.addf %218, %225 : vector<128x128xf32>
    %227 = vector.extract_strided_slice %8 {offsets = [0, 27], sizes = [128, 1], strides = [1, 1]} : vector<128x32xi32> to vector<128x1xi32>
    %c0_i32_37 = arith.constant 0 : i32
    %228 = vector.broadcast %c0_i32_37 : i32 to vector<128x1xi32>
    %229 = arith.subi %227, %228 : vector<128x1xi32>
    %230 = vector.broadcast %229 : vector<128x1xi32> to vector<128x128xi32>
    %231 = arith.cmpi eq, %230, %9 : vector<128x128xi32>
    %232 = arith.extui %231 : vector<128x128xi1> to vector<128x128xi32>
    %233 = arith.sitofp %232 : vector<128x128xi32> to vector<128x128xf32>
    %234 = arith.addf %226, %233 : vector<128x128xf32>
    %235 = vector.extract_strided_slice %8 {offsets = [0, 28], sizes = [128, 1], strides = [1, 1]} : vector<128x32xi32> to vector<128x1xi32>
    %c0_i32_38 = arith.constant 0 : i32
    %236 = vector.broadcast %c0_i32_38 : i32 to vector<128x1xi32>
    %237 = arith.subi %235, %236 : vector<128x1xi32>
    %238 = vector.broadcast %237 : vector<128x1xi32> to vector<128x128xi32>
    %239 = arith.cmpi eq, %238, %9 : vector<128x128xi32>
    %240 = arith.extui %239 : vector<128x128xi1> to vector<128x128xi32>
    %241 = arith.sitofp %240 : vector<128x128xi32> to vector<128x128xf32>
    %242 = arith.addf %234, %241 : vector<128x128xf32>
    %243 = vector.extract_strided_slice %8 {offsets = [0, 29], sizes = [128, 1], strides = [1, 1]} : vector<128x32xi32> to vector<128x1xi32>
    %c0_i32_39 = arith.constant 0 : i32
    %244 = vector.broadcast %c0_i32_39 : i32 to vector<128x1xi32>
    %245 = arith.subi %243, %244 : vector<128x1xi32>
    %246 = vector.broadcast %245 : vector<128x1xi32> to vector<128x128xi32>
    %247 = arith.cmpi eq, %246, %9 : vector<128x128xi32>
    %248 = arith.extui %247 : vector<128x128xi1> to vector<128x128xi32>
    %249 = arith.sitofp %248 : vector<128x128xi32> to vector<128x128xf32>
    %250 = arith.addf %242, %249 : vector<128x128xf32>
    %251 = arith.truncf %250 : vector<128x128xf32> to vector<128x128xbf16>
    %c0_40 = arith.constant 0 : index
    %c0_41 = arith.constant 0 : index
    %252 = vector.load %arg3[%c0_40, %c0_41] : memref<128x128xbf16, #tpu.memory_space<vmem>>, vector<128x128xbf16>
    %cst_42 = arith.constant dense<0.000000e+00> : vector<128x128xf32>
    %253 = tpu.matmul %251, %252, %cst_42 {dimension_numbers = #tpu.dot_dimension_numbers<[1], [0], [0], [1], [0, 0, 1, 1], [], []>} : vector<128x128xbf16>, vector<128x128xbf16>, vector<128x128xf32> -> vector<128x128xf32>
    %c0_43 = arith.constant 0 : index
    %c0_44 = arith.constant 0 : index
    %254 = vector.load %arg7[%c0_43, %c0_44] : memref<128x128xf32, #tpu.memory_space<vmem>>, vector<128x128xf32>
    tpu.vector_store %arg7[%c0_43, %c0_44], %253 {strides = array<i32>} : memref<128x128xf32, #tpu.memory_space<vmem>>, vector<128x128xf32>,
    return
  }
  func.func @transform_0(%arg0: i32) -> (i32, i32) {
    %c0_i32 = arith.constant 0 : i32
    %c0_i32_0 = arith.constant 0 : i32
    return %arg0, %c0_i32 : i32, i32
  }
  func.func @transform_1(%arg0: i32) -> (i32, i32) {
    %c0_i32 = arith.constant 0 : i32
    %c0_i32_0 = arith.constant 0 : i32
    return %arg0, %c0_i32 : i32, i32
  }
  func.func @transform_2(%arg0: i32) -> (i32, i32) {
    %c0_i32 = arith.constant 0 : i32
    %c0_i32_0 = arith.constant 0 : i32
    %c0_i32_1 = arith.constant 0 : i32
    return %c0_i32, %c0_i32_0 : i32, i32
  }
  func.func @transform_3(%arg0: i32) -> (i32, i32) {
    %c0_i32 = arith.constant 0 : i32
    %c0_i32_0 = arith.constant 0 : i32
    %c0_i32_1 = arith.constant 0 : i32
    return %c0_i32, %c0_i32_0 : i32, i32
  }
  func.func @transform_4(%arg0: i32) -> (i32, i32) {
    %c0_i32 = arith.constant 0 : i32
    %c0_i32_0 = arith.constant 0 : i32
    return %arg0, %c0_i32 : i32, i32
  }
  func.func @transform_5(%arg0: i32) -> (i32, i32) {
    %c0_i32 = arith.constant 0 : i32
    %c0_i32_0 = arith.constant 0 : i32
    return %arg0, %c0_i32 : i32, i32
  }
  func.func @transform_6(%arg0: i32) -> (i32, i32) {
    %c0_i32 = arith.constant 0 : i32
    %c0_i32_0 = arith.constant 0 : i32
    return %arg0, %c0_i32 : i32, i32
  }
}

</mosaic_0001>

<llo_original>
// kernel: tpu_custom_call.1
$region0: #{tpu_custom_call.1}
  #allocation0 [shape = 'u32[]', space=smem, size = 0x4, offset = 0x4, fixed_abs, tag = 'smem constant byte address 0x4 - core index']
  #allocation1 [shape = 'u32[144,128]{1,0:T(1,128)}', space=vmem, size = 0x12000, scoped, tag = 'internal scratch']
  %s0 = inlined_call_operand.vmem [shape: s32[128,32], index: 0, kind: input, shape index: {}]
  %s1 = inlined_call_operand.vmem [shape: bf16[128,128], index: 1, kind: input, shape index: {}]
  %s2 = inlined_call_operand.vmem [shape: bf16[128,128], index: 2, kind: input, shape index: {}]
  %s3 = inlined_call_operand.hbm [shape: bf16[128,128], index: 3, kind: input, shape index: {}]
  %s4 = inlined_call_operand.hbm [shape: f32[128,128], index: 4, kind: output, shape index: {0}]
  %s5 = inlined_call_operand.hbm [shape: bf16[128,128], index: 5, kind: output, shape index: {1}]
  %s6 = inlined_call_operand.hbm [shape: f32[128,128], index: 6, kind: output, shape index: {2}]
  %7 = xla_tuple %s4, %s5, %s6
  %s8 = sld [smem:[#allocation0]]
  $region46: #{tpu_custom_call.1} parent=0
    _
  %s10 = ssub.s32 1, %s8
  %s11 = scalar_select 0, %s10, %s8
  $region1: #{tpu_custom_call.1} parent=0
    #allocation2 [shape = 'u8[32768]{0}', space=vmem, size = 0x8000, scoped, tag = 'input window, operand 3, single buffered']
    #allocation3 [shape = 's32[1]{0}', space=sflag, size = 0x4, scoped, tag = 'scoped memory for tpu_custom_call.1']
    #allocation4 [shape = 's32[1]{0}', space=sflag, size = 0x4, scoped, tag = 'scoped memory for tpu_custom_call.1']
    #allocation5 [shape = 'u8[65536]{0}', space=vmem, size = 0x10000, scoped, tag = 'output window, operand 0, single buffered']
    #allocation6 [shape = 'u8[32768]{0}', space=vmem, size = 0x8000, scoped, tag = 'output window, operand 1, single buffered']
    #allocation7 [shape = 's32[1]{0}', space=sflag, size = 0x4, scoped, tag = 'scoped memory for tpu_custom_call.1']
    #allocation8 [shape = 'u8[65536]{0}', space=vmem, size = 0x10000, scoped, tag = 'output window, operand 2, single buffered']
    %12 = vsyncpa [#allocation3], 0
    %13 = vsyncpa [#allocation4], 0
    %14 = vsyncpa [#allocation7], 0
    // Predicated region
    $region2: #{tpu_custom_call.1} parent=1 // pred_check
      _
    $region3: #{tpu_custom_call.1} parent=1 // pred_check_branch
      %16 = sbr.rel (0) target = $region5
    $region4: #{tpu_custom_call.1} parent=1 // pred_region
      _
    $region5: #{tpu_custom_call.1} parent=1 // pred_fallthru
      _
    // Predicated region
    $region6: #{tpu_custom_call.1} parent=1 // pred_check
      _
    $region7: #{tpu_custom_call.1} parent=1 // pred_check_branch
      %18 = sbr.rel (0) target = $region9
    $region8: #{tpu_custom_call.1} parent=1 // pred_region
      _
    $region9: #{tpu_custom_call.1} parent=1 // pred_fallthru
      _
    // Predicated region
    $region10: #{tpu_custom_call.1} parent=1 // pred_check
      _
    $region11: #{tpu_custom_call.1} parent=1 // pred_check_branch
      %20 = sbr.rel (0) target = $region13
    $region12: #{tpu_custom_call.1} parent=1 // pred_region
      _
    $region13: #{tpu_custom_call.1} parent=1 // pred_fallthru
      _
    // Predicated region
    $region14: #{tpu_custom_call.1} parent=1 // pred_check
      _
    $region15: #{tpu_custom_call.1} parent=1 // pred_check_branch
      %22 = sbr.rel (0) target = $region17
    $region16: #{tpu_custom_call.1} parent=1 // pred_region
      %s24 = ssub.s32 1024, 1024
      %25 = vsyncadd [#allocation3], %s24
      %s26 = sshll.u32 [#allocation2], 4
      %s27 = int_to_ptr.vmem [resolvable:$true] %s26
      %32 = dma.hbm_to_vmem [thread:$0]  %s3, 1024, %s27, [#allocation3], 64, 64, 4
    $region17: #{tpu_custom_call.1} parent=1 // pred_fallthru
      _
    // Predicated region
    $region18: #{tpu_custom_call.1} parent=1 // pred_check
      _
    $region19: #{tpu_custom_call.1} parent=1 // pred_check_branch
      %34 = sbr.rel (0) target = $region21
    $region20: #{tpu_custom_call.1} parent=1 // pred_region
      %35 = dma.done [#allocation3], 1024
    $region21: #{tpu_custom_call.1} parent=1 // pred_fallthru
      _
    %v37 = vld [vmem:[%s1] sm:$0xf]
    %v38 = vld [vmem:[%s1 + $0x4] sm:$0xf]
    %v39 = vld [vmem:[%s1 + $0x8] sm:$0xf]
    %v40 = vld [vmem:[%s1 + $0xc] sm:$0xf]
    %v41 = vld [vmem:[%s1 + $0x10] sm:$0xf]
    %v42 = vld [vmem:[%s1 + $0x14] sm:$0xf]
    %v43 = vld [vmem:[%s1 + $0x18] sm:$0xf]
    %v44 = vld [vmem:[%s1 + $0x1c] sm:$0xf]
    %v45 = vld [vmem:[%s1 + $0x20] sm:$0xf]
    %v46 = vld [vmem:[%s1 + $0x24] sm:$0xf]
    %v47 = vld [vmem:[%s1 + $0x28] sm:$0xf]
    %v48 = vld [vmem:[%s1 + $0x2c] sm:$0xf]
    %v49 = vld [vmem:[%s1 + $0x30] sm:$0xf]
    %v50 = vld [vmem:[%s1 + $0x34] sm:$0xf]
    %v51 = vld [vmem:[%s1 + $0x38] sm:$0xf]
    %v52 = vld [vmem:[%s1 + $0x3c] sm:$0xf]
    %v53 = vld [vmem:[#allocation2] sm:$0xf]
    %v54 = vld [vmem:[#allocation2 + $0x4] sm:$0xf]
    %v55 = vld [vmem:[#allocation2 + $0x8] sm:$0xf]
    %v56 = vld [vmem:[#allocation2 + $0xc] sm:$0xf]
    %v57 = vld [vmem:[#allocation2 + $0x10] sm:$0xf]
    %v58 = vld [vmem:[#allocation2 + $0x14] sm:$0xf]
    %v59 = vld [vmem:[#allocation2 + $0x18] sm:$0xf]
    %v60 = vld [vmem:[#allocation2 + $0x1c] sm:$0xf]
    %v61 = vld [vmem:[#allocation2 + $0x20] sm:$0xf]
    %v62 = vld [vmem:[#allocation2 + $0x24] sm:$0xf]
    %v63 = vld [vmem:[#allocation2 + $0x28] sm:$0xf]
    %v64 = vld [vmem:[#allocation2 + $0x2c] sm:$0xf]
    %v65 = vld [vmem:[#allocation2 + $0x30] sm:$0xf]
    %v66 = vld [vmem:[#allocation2 + $0x34] sm:$0xf]
    %v67 = vld [vmem:[#allocation2 + $0x38] sm:$0xf]
    %v68 = vld [vmem:[#allocation2 + $0x3c] sm:$0xf]
    %v85 = vunpack.c.l.b16 %v37
    %v86 = vunpack.c.l.b16 %v38
    %v87 = vunpack.c.l.b16 %v39
    %v88 = vunpack.c.l.b16 %v40
    %v89 = vunpack.c.l.b16 %v41
    %v90 = vunpack.c.l.b16 %v42
    %v91 = vunpack.c.l.b16 %v43
    %v92 = vunpack.c.l.b16 %v44
    %v93 = vunpack.c.l.b16 %v45
    %v94 = vunpack.c.l.b16 %v46
    %v95 = vunpack.c.l.b16 %v47
    %v96 = vunpack.c.l.b16 %v48
    %v97 = vunpack.c.l.b16 %v49
    %v98 = vunpack.c.l.b16 %v50
    %v99 = vunpack.c.l.b16 %v51
    %v100 = vunpack.c.l.b16 %v52
    %v101 = vpack.c.b16 %v86, %v85
    %v102 = vpack.c.b16 %v88, %v87
    %v103 = vpack.c.b16 %v90, %v89
    %v104 = vpack.c.b16 %v92, %v91
    %v105 = vpack.c.b16 %v94, %v93
    %v106 = vpack.c.b16 %v96, %v95
    %v107 = vpack.c.b16 %v98, %v97
    %v108 = vpack.c.b16 %v100, %v99
    %v133 = vunpack.c.l.b16 %v53
    %v134 = vunpack.c.l.b16 %v54
    %v135 = vunpack.c.l.b16 %v55
    %v136 = vunpack.c.l.b16 %v56
    %v137 = vunpack.c.l.b16 %v57
    %v138 = vunpack.c.l.b16 %v58
    %v139 = vunpack.c.l.b16 %v59
    %v140 = vunpack.c.l.b16 %v60
    %v141 = vunpack.c.l.b16 %v61
    %v142 = vunpack.c.l.b16 %v62
    %v143 = vunpack.c.l.b16 %v63
    %v144 = vunpack.c.l.b16 %v64
    %v145 = vunpack.c.l.b16 %v65
    %v146 = vunpack.c.l.b16 %v66
    %v147 = vunpack.c.l.b16 %v67
    %v148 = vunpack.c.l.b16 %v68
    %v149 = vpack.c.b16 %v134, %v133
    %v150 = vpack.c.b16 %v136, %v135
    %v151 = vpack.c.b16 %v138, %v137
    %v152 = vpack.c.b16 %v140, %v139
    %v153 = vpack.c.b16 %v142, %v141
    %v154 = vpack.c.b16 %v144, %v143
    %v155 = vpack.c.b16 %v146, %v145
    %v156 = vpack.c.b16 %v148, %v147
    %165 = vmatprep.subr.bf16.mxu0 0
    %166 = vmatpush1.bf16.msra.mxu0 %v156
    %167 = vmatprep.subr.bf16.mxu0 0
    %168 = vmatpush1.bf16.msra.mxu0 %v155
    %169 = vmatprep.subr.bf16.mxu0 0
    %170 = vmatpush1.bf16.msra.mxu0 %v154
    %171 = vmatprep.subr.bf16.mxu0 0
    %172 = vmatpush1.bf16.msra.mxu0 %v153
    %173 = vmatprep.subr.bf16.mxu0 0
    %174 = vmatpush1.bf16.msra.mxu0 %v152
    %175 = vmatprep.subr.bf16.mxu0 0
    %176 = vmatpush1.bf16.msra.mxu0 %v151
    %177 = vmatprep.subr.bf16.mxu0 0
    %178 = vmatpush1.bf16.msra.mxu0 %v150
    %179 = vmatprep.subr.bf16.mxu0 0
    %180 = vmatpush1.bf16.msra.mxu0 %v149
    %181 = vmatprep.subr.bf16.mxu0 0
    %182 = vmatpush2.bf16.msra.mxu0 0
    %183 = vmatprep.subr.bf16.mxu0 0
    %184 = vmatpush2.bf16.msra.mxu0 0
    %185 = vmatprep.subr.bf16.mxu0 0
    %186 = vmatpush2.bf16.msra.mxu0 0
    %187 = vmatprep.subr.bf16.mxu0 0
    %188 = vmatpush2.bf16.msra.mxu0 0
    %189 = vmatprep.subr.bf16.mxu0 0
    %190 = vmatpush2.bf16.msra.mxu0 0
    %191 = vmatprep.subr.bf16.mxu0 0
    %192 = vmatpush2.bf16.msra.mxu0 0
    %193 = vmatprep.subr.bf16.mxu0 0
    %194 = vmatpush2.bf16.msra.mxu0 0
    %195 = vmatprep.subr.bf16.mxu0 0
    %196 = vmatpush2.bf16.msra.mxu0 0
    %197 = vmatprep.mubr.bf16.mxu0 0
    %198 = vmatmul.mubr.bf16.gmra.mxu0 %v101
    %v199 = vpop.f32.mrf.mxu0
    %v200 = vadd.f32 0.0, %v199
    %v201 = vpop.f32.mrf.mxu0
    %v202 = vpop.f32.mrf.mxu0
    %v203 = vadd.f32 0.0, %v202
    %v204 = vpop.f32.mrf.mxu0
    %205 = vmatprep.mubr.bf16.mxu0 0
    %206 = vmatmul.mubr.bf16.gmra.mxu0 %v102
    %v207 = vpop.f32.mrf.mxu0
    %v208 = vadd.f32 0.0, %v207
    %v209 = vpop.f32.mrf.mxu0
    %v210 = vpop.f32.mrf.mxu0
    %v211 = vadd.f32 0.0, %v210
    %v212 = vpop.f32.mrf.mxu0
    %213 = vmatprep.mubr.bf16.mxu0 0
    %214 = vmatmul.mubr.bf16.gmra.mxu0 %v103
    %v215 = vpop.f32.mrf.mxu0
    %v216 = vadd.f32 0.0, %v215
    %v217 = vpop.f32.mrf.mxu0
    %v218 = vpop.f32.mrf.mxu0
    %v219 = vadd.f32 0.0, %v218
    %v220 = vpop.f32.mrf.mxu0
    %221 = vmatprep.mubr.bf16.mxu0 0
    %222 = vmatmul.mubr.bf16.gmra.mxu0 %v104
    %v223 = vpop.f32.mrf.mxu0
    %v224 = vadd.f32 0.0, %v223
    %v225 = vpop.f32.mrf.mxu0
    %v226 = vpop.f32.mrf.mxu0
    %v227 = vadd.f32 0.0, %v226
    %v228 = vpop.f32.mrf.mxu0
    %229 = vmatprep.mubr.bf16.mxu0 0
    %230 = vmatmul.mubr.bf16.gmra.mxu0 %v105
    %v231 = vpop.f32.mrf.mxu0
    %v232 = vadd.f32 0.0, %v231
    %v233 = vpop.f32.mrf.mxu0
    %v234 = vpop.f32.mrf.mxu0
    %v235 = vadd.f32 0.0, %v234
    %v236 = vpop.f32.mrf.mxu0
    %237 = vmatprep.mubr.bf16.mxu0 0
    %238 = vmatmul.mubr.bf16.gmra.mxu0 %v106
    %v239 = vpop.f32.mrf.mxu0
    %v240 = vadd.f32 0.0, %v239
    %v241 = vpop.f32.mrf.mxu0
    %v242 = vpop.f32.mrf.mxu0
    %v243 = vadd.f32 0.0, %v242
    %v244 = vpop.f32.mrf.mxu0
    %245 = vmatprep.mubr.bf16.mxu0 0
    %246 = vmatmul.mubr.bf16.gmra.mxu0 %v107
    %v247 = vpop.f32.mrf.mxu0
    %v248 = vadd.f32 0.0, %v247
    %v249 = vpop.f32.mrf.mxu0
    %v250 = vpop.f32.mrf.mxu0
    %v251 = vadd.f32 0.0, %v250
    %v252 = vpop.f32.mrf.mxu0
    %253 = vmatprep.mubr.bf16.mxu0 0
    %254 = vmatmul.mubr.bf16.gmra.mxu0 %v108
    %v255 = vpop.f32.mrf.mxu0
    %v256 = vadd.f32 0.0, %v255
    %v257 = vpop.f32.mrf.mxu0
    %v258 = vpop.f32.mrf.mxu0
    %v259 = vadd.f32 0.0, %v258
    %v260 = vpop.f32.mrf.mxu0
    %261 = vdwg.mxu0
    %262 = vst [vmem:[#allocation5] sm:$0xff] %v200
    %263 = vst [vmem:[#allocation5 + $0x8] sm:$0xff] %v203
    %264 = vst [vmem:[#allocation5 + $0x10] sm:$0xff] %v208
    %265 = vst [vmem:[#allocation5 + $0x18] sm:$0xff] %v211
    %266 = vst [vmem:[#allocation5 + $0x20] sm:$0xff] %v216
    %267 = vst [vmem:[#allocation5 + $0x28] sm:$0xff] %v219
    %268 = vst [vmem:[#allocation5 + $0x30] sm:$0xff] %v224
    %269 = vst [vmem:[#allocation5 + $0x38] sm:$0xff] %v227
    %270 = vst [vmem:[#allocation5 + $0x40] sm:$0xff] %v232
    %271 = vst [vmem:[#allocation5 + $0x48] sm:$0xff] %v235
    %272 = vst [vmem:[#allocation5 + $0x50] sm:$0xff] %v240
    %273 = vst [vmem:[#allocation5 + $0x58] sm:$0xff] %v243
    %274 = vst [vmem:[#allocation5 + $0x60] sm:$0xff] %v248
    %275 = vst [vmem:[#allocation5 + $0x68] sm:$0xff] %v251
    %276 = vst [vmem:[#allocation5 + $0x70] sm:$0xff] %v256
    %277 = vst [vmem:[#allocation5 + $0x78] sm:$0xff] %v259
    %v278 = vmax.f32 %v200, 0.0
    %v279 = vmax.f32 %v203, 0.0
    %v280 = vmax.f32 %v208, 0.0
    %v281 = vmax.f32 %v211, 0.0
    %v282 = vmax.f32 %v216, 0.0
    %v283 = vmax.f32 %v219, 0.0
    %v284 = vmax.f32 %v224, 0.0
    %v285 = vmax.f32 %v227, 0.0
    %v286 = vmax.f32 %v232, 0.0
    %v287 = vmax.f32 %v235, 0.0
    %v288 = vmax.f32 %v240, 0.0
    %v289 = vmax.f32 %v243, 0.0
    %v290 = vmax.f32 %v248, 0.0
    %v291 = vmax.f32 %v251, 0.0
    %v292 = vmax.f32 %v256, 0.0
    %v293 = vmax.f32 %v259, 0.0
    %v294 = vpack.c.bf16 %v279, %v278
    %v295 = vpack.c.bf16 %v281, %v280
    %v296 = vpack.c.bf16 %v283, %v282
    %v297 = vpack.c.bf16 %v285, %v284
    %v298 = vpack.c.bf16 %v287, %v286
    %v299 = vpack.c.bf16 %v289, %v288
    %v300 = vpack.c.bf16 %v291, %v290
    %v301 = vpack.c.bf16 %v293, %v292
    %v310 = vunpack.c.l.b16 %v294
    %v311 = vunpack.c.h.b16 %v294
    %v312 = vunpack.c.l.b16 %v295
    %v313 = vunpack.c.h.b16 %v295
    %v314 = vunpack.c.l.b16 %v296
    %v315 = vunpack.c.h.b16 %v296
    %v316 = vunpack.c.l.b16 %v297
    %v317 = vunpack.c.h.b16 %v297
    %v318 = vunpack.c.l.b16 %v298
    %v319 = vunpack.c.h.b16 %v298
    %v320 = vunpack.c.l.b16 %v299
    %v321 = vunpack.c.h.b16 %v299
    %v322 = vunpack.c.l.b16 %v300
    %v323 = vunpack.c.h.b16 %v300
    %v324 = vunpack.c.l.b16 %v301
    %v325 = vunpack.c.h.b16 %v301
    %v326 = vpack.c.b16 %v310, %v310
    %v327 = vpack.c.b16 %v311, %v311
    %v328 = vpack.c.b16 %v312, %v312
    %v329 = vpack.c.b16 %v313, %v313
    %v330 = vpack.c.b16 %v314, %v314
    %v331 = vpack.c.b16 %v315, %v315
    %v332 = vpack.c.b16 %v316, %v316
    %v333 = vpack.c.b16 %v317, %v317
    %v334 = vpack.c.b16 %v318, %v318
    %v335 = vpack.c.b16 %v319, %v319
    %v336 = vpack.c.b16 %v320, %v320
    %v337 = vpack.c.b16 %v321, %v321
    %v338 = vpack.c.b16 %v322, %v322
    %v339 = vpack.c.b16 %v323, %v323
    %v340 = vpack.c.b16 %v324, %v324
    %v341 = vpack.c.b16 %v325, %v325
    %358 = vst [vmem:[#allocation6] sm:$0xf] %v326
    %359 = vst [vmem:[#allocation6 + $0x4] sm:$0xf] %v327
    %360 = vst [vmem:[#allocation6 + $0x8] sm:$0xf] %v328
    %361 = vst [vmem:[#allocation6 + $0xc] sm:$0xf] %v329
    %362 = vst [vmem:[#allocation6 + $0x10] sm:$0xf] %v330
    %363 = vst [vmem:[#allocation6 + $0x14] sm:$0xf] %v331
    %364 = vst [vmem:[#allocation6 + $0x18] sm:$0xf] %v332
    %365 = vst [vmem:[#allocation6 + $0x1c] sm:$0xf] %v333
    %366 = vst [vmem:[#allocation6 + $0x20] sm:$0xf] %v334
    %367 = vst [vmem:[#allocation6 + $0x24] sm:$0xf] %v335
    %368 = vst [vmem:[#allocation6 + $0x28] sm:$0xf] %v336
    %369 = vst [vmem:[#allocation6 + $0x2c] sm:$0xf] %v337
    %370 = vst [vmem:[#allocation6 + $0x30] sm:$0xf] %v338
    %371 = vst [vmem:[#allocation6 + $0x34] sm:$0xf] %v339
    %372 = vst [vmem:[#allocation6 + $0x38] sm:$0xf] %v340
    %373 = vst [vmem:[#allocation6 + $0x3c] sm:$0xf] %v341
    %v374 = vld [vmem:[%s0] sm:$0xff]
    %v375 = vld [vmem:[%s0 + $0x8] sm:$0xff]
    %v376 = vld [vmem:[%s0 + $0x10] sm:$0xff]
    %v377 = vld [vmem:[%s0 + $0x18] sm:$0xff]
    %v378 = vld [vmem:[%s0 + $0x20] sm:$0xff]
    %v379 = vld [vmem:[%s0 + $0x28] sm:$0xff]
    %v380 = vld [vmem:[%s0 + $0x30] sm:$0xff]
    %v381 = vld [vmem:[%s0 + $0x38] sm:$0xff]
    %v382 = vld [vmem:[%s0 + $0x40] sm:$0xff]
    %v383 = vld [vmem:[%s0 + $0x48] sm:$0xff]
    %v384 = vld [vmem:[%s0 + $0x50] sm:$0xff]
    %v385 = vld [vmem:[%s0 + $0x58] sm:$0xff]
    %v386 = vld [vmem:[%s0 + $0x60] sm:$0xff]
    %v387 = vld [vmem:[%s0 + $0x68] sm:$0xff]
    %v388 = vld [vmem:[%s0 + $0x70] sm:$0xff]
    %v389 = vld [vmem:[%s0 + $0x78] sm:$0xff]
    %v390 = vlaneseq
    %v391 = vand.u32 %v390, 127
    %392 = vset.pattern.permute.xlu0 0
    %393 = vperm.xlu0 %392, %v374
    %v394 = vpop.permute.xlu0 %393
    %395 = vset.pattern.permute.xlu0 0
    %396 = vperm.xlu0 %395, %v375
    %v397 = vpop.permute.xlu0 %396
    %398 = vset.pattern.permute.xlu0 0
    %399 = vperm.xlu0 %398, %v376
    %v400 = vpop.permute.xlu0 %399
    %401 = vset.pattern.permute.xlu0 0
    %402 = vperm.xlu0 %401, %v377
    %v403 = vpop.permute.xlu0 %402
    %404 = vset.pattern.permute.xlu0 0
    %405 = vperm.xlu0 %404, %v378
    %v406 = vpop.permute.xlu0 %405
    %407 = vset.pattern.permute.xlu0 0
    %408 = vperm.xlu0 %407, %v379
    %v409 = vpop.permute.xlu0 %408
    %410 = vset.pattern.permute.xlu0 0
    %411 = vperm.xlu0 %410, %v380
    %v412 = vpop.permute.xlu0 %411
    %413 = vset.pattern.permute.xlu0 0
    %414 = vperm.xlu0 %413, %v381
    %v415 = vpop.permute.xlu0 %414
    %416 = vset.pattern.permute.xlu0 0
    %417 = vperm.xlu0 %416, %v382
    %v418 = vpop.permute.xlu0 %417
    %419 = vset.pattern.permute.xlu0 0
    %420 = vperm.xlu0 %419, %v383
    %v421 = vpop.permute.xlu0 %420
    %422 = vset.pattern.permute.xlu0 0
    %423 = vperm.xlu0 %422, %v384
    %v424 = vpop.permute.xlu0 %423
    %425 = vset.pattern.permute.xlu0 0
    %426 = vperm.xlu0 %425, %v385
    %v427 = vpop.permute.xlu0 %426
    %428 = vset.pattern.permute.xlu0 0
    %429 = vperm.xlu0 %428, %v386
    %v430 = vpop.permute.xlu0 %429
    %431 = vset.pattern.permute.xlu0 0
    %432 = vperm.xlu0 %431, %v387
    %v433 = vpop.permute.xlu0 %432
    %434 = vset.pattern.permute.xlu0 0
    %435 = vperm.xlu0 %434, %v388
    %v436 = vpop.permute.xlu0 %435
    %437 = vset.pattern.permute.xlu0 0
    %438 = vperm.xlu0 %437, %v389
    %v439 = vpop.permute.xlu0 %438
    %vm440 = vcmp.eq.s32.totalorder %v394, %v391
    %vm441 = vcmp.eq.s32.totalorder %v397, %v391
    %vm442 = vcmp.eq.s32.totalorder %v400, %v391
    %vm443 = vcmp.eq.s32.totalorder %v403, %v391
    %vm444 = vcmp.eq.s32.totalorder %v406, %v391
    %vm445 = vcmp.eq.s32.totalorder %v409, %v391
    %vm446 = vcmp.eq.s32.totalorder %v412, %v391
    %vm447 = vcmp.eq.s32.totalorder %v415, %v391
    %vm448 = vcmp.eq.s32.totalorder %v418, %v391
    %vm449 = vcmp.eq.s32.totalorder %v421, %v391
    %vm450 = vcmp.eq.s32.totalorder %v424, %v391
    %vm451 = vcmp.eq.s32.totalorder %v427, %v391
    %vm452 = vcmp.eq.s32.totalorder %v430, %v391
    %vm453 = vcmp.eq.s32.totalorder %v433, %v391
    %vm454 = vcmp.eq.s32.totalorder %v436, %v391
    %vm455 = vcmp.eq.s32.totalorder %v439, %v391
    %v456 = vsel %vm440, 1, 0
    %v457 = vsel %vm441, 1, 0
    %v458 = vsel %vm442, 1, 0
    %v459 = vsel %vm443, 1, 0
    %v460 = vsel %vm444, 1, 0
    %v461 = vsel %vm445, 1, 0
    %v462 = vsel %vm446, 1, 0
    %v463 = vsel %vm447, 1, 0
    %v464 = vsel %vm448, 1, 0
    %v465 = vsel %vm449, 1, 0
    %v466 = vsel %vm450, 1, 0
    %v467 = vsel %vm451, 1, 0
    %v468 = vsel %vm452, 1, 0
    %v469 = vsel %vm453, 1, 0
    %v470 = vsel %vm454, 1, 0
    %v471 = vsel %vm455, 1, 0
    %v472 = vcvt.s32.f32 %v456
    %v473 = vcvt.s32.f32 %v457
    %v474 = vcvt.s32.f32 %v458
    %v475 = vcvt.s32.f32 %v459
    %v476 = vcvt.s32.f32 %v460
    %v477 = vcvt.s32.f32 %v461
    %v478 = vcvt.s32.f32 %v462
    %v479 = vcvt.s32.f32 %v463
    %v480 = vcvt.s32.f32 %v464
    %v481 = vcvt.s32.f32 %v465
    %v482 = vcvt.s32.f32 %v466
    %v483 = vcvt.s32.f32 %v467
    %v484 = vcvt.s32.f32 %v468
    %v485 = vcvt.s32.f32 %v469
    %v486 = vcvt.s32.f32 %v470
    %v487 = vcvt.s32.f32 %v471
    %v488 = vadd.f32 %v472, 0.0
    %v489 = vadd.f32 %v473, 0.0
    %v490 = vadd.f32 %v474, 0.0
    %v491 = vadd.f32 %v475, 0.0
    %v492 = vadd.f32 %v476, 0.0
    %v493 = vadd.f32 %v477, 0.0
    %v494 = vadd.f32 %v478, 0.0
    %v495 = vadd.f32 %v479, 0.0
    %v496 = vadd.f32 %v480, 0.0
    %v497 = vadd.f32 %v481, 0.0
    %v498 = vadd.f32 %v482, 0.0
    %v499 = vadd.f32 %v483, 0.0
    %v500 = vadd.f32 %v484, 0.0
    %v501 = vadd.f32 %v485, 0.0
    %v502 = vadd.f32 %v486, 0.0
    %v503 = vadd.f32 %v487, 0.0
    %504 = vset.pattern.permute.xlu0 1
    %505 = vperm.xlu0 %504, %v374
    %v506 = vpop.permute.xlu0 %505
    %507 = vset.pattern.permute.xlu0 1
    %508 = vperm.xlu0 %507, %v375
    %v509 = vpop.permute.xlu0 %508
    %510 = vset.pattern.permute.xlu0 1
    %511 = vperm.xlu0 %510, %v376
    %v512 = vpop.permute.xlu0 %511
    %513 = vset.pattern.permute.xlu0 1
    %514 = vperm.xlu0 %513, %v377
    %v515 = vpop.permute.xlu0 %514
    %516 = vset.pattern.permute.xlu0 1
    %517 = vperm.xlu0 %516, %v378
    %v518 = vpop.permute.xlu0 %517
    %519 = vset.pattern.permute.xlu0 1
    %520 = vperm.xlu0 %519, %v379
    %v521 = vpop.permute.xlu0 %520
    %522 = vset.pattern.permute.xlu0 1
    %523 = vperm.xlu0 %522, %v380
    %v524 = vpop.permute.xlu0 %523
    %525 = vset.pattern.permute.xlu0 1
    %526 = vperm.xlu0 %525, %v381
    %v527 = vpop.permute.xlu0 %526
    %528 = vset.pattern.permute.xlu0 1
    %529 = vperm.xlu0 %528, %v382
    %v530 = vpop.permute.xlu0 %529
    %531 = vset.pattern.permute.xlu0 1
    %532 = vperm.xlu0 %531, %v383
    %v533 = vpop.permute.xlu0 %532
    %534 = vset.pattern.permute.xlu0 1
    %535 = vperm.xlu0 %534, %v384
    %v536 = vpop.permute.xlu0 %535
    %537 = vset.pattern.permute.xlu0 1
    %538 = vperm.xlu0 %537, %v385
    %v539 = vpop.permute.xlu0 %538
    %540 = vset.pattern.permute.xlu0 1
    %541 = vperm.xlu0 %540, %v386
    %v542 = vpop.permute.xlu0 %541
    %543 = vset.pattern.permute.xlu0 1
    %544 = vperm.xlu0 %543, %v387
    %v545 = vpop.permute.xlu0 %544
    %546 = vset.pattern.permute.xlu0 1
    %547 = vperm.xlu0 %546, %v388
    %v548 = vpop.permute.xlu0 %547
    %549 = vset.pattern.permute.xlu0 1
    %550 = vperm.xlu0 %549, %v389
    %v551 = vpop.permute.xlu0 %550
    %vm552 = vcmp.eq.s32.totalorder %v506, %v391
    %vm553 = vcmp.eq.s32.totalorder %v509, %v391
    %vm554 = vcmp.eq.s32.totalorder %v512, %v391
    %vm555 = vcmp.eq.s32.totalorder %v515, %v391
    %vm556 = vcmp.eq.s32.totalorder %v518, %v391
    %vm557 = vcmp.eq.s32.totalorder %v521, %v391
    %vm558 = vcmp.eq.s32.totalorder %v524, %v391
    %vm559 = vcmp.eq.s32.totalorder %v527, %v391
    %vm560 = vcmp.eq.s32.totalorder %v530, %v391
    %vm561 = vcmp.eq.s32.totalorder %v533, %v391
    %vm562 = vcmp.eq.s32.totalorder %v536, %v391
    %vm563 = vcmp.eq.s32.totalorder %v539, %v391
    %vm564 = vcmp.eq.s32.totalorder %v542, %v391
    %vm565 = vcmp.eq.s32.totalorder %v545, %v391
    %vm566 = vcmp.eq.s32.totalorder %v548, %v391
    %vm567 = vcmp.eq.s32.totalorder %v551, %v391
    %v568 = vsel %vm552, 1, 0
    %v569 = vsel %vm553, 1, 0
    %v570 = vsel %vm554, 1, 0
    %v571 = vsel %vm555, 1, 0
    %v572 = vsel %vm556, 1, 0
    %v573 = vsel %vm557, 1, 0
    %v574 = vsel %vm558, 1, 0
    %v575 = vsel %vm559, 1, 0
    %v576 = vsel %vm560, 1, 0
    %v577 = vsel %vm561, 1, 0
    %v578 = vsel %vm562, 1, 0
    %v579 = vsel %vm563, 1, 0
    %v580 = vsel %vm564, 1, 0
    %v581 = vsel %vm565, 1, 0
    %v582 = vsel %vm566, 1, 0
    %v583 = vsel %vm567, 1, 0
    %v584 = vcvt.s32.f32 %v568
    %v585 = vcvt.s32.f32 %v569
    %v586 = vcvt.s32.f32 %v570
    %v587 = vcvt.s32.f32 %v571
    %v588 = vcvt.s32.f32 %v572
    %v589 = vcvt.s32.f32 %v573
    %v590 = vcvt.s32.f32 %v574
    %v591 = vcvt.s32.f32 %v575
    %v592 = vcvt.s32.f32 %v576
    %v593 = vcvt.s32.f32 %v577
    %v594 = vcvt.s32.f32 %v578
    %v595 = vcvt.s32.f32 %v579
    %v596 = vcvt.s32.f32 %v580
    %v597 = vcvt.s32.f32 %v581
    %v598 = vcvt.s32.f32 %v582
    %v599 = vcvt.s32.f32 %v583
    %v600 = vadd.f32 %v488, %v584
    %v601 = vadd.f32 %v489, %v585
    %v602 = vadd.f32 %v490, %v586
    %v603 = vadd.f32 %v491, %v587
    %v604 = vadd.f32 %v492, %v588
    %v605 = vadd.f32 %v493, %v589
    %v606 = vadd.f32 %v494, %v590
    %v607 = vadd.f32 %v495, %v591
    %v608 = vadd.f32 %v496, %v592
    %v609 = vadd.f32 %v497, %v593
    %v610 = vadd.f32 %v498, %v594
    %v611 = vadd.f32 %v499, %v595
    %v612 = vadd.f32 %v500, %v596
    %v613 = vadd.f32 %v501, %v597
    %v614 = vadd.f32 %v502, %v598
    %v615 = vadd.f32 %v503, %v599
    %616 = vset.pattern.permute.xlu0 2
    %617 = vperm.xlu0 %616, %v374
    %v618 = vpop.permute.xlu0 %617
    %619 = vset.pattern.permute.xlu0 2
    %620 = vperm.xlu0 %619, %v375
    %v621 = vpop.permute.xlu0 %620
    %622 = vset.pattern.permute.xlu0 2
    %623 = vperm.xlu0 %622, %v376
    %v624 = vpop.permute.xlu0 %623
    %625 = vset.pattern.permute.xlu0 2
    %626 = vperm.xlu0 %625, %v377
    %v627 = vpop.permute.xlu0 %626
    %628 = vset.pattern.permute.xlu0 2
    %629 = vperm.xlu0 %628, %v378
    %v630 = vpop.permute.xlu0 %629
    %631 = vset.pattern.permute.xlu0 2
    %632 = vperm.xlu0 %631, %v379
    %v633 = vpop.permute.xlu0 %632
    %634 = vset.pattern.permute.xlu0 2
    %635 = vperm.xlu0 %634, %v380
    %v636 = vpop.permute.xlu0 %635
    %637 = vset.pattern.permute.xlu0 2
    %638 = vperm.xlu0 %637, %v381
    %v639 = vpop.permute.xlu0 %638
    %640 = vset.pattern.permute.xlu0 2
    %641 = vperm.xlu0 %640, %v382
    %v642 = vpop.permute.xlu0 %641
    %643 = vset.pattern.permute.xlu0 2
    %644 = vperm.xlu0 %643, %v383
    %v645 = vpop.permute.xlu0 %644
    %646 = vset.pattern.permute.xlu0 2
    %647 = vperm.xlu0 %646, %v384
    %v648 = vpop.permute.xlu0 %647
    %649 = vset.pattern.permute.xlu0 2
    %650 = vperm.xlu0 %649, %v385
    %v651 = vpop.permute.xlu0 %650
    %652 = vset.pattern.permute.xlu0 2
    %653 = vperm.xlu0 %652, %v386
    %v654 = vpop.permute.xlu0 %653
    %655 = vset.pattern.permute.xlu0 2
    %656 = vperm.xlu0 %655, %v387
    %v657 = vpop.permute.xlu0 %656
    %658 = vset.pattern.permute.xlu0 2
    %659 = vperm.xlu0 %658, %v388
    %v660 = vpop.permute.xlu0 %659
    %661 = vset.pattern.permute.xlu0 2
    %662 = vperm.xlu0 %661, %v389
    %v663 = vpop.permute.xlu0 %662
    %vm664 = vcmp.eq.s32.totalorder %v618, %v391
    %vm665 = vcmp.eq.s32.totalorder %v621, %v391
    %vm666 = vcmp.eq.s32.totalorder %v624, %v391
    %vm667 = vcmp.eq.s32.totalorder %v627, %v391
    %vm668 = vcmp.eq.s32.totalorder %v630, %v391
    %vm669 = vcmp.eq.s32.totalorder %v633, %v391
    %vm670 = vcmp.eq.s32.totalorder %v636, %v391
    %vm671 = vcmp.eq.s32.totalorder %v639, %v391
    %vm672 = vcmp.eq.s32.totalorder %v642, %v391
    %vm673 = vcmp.eq.s32.totalorder %v645, %v391
    %vm674 = vcmp.eq.s32.totalorder %v648, %v391
    %vm675 = vcmp.eq.s32.totalorder %v651, %v391
    %vm676 = vcmp.eq.s32.totalorder %v654, %v391
    %vm677 = vcmp.eq.s32.totalorder %v657, %v391
    %vm678 = vcmp.eq.s32.totalorder %v660, %v391
    %vm679 = vcmp.eq.s32.totalorder %v663, %v391
    %v680 = vsel %vm664, 1, 0
    %v681 = vsel %vm665, 1, 0
    %v682 = vsel %vm666, 1, 0
    %v683 = vsel %vm667, 1, 0
    %v684 = vsel %vm668, 1, 0
    %v685 = vsel %vm669, 1, 0
    %v686 = vsel %vm670, 1, 0
    %v687 = vsel %vm671, 1, 0
    %v688 = vsel %vm672, 1, 0
    %v689 = vsel %vm673, 1, 0
    %v690 = vsel %vm674, 1, 0
    %v691 = vsel %vm675, 1, 0
    %v692 = vsel %vm676, 1, 0
    %v693 = vsel %vm677, 1, 0
    %v694 = vsel %vm678, 1, 0
    %v695 = vsel %vm679, 1, 0
    %v696 = vcvt.s32.f32 %v680
    %v697 = vcvt.s32.f32 %v681
    %v698 = vcvt.s32.f32 %v682
    %v699 = vcvt.s32.f32 %v683
    %v700 = vcvt.s32.f32 %v684
    %v701 = vcvt.s32.f32 %v685
    %v702 = vcvt.s32.f32 %v686
    %v703 = vcvt.s32.f32 %v687
    %v704 = vcvt.s32.f32 %v688
    %v705 = vcvt.s32.f32 %v689
    %v706 = vcvt.s32.f32 %v690
    %v707 = vcvt.s32.f32 %v691
    %v708 = vcvt.s32.f32 %v692
    %v709 = vcvt.s32.f32 %v693
    %v710 = vcvt.s32.f32 %v694
    %v711 = vcvt.s32.f32 %v695
    %v712 = vadd.f32 %v600, %v696
    %v713 = vadd.f32 %v601, %v697
    %v714 = vadd.f32 %v602, %v698
    %v715 = vadd.f32 %v603, %v699
    %v716 = vadd.f32 %v604, %v700
    %v717 = vadd.f32 %v605, %v701
    %v718 = vadd.f32 %v606, %v702
    %v719 = vadd.f32 %v607, %v703
    %v720 = vadd.f32 %v608, %v704
    %v721 = vadd.f32 %v609, %v705
    %v722 = vadd.f32 %v610, %v706
    %v723 = vadd.f32 %v611, %v707
    %v724 = vadd.f32 %v612, %v708
    %v725 = vadd.f32 %v613, %v709
    %v726 = vadd.f32 %v614, %v710
    %v727 = vadd.f32 %v615, %v711
    %728 = vset.pattern.permute.xlu0 3
    %729 = vperm.xlu0 %728, %v374
    %v730 = vpop.permute.xlu0 %729
    %731 = vset.pattern.permute.xlu0 3
    %732 = vperm.xlu0 %731, %v375
    %v733 = vpop.permute.xlu0 %732
    %734 = vset.pattern.permute.xlu0 3
    %735 = vperm.xlu0 %734, %v376
    %v736 = vpop.permute.xlu0 %735
    %737 = vset.pattern.permute.xlu0 3
    %738 = vperm.xlu0 %737, %v377
    %v739 = vpop.permute.xlu0 %738
    %740 = vset.pattern.permute.xlu0 3
    %741 = vperm.xlu0 %740, %v378
    %v742 = vpop.permute.xlu0 %741
    %743 = vset.pattern.permute.xlu0 3
    %744 = vperm.xlu0 %743, %v379
    %v745 = vpop.permute.xlu0 %744
    %746 = vset.pattern.permute.xlu0 3
    %747 = vperm.xlu0 %746, %v380
    %v748 = vpop.permute.xlu0 %747
    %749 = vset.pattern.permute.xlu0 3
    %750 = vperm.xlu0 %749, %v381
    %v751 = vpop.permute.xlu0 %750
    %752 = vset.pattern.permute.xlu0 3
    %753 = vperm.xlu0 %752, %v382
    %v754 = vpop.permute.xlu0 %753
    %755 = vset.pattern.permute.xlu0 3
    %756 = vperm.xlu0 %755, %v383
    %v757 = vpop.permute.xlu0 %756
    %758 = vset.pattern.permute.xlu0 3
    %759 = vperm.xlu0 %758, %v384
    %v760 = vpop.permute.xlu0 %759
    %761 = vset.pattern.permute.xlu0 3
    %762 = vperm.xlu0 %761, %v385
    %v763 = vpop.permute.xlu0 %762
    %764 = vset.pattern.permute.xlu0 3
    %765 = vperm.xlu0 %764, %v386
    %v766 = vpop.permute.xlu0 %765
    %767 = vset.pattern.permute.xlu0 3
    %768 = vperm.xlu0 %767, %v387
    %v769 = vpop.permute.xlu0 %768
    %770 = vset.pattern.permute.xlu0 3
    %771 = vperm.xlu0 %770, %v388
    %v772 = vpop.permute.xlu0 %771
    %773 = vset.pattern.permute.xlu0 3
    %774 = vperm.xlu0 %773, %v389
    %v775 = vpop.permute.xlu0 %774
    %vm776 = vcmp.eq.s32.totalorder %v730, %v391
    %vm777 = vcmp.eq.s32.totalorder %v733, %v391
    %vm778 = vcmp.eq.s32.totalorder %v736, %v391
    %vm779 = vcmp.eq.s32.totalorder %v739, %v391
    %vm780 = vcmp.eq.s32.totalorder %v742, %v391
    %vm781 = vcmp.eq.s32.totalorder %v745, %v391
    %vm782 = vcmp.eq.s32.totalorder %v748, %v391
    %vm783 = vcmp.eq.s32.totalorder %v751, %v391
    %vm784 = vcmp.eq.s32.totalorder %v754, %v391
    %vm785 = vcmp.eq.s32.totalorder %v757, %v391
    %vm786 = vcmp.eq.s32.totalorder %v760, %v391
    %vm787 = vcmp.eq.s32.totalorder %v763, %v391
    %vm788 = vcmp.eq.s32.totalorder %v766, %v391
    %vm789 = vcmp.eq.s32.totalorder %v769, %v391
    %vm790 = vcmp.eq.s32.totalorder %v772, %v391
    %vm791 = vcmp.eq.s32.totalorder %v775, %v391
    %v792 = vsel %vm776, 1, 0
    %v793 = vsel %vm777, 1, 0
    %v794 = vsel %vm778, 1, 0
    %v795 = vsel %vm779, 1, 0
    %v796 = vsel %vm780, 1, 0
    %v797 = vsel %vm781, 1, 0
    %v798 = vsel %vm782, 1, 0
    %v799 = vsel %vm783, 1, 0
    %v800 = vsel %vm784, 1, 0
    %v801 = vsel %vm785, 1, 0
    %v802 = vsel %vm786, 1, 0
    %v803 = vsel %vm787, 1, 0
    %v804 = vsel %vm788, 1, 0
    %v805 = vsel %vm789, 1, 0
    %v806 = vsel %vm790, 1, 0
    %v807 = vsel %vm791, 1, 0
    %v808 = vcvt.s32.f32 %v792
    %v809 = vcvt.s32.f32 %v793
    %v810 = vcvt.s32.f32 %v794
    %v811 = vcvt.s32.f32 %v795
    %v812 = vcvt.s32.f32 %v796
    %v813 = vcvt.s32.f32 %v797
    %v814 = vcvt.s32.f32 %v798
    %v815 = vcvt.s32.f32 %v799
    %v816 = vcvt.s32.f32 %v800
    %v817 = vcvt.s32.f32 %v801
    %v818 = vcvt.s32.f32 %v802
    %v819 = vcvt.s32.f32 %v803
    %v820 = vcvt.s32.f32 %v804
    %v821 = vcvt.s32.f32 %v805
    %v822 = vcvt.s32.f32 %v806
    %v823 = vcvt.s32.f32 %v807
    %v824 = vadd.f32 %v712, %v808
    %v825 = vadd.f32 %v713, %v809
    %v826 = vadd.f32 %v714, %v810
    %v827 = vadd.f32 %v715, %v811
    %v828 = vadd.f32 %v716, %v812
    %v829 = vadd.f32 %v717, %v813
    %v830 = vadd.f32 %v718, %v814
    %v831 = vadd.f32 %v719, %v815
    %v832 = vadd.f32 %v720, %v816
    %v833 = vadd.f32 %v721, %v817
    %v834 = vadd.f32 %v722, %v818
    %v835 = vadd.f32 %v723, %v819
    %v836 = vadd.f32 %v724, %v820
    %v837 = vadd.f32 %v725, %v821
    %v838 = vadd.f32 %v726, %v822
    %v839 = vadd.f32 %v727, %v823
    %840 = vset.pattern.permute.xlu0 4
    %841 = vperm.xlu0 %840, %v374
    %v842 = vpop.permute.xlu0 %841
    %843 = vset.pattern.permute.xlu0 4
    %844 = vperm.xlu0 %843, %v375
    %v845 = vpop.permute.xlu0 %844
    %846 = vset.pattern.permute.xlu0 4
    %847 = vperm.xlu0 %846, %v376
    %v848 = vpop.permute.xlu0 %847
    %849 = vset.pattern.permute.xlu0 4
    %850 = vperm.xlu0 %849, %v377
    %v851 = vpop.permute.xlu0 %850
    %852 = vset.pattern.permute.xlu0 4
    %853 = vperm.xlu0 %852, %v378
    %v854 = vpop.permute.xlu0 %853
    %855 = vset.pattern.permute.xlu0 4
    %856 = vperm.xlu0 %855, %v379
    %v857 = vpop.permute.xlu0 %856
    %858 = vset.pattern.permute.xlu0 4
    %859 = vperm.xlu0 %858, %v380
    %v860 = vpop.permute.xlu0 %859
    %861 = vset.pattern.permute.xlu0 4
    %862 = vperm.xlu0 %861, %v381
    %v863 = vpop.permute.xlu0 %862
    %864 = vset.pattern.permute.xlu0 4
    %865 = vperm.xlu0 %864, %v382
    %v866 = vpop.permute.xlu0 %865
    %867 = vset.pattern.permute.xlu0 4
    %868 = vperm.xlu0 %867, %v383
    %v869 = vpop.permute.xlu0 %868
    %870 = vset.pattern.permute.xlu0 4
    %871 = vperm.xlu0 %870, %v384
    %v872 = vpop.permute.xlu0 %871
    %873 = vset.pattern.permute.xlu0 4
    %874 = vperm.xlu0 %873, %v385
    %v875 = vpop.permute.xlu0 %874
    %876 = vset.pattern.permute.xlu0 4
    %877 = vperm.xlu0 %876, %v386
    %v878 = vpop.permute.xlu0 %877
    %879 = vset.pattern.permute.xlu0 4
    %880 = vperm.xlu0 %879, %v387
    %v881 = vpop.permute.xlu0 %880
    %882 = vset.pattern.permute.xlu0 4
    %883 = vperm.xlu0 %882, %v388
    %v884 = vpop.permute.xlu0 %883
    %885 = vset.pattern.permute.xlu0 4
    %886 = vperm.xlu0 %885, %v389
    %v887 = vpop.permute.xlu0 %886
    %vm888 = vcmp.eq.s32.totalorder %v842, %v391
    %vm889 = vcmp.eq.s32.totalorder %v845, %v391
    %vm890 = vcmp.eq.s32.totalorder %v848, %v391
    %vm891 = vcmp.eq.s32.totalorder %v851, %v391
    %vm892 = vcmp.eq.s32.totalorder %v854, %v391
    %vm893 = vcmp.eq.s32.totalorder %v857, %v391
    %vm894 = vcmp.eq.s32.totalorder %v860, %v391
    %vm895 = vcmp.eq.s32.totalorder %v863, %v391
    %vm896 = vcmp.eq.s32.totalorder %v866, %v391
    %vm897 = vcmp.eq.s32.totalorder %v869, %v391
    %vm898 = vcmp.eq.s32.totalorder %v872, %v391
    %vm899 = vcmp.eq.s32.totalorder %v875, %v391
    %vm900 = vcmp.eq.s32.totalorder %v878, %v391
    %vm901 = vcmp.eq.s32.totalorder %v881, %v391
    %vm902 = vcmp.eq.s32.totalorder %v884, %v391
    %vm903 = vcmp.eq.s32.totalorder %v887, %v391
    %v904 = vsel %vm888, 1, 0
    %v905 = vsel %vm889, 1, 0
    %v906 = vsel %vm890, 1, 0
    %v907 = vsel %vm891, 1, 0
    %v908 = vsel %vm892, 1, 0
    %v909 = vsel %vm893, 1, 0
    %v910 = vsel %vm894, 1, 0
    %v911 = vsel %vm895, 1, 0
    %v912 = vsel %vm896, 1, 0
    %v913 = vsel %vm897, 1, 0
    %v914 = vsel %vm898, 1, 0
    %v915 = vsel %vm899, 1, 0
    %v916 = vsel %vm900, 1, 0
    %v917 = vsel %vm901, 1, 0
    %v918 = vsel %vm902, 1, 0
    %v919 = vsel %vm903, 1, 0
    %v920 = vcvt.s32.f32 %v904
    %v921 = vcvt.s32.f32 %v905
    %v922 = vcvt.s32.f32 %v906
    %v923 = vcvt.s32.f32 %v907
    %v924 = vcvt.s32.f32 %v908
    %v925 = vcvt.s32.f32 %v909
    %v926 = vcvt.s32.f32 %v910
    %v927 = vcvt.s32.f32 %v911
    %v928 = vcvt.s32.f32 %v912
    %v929 = vcvt.s32.f32 %v913
    %v930 = vcvt.s32.f32 %v914
    %v931 = vcvt.s32.f32 %v915
    %v932 = vcvt.s32.f32 %v916
    %v933 = vcvt.s32.f32 %v917
    %v934 = vcvt.s32.f32 %v918
    %v935 = vcvt.s32.f32 %v919
    %v936 = vadd.f32 %v824, %v920
    %v937 = vadd.f32 %v825, %v921
    %v938 = vadd.f32 %v826, %v922
    %v939 = vadd.f32 %v827, %v923
    %v940 = vadd.f32 %v828, %v924
    %v941 = vadd.f32 %v829, %v925
    %v942 = vadd.f32 %v830, %v926
    %v943 = vadd.f32 %v831, %v927
    %v944 = vadd.f32 %v832, %v928
    %v945 = vadd.f32 %v833, %v929
    %v946 = vadd.f32 %v834, %v930
    %v947 = vadd.f32 %v835, %v931
    %v948 = vadd.f32 %v836, %v932
    %v949 = vadd.f32 %v837, %v933
    %v950 = vadd.f32 %v838, %v934
    %v951 = vadd.f32 %v839, %v935
    %952 = vset.pattern.permute.xlu0 5
    %953 = vperm.xlu0 %952, %v374
    %v954 = vpop.permute.xlu0 %953
    %955 = vset.pattern.permute.xlu0 5
    %956 = vperm.xlu0 %955, %v375
    %v957 = vpop.permute.xlu0 %956
    %958 = vset.pattern.permute.xlu0 5
    %959 = vperm.xlu0 %958, %v376
    %v960 = vpop.permute.xlu0 %959
    %961 = vset.pattern.permute.xlu0 5
    %962 = vperm.xlu0 %961, %v377
    %v963 = vpop.permute.xlu0 %962
    %964 = vset.pattern.permute.xlu0 5
    %965 = vperm.xlu0 %964, %v378
    %v966 = vpop.permute.xlu0 %965
    %967 = vset.pattern.permute.xlu0 5
    %968 = vperm.xlu0 %967, %v379
    %v969 = vpop.permute.xlu0 %968
    %970 = vset.pattern.permute.xlu0 5
    %971 = vperm.xlu0 %970, %v380
    %v972 = vpop.permute.xlu0 %971
    %973 = vset.pattern.permute.xlu0 5
    %974 = vperm.xlu0 %973, %v381
    %v975 = vpop.permute.xlu0 %974
    %976 = vset.pattern.permute.xlu0 5
    %977 = vperm.xlu0 %976, %v382
    %v978 = vpop.permute.xlu0 %977
    %979 = vset.pattern.permute.xlu0 5
    %980 = vperm.xlu0 %979, %v383
    %v981 = vpop.permute.xlu0 %980
    %982 = vset.pattern.permute.xlu0 5
    %983 = vperm.xlu0 %982, %v384
    %v984 = vpop.permute.xlu0 %983
    %985 = vset.pattern.permute.xlu0 5
    %986 = vperm.xlu0 %985, %v385
    %v987 = vpop.permute.xlu0 %986
    %988 = vset.pattern.permute.xlu0 5
    %989 = vperm.xlu0 %988, %v386
    %v990 = vpop.permute.xlu0 %989
    %991 = vset.pattern.permute.xlu0 5
    %992 = vperm.xlu0 %991, %v387
    %v993 = vpop.permute.xlu0 %992
    %994 = vset.pattern.permute.xlu0 5
    %995 = vperm.xlu0 %994, %v388
    %v996 = vpop.permute.xlu0 %995
    %997 = vset.pattern.permute.xlu0 5
    %998 = vperm.xlu0 %997, %v389
    %v999 = vpop.permute.xlu0 %998
    %vm1000 = vcmp.eq.s32.totalorder %v954, %v391
    %vm1001 = vcmp.eq.s32.totalorder %v957, %v391
    %vm1002 = vcmp.eq.s32.totalorder %v960, %v391
    %vm1003 = vcmp.eq.s32.totalorder %v963, %v391
    %vm1004 = vcmp.eq.s32.totalorder %v966, %v391
    %vm1005 = vcmp.eq.s32.totalorder %v969, %v391
    %vm1006 = vcmp.eq.s32.totalorder %v972, %v391
    %vm1007 = vcmp.eq.s32.totalorder %v975, %v391
    %vm1008 = vcmp.eq.s32.totalorder %v978, %v391
    %vm1009 = vcmp.eq.s32.totalorder %v981, %v391
    %vm1010 = vcmp.eq.s32.totalorder %v984, %v391
    %vm1011 = vcmp.eq.s32.totalorder %v987, %v391
    %vm1012 = vcmp.eq.s32.totalorder %v990, %v391
    %vm1013 = vcmp.eq.s32.totalorder %v993, %v391
    %vm1014 = vcmp.eq.s32.totalorder %v996, %v391
    %vm1015 = vcmp.eq.s32.totalorder %v999, %v391
    %v1016 = vsel %vm1000, 1, 0
    %v1017 = vsel %vm1001, 1, 0
    %v1018 = vsel %vm1002, 1, 0
    %v1019 = vsel %vm1003, 1, 0
    %v1020 = vsel %vm1004, 1, 0
    %v1021 = vsel %vm1005, 1, 0
    %v1022 = vsel %vm1006, 1, 0
    %v1023 = vsel %vm1007, 1, 0
    %v1024 = vsel %vm1008, 1, 0
    %v1025 = vsel %vm1009, 1, 0
    %v1026 = vsel %vm1010, 1, 0
    %v1027 = vsel %vm1011, 1, 0
    %v1028 = vsel %vm1012, 1, 0
    %v1029 = vsel %vm1013, 1, 0
    %v1030 = vsel %vm1014, 1, 0
    %v1031 = vsel %vm1015, 1, 0
    %v1032 = vcvt.s32.f32 %v1016
    %v1033 = vcvt.s32.f32 %v1017
    %v1034 = vcvt.s32.f32 %v1018
    %v1035 = vcvt.s32.f32 %v1019
    %v1036 = vcvt.s32.f32 %v1020
    %v1037 = vcvt.s32.f32 %v1021
    %v1038 = vcvt.s32.f32 %v1022
    %v1039 = vcvt.s32.f32 %v1023
    %v1040 = vcvt.s32.f32 %v1024
    %v1041 = vcvt.s32.f32 %v1025
    %v1042 = vcvt.s32.f32 %v1026
    %v1043 = vcvt.s32.f32 %v1027
    %v1044 = vcvt.s32.f32 %v1028
    %v1045 = vcvt.s32.f32 %v1029
    %v1046 = vcvt.s32.f32 %v1030
    %v1047 = vcvt.s32.f32 %v1031
    %v1048 = vadd.f32 %v936, %v1032
    %v1049 = vadd.f32 %v937, %v1033
    %v1050 = vadd.f32 %v938, %v1034
    %v1051 = vadd.f32 %v939, %v1035
    %v1052 = vadd.f32 %v940, %v1036
    %v1053 = vadd.f32 %v941, %v1037
    %v1054 = vadd.f32 %v942, %v1038
    %v1055 = vadd.f32 %v943, %v1039
    %v1056 = vadd.f32 %v944, %v1040
    %v1057 = vadd.f32 %v945, %v1041
    %v1058 = vadd.f32 %v946, %v1042
    %v1059 = vadd.f32 %v947, %v1043
    %v1060 = vadd.f32 %v948, %v1044
    %v1061 = vadd.f32 %v949, %v1045
    %v1062 = vadd.f32 %v950, %v1046
    %v1063 = vadd.f32 %v951, %v1047
    %1064 = vset.pattern.permute.xlu0 6
    %1065 = vperm.xlu0 %1064, %v374
    %v1066 = vpop.permute.xlu0 %1065
    %1067 = vset.pattern.permute.xlu0 6
    %1068 = vperm.xlu0 %1067, %v375
    %v1069 = vpop.permute.xlu0 %1068
    %1070 = vset.pattern.permute.xlu0 6
    %1071 = vperm.xlu0 %1070, %v376
    %v1072 = vpop.permute.xlu0 %1071
    %1073 = vset.pattern.permute.xlu0 6
    %1074 = vperm.xlu0 %1073, %v377
    %v1075 = vpop.permute.xlu0 %1074
    %1076 = vset.pattern.permute.xlu0 6
    %1077 = vperm.xlu0 %1076, %v378
    %v1078 = vpop.permute.xlu0 %1077
    %1079 = vset.pattern.permute.xlu0 6
    %1080 = vperm.xlu0 %1079, %v379
    %v1081 = vpop.permute.xlu0 %1080
    %1082 = vset.pattern.permute.xlu0 6
    %1083 = vperm.xlu0 %1082, %v380
    %v1084 = vpop.permute.xlu0 %1083
    %1085 = vset.pattern.permute.xlu0 6
    %1086 = vperm.xlu0 %1085, %v381
    %v1087 = vpop.permute.xlu0 %1086
    %1088 = vset.pattern.permute.xlu0 6
    %1089 = vperm.xlu0 %1088, %v382
    %v1090 = vpop.permute.xlu0 %1089
    %1091 = vset.pattern.permute.xlu0 6
    %1092 = vperm.xlu0 %1091, %v383
    %v1093 = vpop.permute.xlu0 %1092
    %1094 = vset.pattern.permute.xlu0 6
    %1095 = vperm.xlu0 %1094, %v384
    %v1096 = vpop.permute.xlu0 %1095
    %1097 = vset.pattern.permute.xlu0 6
    %1098 = vperm.xlu0 %1097, %v385
    %v1099 = vpop.permute.xlu0 %1098
    %1100 = vset.pattern.permute.xlu0 6
    %1101 = vperm.xlu0 %1100, %v386
    %v1102 = vpop.permute.xlu0 %1101
    %1103 = vset.pattern.permute.xlu0 6
    %1104 = vperm.xlu0 %1103, %v387
    %v1105 = vpop.permute.xlu0 %1104
    %1106 = vset.pattern.permute.xlu0 6
    %1107 = vperm.xlu0 %1106, %v388
    %v1108 = vpop.permute.xlu0 %1107
    %1109 = vset.pattern.permute.xlu0 6
    %1110 = vperm.xlu0 %1109, %v389
    %v1111 = vpop.permute.xlu0 %1110
    %vm1112 = vcmp.eq.s32.totalorder %v1066, %v391
    %vm1113 = vcmp.eq.s32.totalorder %v1069, %v391
    %vm1114 = vcmp.eq.s32.totalorder %v1072, %v391
    %vm1115 = vcmp.eq.s32.totalorder %v1075, %v391
    %vm1116 = vcmp.eq.s32.totalorder %v1078, %v391
    %vm1117 = vcmp.eq.s32.totalorder %v1081, %v391
    %vm1118 = vcmp.eq.s32.totalorder %v1084, %v391
    %vm1119 = vcmp.eq.s32.totalorder %v1087, %v391
    %vm1120 = vcmp.eq.s32.totalorder %v1090, %v391
    %vm1121 = vcmp.eq.s32.totalorder %v1093, %v391
    %vm1122 = vcmp.eq.s32.totalorder %v1096, %v391
    %vm1123 = vcmp.eq.s32.totalorder %v1099, %v391
    %vm1124 = vcmp.eq.s32.totalorder %v1102, %v391
    %vm1125 = vcmp.eq.s32.totalorder %v1105, %v391
    %vm1126 = vcmp.eq.s32.totalorder %v1108, %v391
    %vm1127 = vcmp.eq.s32.totalorder %v1111, %v391
    %v1128 = vsel %vm1112, 1, 0
    %v1129 = vsel %vm1113, 1, 0
    %v1130 = vsel %vm1114, 1, 0
    %v1131 = vsel %vm1115, 1, 0
    %v1132 = vsel %vm1116, 1, 0
    %v1133 = vsel %vm1117, 1, 0
    %v1134 = vsel %vm1118, 1, 0
    %v1135 = vsel %vm1119, 1, 0
    %v1136 = vsel %vm1120, 1, 0
    %v1137 = vsel %vm1121, 1, 0
    %v1138 = vsel %vm1122, 1, 0
    %v1139 = vsel %vm1123, 1, 0
    %v1140 = vsel %vm1124, 1, 0
    %v1141 = vsel %vm1125, 1, 0
    %v1142 = vsel %vm1126, 1, 0
    %v1143 = vsel %vm1127, 1, 0
    %v1144 = vcvt.s32.f32 %v1128
    %v1145 = vcvt.s32.f32 %v1129
    %v1146 = vcvt.s32.f32 %v1130
    %v1147 = vcvt.s32.f32 %v1131
    %v1148 = vcvt.s32.f32 %v1132
    %v1149 = vcvt.s32.f32 %v1133
    %v1150 = vcvt.s32.f32 %v1134
    %v1151 = vcvt.s32.f32 %v1135
    %v1152 = vcvt.s32.f32 %v1136
    %v1153 = vcvt.s32.f32 %v1137
    %v1154 = vcvt.s32.f32 %v1138
    %v1155 = vcvt.s32.f32 %v1139
    %v1156 = vcvt.s32.f32 %v1140
    %v1157 = vcvt.s32.f32 %v1141
    %v1158 = vcvt.s32.f32 %v1142
    %v1159 = vcvt.s32.f32 %v1143
    %v1160 = vadd.f32 %v1048, %v1144
    %v1161 = vadd.f32 %v1049, %v1145
    %v1162 = vadd.f32 %v1050, %v1146
    %v1163 = vadd.f32 %v1051, %v1147
    %v1164 = vadd.f32 %v1052, %v1148
    %v1165 = vadd.f32 %v1053, %v1149
    %v1166 = vadd.f32 %v1054, %v1150
    %v1167 = vadd.f32 %v1055, %v1151
    %v1168 = vadd.f32 %v1056, %v1152
    %v1169 = vadd.f32 %v1057, %v1153
    %v1170 = vadd.f32 %v1058, %v1154
    %v1171 = vadd.f32 %v1059, %v1155
    %v1172 = vadd.f32 %v1060, %v1156
    %v1173 = vadd.f32 %v1061, %v1157
    %v1174 = vadd.f32 %v1062, %v1158
    %v1175 = vadd.f32 %v1063, %v1159
    %1176 = vset.pattern.permute.xlu0 7
    %1177 = vperm.xlu0 %1176, %v374
    %v1178 = vpop.permute.xlu0 %1177
    %1179 = vset.pattern.permute.xlu0 7
    %1180 = vperm.xlu0 %1179, %v375
    %v1181 = vpop.permute.xlu0 %1180
    %1182 = vset.pattern.permute.xlu0 7
    %1183 = vperm.xlu0 %1182, %v376
    %v1184 = vpop.permute.xlu0 %1183
    %1185 = vset.pattern.permute.xlu0 7
    %1186 = vperm.xlu0 %1185, %v377
    %v1187 = vpop.permute.xlu0 %1186
    %1188 = vset.pattern.permute.xlu0 7
    %1189 = vperm.xlu0 %1188, %v378
    %v1190 = vpop.permute.xlu0 %1189
    %1191 = vset.pattern.permute.xlu0 7
    %1192 = vperm.xlu0 %1191, %v379
    %v1193 = vpop.permute.xlu0 %1192
    %1194 = vset.pattern.permute.xlu0 7
    %1195 = vperm.xlu0 %1194, %v380
    %v1196 = vpop.permute.xlu0 %1195
    %1197 = vset.pattern.permute.xlu0 7
    %1198 = vperm.xlu0 %1197, %v381
    %v1199 = vpop.permute.xlu0 %1198
    %1200 = vset.pattern.permute.xlu0 7
    %1201 = vperm.xlu0 %1200, %v382
    %v1202 = vpop.permute.xlu0 %1201
    %1203 = vset.pattern.permute.xlu0 7
    %1204 = vperm.xlu0 %1203, %v383
    %v1205 = vpop.permute.xlu0 %1204
    %1206 = vset.pattern.permute.xlu0 7
    %1207 = vperm.xlu0 %1206, %v384
    %v1208 = vpop.permute.xlu0 %1207
    %1209 = vset.pattern.permute.xlu0 7
    %1210 = vperm.xlu0 %1209, %v385
    %v1211 = vpop.permute.xlu0 %1210
    %1212 = vset.pattern.permute.xlu0 7
    %1213 = vperm.xlu0 %1212, %v386
    %v1214 = vpop.permute.xlu0 %1213
    %1215 = vset.pattern.permute.xlu0 7
    %1216 = vperm.xlu0 %1215, %v387
    %v1217 = vpop.permute.xlu0 %1216
    %1218 = vset.pattern.permute.xlu0 7
    %1219 = vperm.xlu0 %1218, %v388
    %v1220 = vpop.permute.xlu0 %1219
    %1221 = vset.pattern.permute.xlu0 7
    %1222 = vperm.xlu0 %1221, %v389
    %v1223 = vpop.permute.xlu0 %1222
    %vm1224 = vcmp.eq.s32.totalorder %v1178, %v391
    %vm1225 = vcmp.eq.s32.totalorder %v1181, %v391
    %vm1226 = vcmp.eq.s32.totalorder %v1184, %v391
    %vm1227 = vcmp.eq.s32.totalorder %v1187, %v391
    %vm1228 = vcmp.eq.s32.totalorder %v1190, %v391
    %vm1229 = vcmp.eq.s32.totalorder %v1193, %v391
    %vm1230 = vcmp.eq.s32.totalorder %v1196, %v391
    %vm1231 = vcmp.eq.s32.totalorder %v1199, %v391
    %vm1232 = vcmp.eq.s32.totalorder %v1202, %v391
    %vm1233 = vcmp.eq.s32.totalorder %v1205, %v391
    %vm1234 = vcmp.eq.s32.totalorder %v1208, %v391
    %vm1235 = vcmp.eq.s32.totalorder %v1211, %v391
    %vm1236 = vcmp.eq.s32.totalorder %v1214, %v391
    %vm1237 = vcmp.eq.s32.totalorder %v1217, %v391
    %vm1238 = vcmp.eq.s32.totalorder %v1220, %v391
    %vm1239 = vcmp.eq.s32.totalorder %v1223, %v391
    %v1240 = vsel %vm1224, 1, 0
    %v1241 = vsel %vm1225, 1, 0
    %v1242 = vsel %vm1226, 1, 0
    %v1243 = vsel %vm1227, 1, 0
    %v1244 = vsel %vm1228, 1, 0
    %v1245 = vsel %vm1229, 1, 0
    %v1246 = vsel %vm1230, 1, 0
    %v1247 = vsel %vm1231, 1, 0
    %v1248 = vsel %vm1232, 1, 0
    %v1249 = vsel %vm1233, 1, 0
    %v1250 = vsel %vm1234, 1, 0
    %v1251 = vsel %vm1235, 1, 0
    %v1252 = vsel %vm1236, 1, 0
    %v1253 = vsel %vm1237, 1, 0
    %v1254 = vsel %vm1238, 1, 0
    %v1255 = vsel %vm1239, 1, 0
    %v1256 = vcvt.s32.f32 %v1240
    %v1257 = vcvt.s32.f32 %v1241
    %v1258 = vcvt.s32.f32 %v1242
    %v1259 = vcvt.s32.f32 %v1243
    %v1260 = vcvt.s32.f32 %v1244
    %v1261 = vcvt.s32.f32 %v1245
    %v1262 = vcvt.s32.f32 %v1246
    %v1263 = vcvt.s32.f32 %v1247
    %v1264 = vcvt.s32.f32 %v1248
    %v1265 = vcvt.s32.f32 %v1249
    %v1266 = vcvt.s32.f32 %v1250
    %v1267 = vcvt.s32.f32 %v1251
    %v1268 = vcvt.s32.f32 %v1252
    %v1269 = vcvt.s32.f32 %v1253
    %v1270 = vcvt.s32.f32 %v1254
    %v1271 = vcvt.s32.f32 %v1255
    %v1272 = vadd.f32 %v1160, %v1256
    %v1273 = vadd.f32 %v1161, %v1257
    %v1274 = vadd.f32 %v1162, %v1258
    %v1275 = vadd.f32 %v1163, %v1259
    %v1276 = vadd.f32 %v1164, %v1260
    %v1277 = vadd.f32 %v1165, %v1261
    %v1278 = vadd.f32 %v1166, %v1262
    %v1279 = vadd.f32 %v1167, %v1263
    %v1280 = vadd.f32 %v1168, %v1264
    %v1281 = vadd.f32 %v1169, %v1265
    %v1282 = vadd.f32 %v1170, %v1266
    %v1283 = vadd.f32 %v1171, %v1267
    %v1284 = vadd.f32 %v1172, %v1268
    %v1285 = vadd.f32 %v1173, %v1269
    %v1286 = vadd.f32 %v1174, %v1270
    %v1287 = vadd.f32 %v1175, %v1271
    %1288 = vset.pattern.permute.xlu0 8
    %1289 = vperm.xlu0 %1288, %v374
    %v1290 = vpop.permute.xlu0 %1289
    %1291 = vset.pattern.permute.xlu0 8
    %1292 = vperm.xlu0 %1291, %v375
    %v1293 = vpop.permute.xlu0 %1292
    %1294 = vset.pattern.permute.xlu0 8
    %1295 = vperm.xlu0 %1294, %v376
    %v1296 = vpop.permute.xlu0 %1295
    %1297 = vset.pattern.permute.xlu0 8
    %1298 = vperm.xlu0 %1297, %v377
    %v1299 = vpop.permute.xlu0 %1298
    %1300 = vset.pattern.permute.xlu0 8
    %1301 = vperm.xlu0 %1300, %v378
    %v1302 = vpop.permute.xlu0 %1301
    %1303 = vset.pattern.permute.xlu0 8
    %1304 = vperm.xlu0 %1303, %v379
    %v1305 = vpop.permute.xlu0 %1304
    %1306 = vset.pattern.permute.xlu0 8
    %1307 = vperm.xlu0 %1306, %v380
    %v1308 = vpop.permute.xlu0 %1307
    %1309 = vset.pattern.permute.xlu0 8
    %1310 = vperm.xlu0 %1309, %v381
    %v1311 = vpop.permute.xlu0 %1310
    %1312 = vset.pattern.permute.xlu0 8
    %1313 = vperm.xlu0 %1312, %v382
    %v1314 = vpop.permute.xlu0 %1313
    %1315 = vset.pattern.permute.xlu0 8
    %1316 = vperm.xlu0 %1315, %v383
    %v1317 = vpop.permute.xlu0 %1316
    %1318 = vset.pattern.permute.xlu0 8
    %1319 = vperm.xlu0 %1318, %v384
    %v1320 = vpop.permute.xlu0 %1319
    %1321 = vset.pattern.permute.xlu0 8
    %1322 = vperm.xlu0 %1321, %v385
    %v1323 = vpop.permute.xlu0 %1322
    %1324 = vset.pattern.permute.xlu0 8
    %1325 = vperm.xlu0 %1324, %v386
    %v1326 = vpop.permute.xlu0 %1325
    %1327 = vset.pattern.permute.xlu0 8
    %1328 = vperm.xlu0 %1327, %v387
    %v1329 = vpop.permute.xlu0 %1328
    %1330 = vset.pattern.permute.xlu0 8
    %1331 = vperm.xlu0 %1330, %v388
    %v1332 = vpop.permute.xlu0 %1331
    %1333 = vset.pattern.permute.xlu0 8
    %1334 = vperm.xlu0 %1333, %v389
    %v1335 = vpop.permute.xlu0 %1334
    %vm1336 = vcmp.eq.s32.totalorder %v1290, %v391
    %vm1337 = vcmp.eq.s32.totalorder %v1293, %v391
    %vm1338 = vcmp.eq.s32.totalorder %v1296, %v391
    %vm1339 = vcmp.eq.s32.totalorder %v1299, %v391
    %vm1340 = vcmp.eq.s32.totalorder %v1302, %v391
    %vm1341 = vcmp.eq.s32.totalorder %v1305, %v391
    %vm1342 = vcmp.eq.s32.totalorder %v1308, %v391
    %vm1343 = vcmp.eq.s32.totalorder %v1311, %v391
    %vm1344 = vcmp.eq.s32.totalorder %v1314, %v391
    %vm1345 = vcmp.eq.s32.totalorder %v1317, %v391
    %vm1346 = vcmp.eq.s32.totalorder %v1320, %v391
    %vm1347 = vcmp.eq.s32.totalorder %v1323, %v391
    %vm1348 = vcmp.eq.s32.totalorder %v1326, %v391
    %vm1349 = vcmp.eq.s32.totalorder %v1329, %v391
    %vm1350 = vcmp.eq.s32.totalorder %v1332, %v391
    %vm1351 = vcmp.eq.s32.totalorder %v1335, %v391
    %v1352 = vsel %vm1336, 1, 0
    %v1353 = vsel %vm1337, 1, 0
    %v1354 = vsel %vm1338, 1, 0
    %v1355 = vsel %vm1339, 1, 0
    %v1356 = vsel %vm1340, 1, 0
    %v1357 = vsel %vm1341, 1, 0
    %v1358 = vsel %vm1342, 1, 0
    %v1359 = vsel %vm1343, 1, 0
    %v1360 = vsel %vm1344, 1, 0
    %v1361 = vsel %vm1345, 1, 0
    %v1362 = vsel %vm1346, 1, 0
    %v1363 = vsel %vm1347, 1, 0
    %v1364 = vsel %vm1348, 1, 0
    %v1365 = vsel %vm1349, 1, 0
    %v1366 = vsel %vm1350, 1, 0
    %v1367 = vsel %vm1351, 1, 0
    %v1368 = vcvt.s32.f32 %v1352
    %v1369 = vcvt.s32.f32 %v1353
    %v1370 = vcvt.s32.f32 %v1354
    %v1371 = vcvt.s32.f32 %v1355
    %v1372 = vcvt.s32.f32 %v1356
    %v1373 = vcvt.s32.f32 %v1357
    %v1374 = vcvt.s32.f32 %v1358
    %v1375 = vcvt.s32.f32 %v1359
    %v1376 = vcvt.s32.f32 %v1360
    %v1377 = vcvt.s32.f32 %v1361
    %v1378 = vcvt.s32.f32 %v1362
    %v1379 = vcvt.s32.f32 %v1363
    %v1380 = vcvt.s32.f32 %v1364
    %v1381 = vcvt.s32.f32 %v1365
    %v1382 = vcvt.s32.f32 %v1366
    %v1383 = vcvt.s32.f32 %v1367
    %v1384 = vadd.f32 %v1272, %v1368
    %v1385 = vadd.f32 %v1273, %v1369
    %v1386 = vadd.f32 %v1274, %v1370
    %v1387 = vadd.f32 %v1275, %v1371
    %v1388 = vadd.f32 %v1276, %v1372
    %v1389 = vadd.f32 %v1277, %v1373
    %v1390 = vadd.f32 %v1278, %v1374
    %v1391 = vadd.f32 %v1279, %v1375
    %v1392 = vadd.f32 %v1280, %v1376
    %v1393 = vadd.f32 %v1281, %v1377
    %v1394 = vadd.f32 %v1282, %v1378
    %v1395 = vadd.f32 %v1283, %v1379
    %v1396 = vadd.f32 %v1284, %v1380
    %v1397 = vadd.f32 %v1285, %v1381
    %v1398 = vadd.f32 %v1286, %v1382
    %v1399 = vadd.f32 %v1287, %v1383
    %1400 = vset.pattern.permute.xlu0 9
    %1401 = vperm.xlu0 %1400, %v374
    %v1402 = vpop.permute.xlu0 %1401
    %1403 = vset.pattern.permute.xlu0 9
    %1404 = vperm.xlu0 %1403, %v375
    %v1405 = vpop.permute.xlu0 %1404
    %1406 = vset.pattern.permute.xlu0 9
    %1407 = vperm.xlu0 %1406, %v376
    %v1408 = vpop.permute.xlu0 %1407
    %1409 = vset.pattern.permute.xlu0 9
    %1410 = vperm.xlu0 %1409, %v377
    %v1411 = vpop.permute.xlu0 %1410
    %1412 = vset.pattern.permute.xlu0 9
    %1413 = vperm.xlu0 %1412, %v378
    %v1414 = vpop.permute.xlu0 %1413
    %1415 = vset.pattern.permute.xlu0 9
    %1416 = vperm.xlu0 %1415, %v379
    %v1417 = vpop.permute.xlu0 %1416
    %1418 = vset.pattern.permute.xlu0 9
    %1419 = vperm.xlu0 %1418, %v380
    %v1420 = vpop.permute.xlu0 %1419
    %1421 = vset.pattern.permute.xlu0 9
    %1422 = vperm.xlu0 %1421, %v381
    %v1423 = vpop.permute.xlu0 %1422
    %1424 = vset.pattern.permute.xlu0 9
    %1425 = vperm.xlu0 %1424, %v382
    %v1426 = vpop.permute.xlu0 %1425
    %1427 = vset.pattern.permute.xlu0 9
    %1428 = vperm.xlu0 %1427, %v383
    %v1429 = vpop.permute.xlu0 %1428
    %1430 = vset.pattern.permute.xlu0 9
    %1431 = vperm.xlu0 %1430, %v384
    %v1432 = vpop.permute.xlu0 %1431
    %1433 = vset.pattern.permute.xlu0 9
    %1434 = vperm.xlu0 %1433, %v385
    %v1435 = vpop.permute.xlu0 %1434
    %1436 = vset.pattern.permute.xlu0 9
    %1437 = vperm.xlu0 %1436, %v386
    %v1438 = vpop.permute.xlu0 %1437
    %1439 = vset.pattern.permute.xlu0 9
    %1440 = vperm.xlu0 %1439, %v387
    %v1441 = vpop.permute.xlu0 %1440
    %1442 = vset.pattern.permute.xlu0 9
    %1443 = vperm.xlu0 %1442, %v388
    %v1444 = vpop.permute.xlu0 %1443
    %1445 = vset.pattern.permute.xlu0 9
    %1446 = vperm.xlu0 %1445, %v389
    %v1447 = vpop.permute.xlu0 %1446
    %vm1448 = vcmp.eq.s32.totalorder %v1402, %v391
    %vm1449 = vcmp.eq.s32.totalorder %v1405, %v391
    %vm1450 = vcmp.eq.s32.totalorder %v1408, %v391
    %vm1451 = vcmp.eq.s32.totalorder %v1411, %v391
    %vm1452 = vcmp.eq.s32.totalorder %v1414, %v391
    %vm1453 = vcmp.eq.s32.totalorder %v1417, %v391
    %vm1454 = vcmp.eq.s32.totalorder %v1420, %v391
    %vm1455 = vcmp.eq.s32.totalorder %v1423, %v391
    %vm1456 = vcmp.eq.s32.totalorder %v1426, %v391
    %vm1457 = vcmp.eq.s32.totalorder %v1429, %v391
    %vm1458 = vcmp.eq.s32.totalorder %v1432, %v391
    %vm1459 = vcmp.eq.s32.totalorder %v1435, %v391
    %vm1460 = vcmp.eq.s32.totalorder %v1438, %v391
    %vm1461 = vcmp.eq.s32.totalorder %v1441, %v391
    %vm1462 = vcmp.eq.s32.totalorder %v1444, %v391
    %vm1463 = vcmp.eq.s32.totalorder %v1447, %v391
    %v1464 = vsel %vm1448, 1, 0
    %v1465 = vsel %vm1449, 1, 0
    %v1466 = vsel %vm1450, 1, 0
    %v1467 = vsel %vm1451, 1, 0
    %v1468 = vsel %vm1452, 1, 0
    %v1469 = vsel %vm1453, 1, 0
    %v1470 = vsel %vm1454, 1, 0
    %v1471 = vsel %vm1455, 1, 0
    %v1472 = vsel %vm1456, 1, 0
    %v1473 = vsel %vm1457, 1, 0
    %v1474 = vsel %vm1458, 1, 0
    %v1475 = vsel %vm1459, 1, 0
    %v1476 = vsel %vm1460, 1, 0
    %v1477 = vsel %vm1461, 1, 0
    %v1478 = vsel %vm1462, 1, 0
    %v1479 = vsel %vm1463, 1, 0
    %v1480 = vcvt.s32.f32 %v1464
    %v1481 = vcvt.s32.f32 %v1465
    %v1482 = vcvt.s32.f32 %v1466
    %v1483 = vcvt.s32.f32 %v1467
    %v1484 = vcvt.s32.f32 %v1468
    %v1485 = vcvt.s32.f32 %v1469
    %v1486 = vcvt.s32.f32 %v1470
    %v1487 = vcvt.s32.f32 %v1471
    %v1488 = vcvt.s32.f32 %v1472
    %v1489 = vcvt.s32.f32 %v1473
    %v1490 = vcvt.s32.f32 %v1474
    %v1491 = vcvt.s32.f32 %v1475
    %v1492 = vcvt.s32.f32 %v1476
    %v1493 = vcvt.s32.f32 %v1477
    %v1494 = vcvt.s32.f32 %v1478
    %v1495 = vcvt.s32.f32 %v1479
    %v1496 = vadd.f32 %v1384, %v1480
    %v1497 = vadd.f32 %v1385, %v1481
    %v1498 = vadd.f32 %v1386, %v1482
    %v1499 = vadd.f32 %v1387, %v1483
    %v1500 = vadd.f32 %v1388, %v1484
    %v1501 = vadd.f32 %v1389, %v1485
    %v1502 = vadd.f32 %v1390, %v1486
    %v1503 = vadd.f32 %v1391, %v1487
    %v1504 = vadd.f32 %v1392, %v1488
    %v1505 = vadd.f32 %v1393, %v1489
    %v1506 = vadd.f32 %v1394, %v1490
    %v1507 = vadd.f32 %v1395, %v1491
    %v1508 = vadd.f32 %v1396, %v1492
    %v1509 = vadd.f32 %v1397, %v1493
    %v1510 = vadd.f32 %v1398, %v1494
    %v1511 = vadd.f32 %v1399, %v1495
    %1512 = vset.pattern.permute.xlu0 10
    %1513 = vperm.xlu0 %1512, %v374
    %v1514 = vpop.permute.xlu0 %1513
    %1515 = vset.pattern.permute.xlu0 10
    %1516 = vperm.xlu0 %1515, %v375
    %v1517 = vpop.permute.xlu0 %1516
    %1518 = vset.pattern.permute.xlu0 10
    %1519 = vperm.xlu0 %1518, %v376
    %v1520 = vpop.permute.xlu0 %1519
    %1521 = vset.pattern.permute.xlu0 10
    %1522 = vperm.xlu0 %1521, %v377
    %v1523 = vpop.permute.xlu0 %1522
    %1524 = vset.pattern.permute.xlu0 10
    %1525 = vperm.xlu0 %1524, %v378
    %v1526 = vpop.permute.xlu0 %1525
    %1527 = vset.pattern.permute.xlu0 10
    %1528 = vperm.xlu0 %1527, %v379
    %v1529 = vpop.permute.xlu0 %1528
    %1530 = vset.pattern.permute.xlu0 10
    %1531 = vperm.xlu0 %1530, %v380
    %v1532 = vpop.permute.xlu0 %1531
    %1533 = vset.pattern.permute.xlu0 10
    %1534 = vperm.xlu0 %1533, %v381
    %v1535 = vpop.permute.xlu0 %1534
    %1536 = vset.pattern.permute.xlu0 10
    %1537 = vperm.xlu0 %1536, %v382
    %v1538 = vpop.permute.xlu0 %1537
    %1539 = vset.pattern.permute.xlu0 10
    %1540 = vperm.xlu0 %1539, %v383
    %v1541 = vpop.permute.xlu0 %1540
    %1542 = vset.pattern.permute.xlu0 10
    %1543 = vperm.xlu0 %1542, %v384
    %v1544 = vpop.permute.xlu0 %1543
    %1545 = vset.pattern.permute.xlu0 10
    %1546 = vperm.xlu0 %1545, %v385
    %v1547 = vpop.permute.xlu0 %1546
    %1548 = vset.pattern.permute.xlu0 10
    %1549 = vperm.xlu0 %1548, %v386
    %v1550 = vpop.permute.xlu0 %1549
    %1551 = vset.pattern.permute.xlu0 10
    %1552 = vperm.xlu0 %1551, %v387
    %v1553 = vpop.permute.xlu0 %1552
    %1554 = vset.pattern.permute.xlu0 10
    %1555 = vperm.xlu0 %1554, %v388
    %v1556 = vpop.permute.xlu0 %1555
    %1557 = vset.pattern.permute.xlu0 10
    %1558 = vperm.xlu0 %1557, %v389
    %v1559 = vpop.permute.xlu0 %1558
    %vm1560 = vcmp.eq.s32.totalorder %v1514, %v391
    %vm1561 = vcmp.eq.s32.totalorder %v1517, %v391
    %vm1562 = vcmp.eq.s32.totalorder %v1520, %v391
    %vm1563 = vcmp.eq.s32.totalorder %v1523, %v391
    %vm1564 = vcmp.eq.s32.totalorder %v1526, %v391
    %vm1565 = vcmp.eq.s32.totalorder %v1529, %v391
    %vm1566 = vcmp.eq.s32.totalorder %v1532, %v391
    %vm1567 = vcmp.eq.s32.totalorder %v1535, %v391
    %vm1568 = vcmp.eq.s32.totalorder %v1538, %v391
    %vm1569 = vcmp.eq.s32.totalorder %v1541, %v391
    %vm1570 = vcmp.eq.s32.totalorder %v1544, %v391
    %vm1571 = vcmp.eq.s32.totalorder %v1547, %v391
    %vm1572 = vcmp.eq.s32.totalorder %v1550, %v391
    %vm1573 = vcmp.eq.s32.totalorder %v1553, %v391
    %vm1574 = vcmp.eq.s32.totalorder %v1556, %v391
    %vm1575 = vcmp.eq.s32.totalorder %v1559, %v391
    %v1576 = vsel %vm1560, 1, 0
    %v1577 = vsel %vm1561, 1, 0
    %v1578 = vsel %vm1562, 1, 0
    %v1579 = vsel %vm1563, 1, 0
    %v1580 = vsel %vm1564, 1, 0
    %v1581 = vsel %vm1565, 1, 0
    %v1582 = vsel %vm1566, 1, 0
    %v1583 = vsel %vm1567, 1, 0
    %v1584 = vsel %vm1568, 1, 0
    %v1585 = vsel %vm1569, 1, 0
    %v1586 = vsel %vm1570, 1, 0
    %v1587 = vsel %vm1571, 1, 0
    %v1588 = vsel %vm1572, 1, 0
    %v1589 = vsel %vm1573, 1, 0
    %v1590 = vsel %vm1574, 1, 0
    %v1591 = vsel %vm1575, 1, 0
    %v1592 = vcvt.s32.f32 %v1576
    %v1593 = vcvt.s32.f32 %v1577
    %v1594 = vcvt.s32.f32 %v1578
    %v1595 = vcvt.s32.f32 %v1579
    %v1596 = vcvt.s32.f32 %v1580
    %v1597 = vcvt.s32.f32 %v1581
    %v1598 = vcvt.s32.f32 %v1582
    %v1599 = vcvt.s32.f32 %v1583
    %v1600 = vcvt.s32.f32 %v1584
    %v1601 = vcvt.s32.f32 %v1585
    %v1602 = vcvt.s32.f32 %v1586
    %v1603 = vcvt.s32.f32 %v1587
    %v1604 = vcvt.s32.f32 %v1588
    %v1605 = vcvt.s32.f32 %v1589
    %v1606 = vcvt.s32.f32 %v1590
    %v1607 = vcvt.s32.f32 %v1591
    %v1608 = vadd.f32 %v1496, %v1592
    %v1609 = vadd.f32 %v1497, %v1593
    %v1610 = vadd.f32 %v1498, %v1594
    %v1611 = vadd.f32 %v1499, %v1595
    %v1612 = vadd.f32 %v1500, %v1596
    %v1613 = vadd.f32 %v1501, %v1597
    %v1614 = vadd.f32 %v1502, %v1598
    %v1615 = vadd.f32 %v1503, %v1599
    %v1616 = vadd.f32 %v1504, %v1600
    %v1617 = vadd.f32 %v1505, %v1601
    %v1618 = vadd.f32 %v1506, %v1602
    %v1619 = vadd.f32 %v1507, %v1603
    %v1620 = vadd.f32 %v1508, %v1604
    %v1621 = vadd.f32 %v1509, %v1605
    %v1622 = vadd.f32 %v1510, %v1606
    %v1623 = vadd.f32 %v1511, %v1607
    %1624 = vset.pattern.permute.xlu0 11
    %1625 = vperm.xlu0 %1624, %v374
    %v1626 = vpop.permute.xlu0 %1625
    %1627 = vset.pattern.permute.xlu0 11
    %1628 = vperm.xlu0 %1627, %v375
    %v1629 = vpop.permute.xlu0 %1628
    %1630 = vset.pattern.permute.xlu0 11
    %1631 = vperm.xlu0 %1630, %v376
    %v1632 = vpop.permute.xlu0 %1631
    %1633 = vset.pattern.permute.xlu0 11
    %1634 = vperm.xlu0 %1633, %v377
    %v1635 = vpop.permute.xlu0 %1634
    %1636 = vset.pattern.permute.xlu0 11
    %1637 = vperm.xlu0 %1636, %v378
    %v1638 = vpop.permute.xlu0 %1637
    %1639 = vset.pattern.permute.xlu0 11
    %1640 = vperm.xlu0 %1639, %v379
    %v1641 = vpop.permute.xlu0 %1640
    %1642 = vset.pattern.permute.xlu0 11
    %1643 = vperm.xlu0 %1642, %v380
    %v1644 = vpop.permute.xlu0 %1643
    %1645 = vset.pattern.permute.xlu0 11
    %1646 = vperm.xlu0 %1645, %v381
    %v1647 = vpop.permute.xlu0 %1646
    %1648 = vset.pattern.permute.xlu0 11
    %1649 = vperm.xlu0 %1648, %v382
    %v1650 = vpop.permute.xlu0 %1649
    %1651 = vset.pattern.permute.xlu0 11
    %1652 = vperm.xlu0 %1651, %v383
    %v1653 = vpop.permute.xlu0 %1652
    %1654 = vset.pattern.permute.xlu0 11
    %1655 = vperm.xlu0 %1654, %v384
    %v1656 = vpop.permute.xlu0 %1655
    %1657 = vset.pattern.permute.xlu0 11
    %1658 = vperm.xlu0 %1657, %v385
    %v1659 = vpop.permute.xlu0 %1658
    %1660 = vset.pattern.permute.xlu0 11
    %1661 = vperm.xlu0 %1660, %v386
    %v1662 = vpop.permute.xlu0 %1661
    %1663 = vset.pattern.permute.xlu0 11
    %1664 = vperm.xlu0 %1663, %v387
    %v1665 = vpop.permute.xlu0 %1664
    %1666 = vset.pattern.permute.xlu0 11
    %1667 = vperm.xlu0 %1666, %v388
    %v1668 = vpop.permute.xlu0 %1667
    %1669 = vset.pattern.permute.xlu0 11
    %1670 = vperm.xlu0 %1669, %v389
    %v1671 = vpop.permute.xlu0 %1670
    %vm1672 = vcmp.eq.s32.totalorder %v1626, %v391
    %vm1673 = vcmp.eq.s32.totalorder %v1629, %v391
    %vm1674 = vcmp.eq.s32.totalorder %v1632, %v391
    %vm1675 = vcmp.eq.s32.totalorder %v1635, %v391
    %vm1676 = vcmp.eq.s32.totalorder %v1638, %v391
    %vm1677 = vcmp.eq.s32.totalorder %v1641, %v391
    %vm1678 = vcmp.eq.s32.totalorder %v1644, %v391
    %vm1679 = vcmp.eq.s32.totalorder %v1647, %v391
    %vm1680 = vcmp.eq.s32.totalorder %v1650, %v391
    %vm1681 = vcmp.eq.s32.totalorder %v1653, %v391
    %vm1682 = vcmp.eq.s32.totalorder %v1656, %v391
    %vm1683 = vcmp.eq.s32.totalorder %v1659, %v391
    %vm1684 = vcmp.eq.s32.totalorder %v1662, %v391
    %vm1685 = vcmp.eq.s32.totalorder %v1665, %v391
    %vm1686 = vcmp.eq.s32.totalorder %v1668, %v391
    %vm1687 = vcmp.eq.s32.totalorder %v1671, %v391
    %v1688 = vsel %vm1672, 1, 0
    %v1689 = vsel %vm1673, 1, 0
    %v1690 = vsel %vm1674, 1, 0
    %v1691 = vsel %vm1675, 1, 0
    %v1692 = vsel %vm1676, 1, 0
    %v1693 = vsel %vm1677, 1, 0
    %v1694 = vsel %vm1678, 1, 0
    %v1695 = vsel %vm1679, 1, 0
    %v1696 = vsel %vm1680, 1, 0
    %v1697 = vsel %vm1681, 1, 0
    %v1698 = vsel %vm1682, 1, 0
    %v1699 = vsel %vm1683, 1, 0
    %v1700 = vsel %vm1684, 1, 0
    %v1701 = vsel %vm1685, 1, 0
    %v1702 = vsel %vm1686, 1, 0
    %v1703 = vsel %vm1687, 1, 0
    %v1704 = vcvt.s32.f32 %v1688
    %v1705 = vcvt.s32.f32 %v1689
    %v1706 = vcvt.s32.f32 %v1690
    %v1707 = vcvt.s32.f32 %v1691
    %v1708 = vcvt.s32.f32 %v1692
    %v1709 = vcvt.s32.f32 %v1693
    %v1710 = vcvt.s32.f32 %v1694
    %v1711 = vcvt.s32.f32 %v1695
    %v1712 = vcvt.s32.f32 %v1696
    %v1713 = vcvt.s32.f32 %v1697
    %v1714 = vcvt.s32.f32 %v1698
    %v1715 = vcvt.s32.f32 %v1699
    %v1716 = vcvt.s32.f32 %v1700
    %v1717 = vcvt.s32.f32 %v1701
    %v1718 = vcvt.s32.f32 %v1702
    %v1719 = vcvt.s32.f32 %v1703
    %v1720 = vadd.f32 %v1608, %v1704
    %v1721 = vadd.f32 %v1609, %v1705
    %v1722 = vadd.f32 %v1610, %v1706
    %v1723 = vadd.f32 %v1611, %v1707
    %v1724 = vadd.f32 %v1612, %v1708
    %v1725 = vadd.f32 %v1613, %v1709
    %v1726 = vadd.f32 %v1614, %v1710
    %v1727 = vadd.f32 %v1615, %v1711
    %v1728 = vadd.f32 %v1616, %v1712
    %v1729 = vadd.f32 %v1617, %v1713
    %v1730 = vadd.f32 %v1618, %v1714
    %v1731 = vadd.f32 %v1619, %v1715
    %v1732 = vadd.f32 %v1620, %v1716
    %v1733 = vadd.f32 %v1621, %v1717
    %v1734 = vadd.f32 %v1622, %v1718
    %v1735 = vadd.f32 %v1623, %v1719
    %1736 = vset.pattern.permute.xlu0 12
    %1737 = vperm.xlu0 %1736, %v374
    %v1738 = vpop.permute.xlu0 %1737
    %1739 = vset.pattern.permute.xlu0 12
    %1740 = vperm.xlu0 %1739, %v375
    %v1741 = vpop.permute.xlu0 %1740
    %1742 = vset.pattern.permute.xlu0 12
    %1743 = vperm.xlu0 %1742, %v376
    %v1744 = vpop.permute.xlu0 %1743
    %1745 = vset.pattern.permute.xlu0 12
    %1746 = vperm.xlu0 %1745, %v377
    %v1747 = vpop.permute.xlu0 %1746
    %1748 = vset.pattern.permute.xlu0 12
    %1749 = vperm.xlu0 %1748, %v378
    %v1750 = vpop.permute.xlu0 %1749
    %1751 = vset.pattern.permute.xlu0 12
    %1752 = vperm.xlu0 %1751, %v379
    %v1753 = vpop.permute.xlu0 %1752
    %1754 = vset.pattern.permute.xlu0 12
    %1755 = vperm.xlu0 %1754, %v380
    %v1756 = vpop.permute.xlu0 %1755
    %1757 = vset.pattern.permute.xlu0 12
    %1758 = vperm.xlu0 %1757, %v381
    %v1759 = vpop.permute.xlu0 %1758
    %1760 = vset.pattern.permute.xlu0 12
    %1761 = vperm.xlu0 %1760, %v382
    %v1762 = vpop.permute.xlu0 %1761
    %1763 = vset.pattern.permute.xlu0 12
    %1764 = vperm.xlu0 %1763, %v383
    %v1765 = vpop.permute.xlu0 %1764
    %1766 = vset.pattern.permute.xlu0 12
    %1767 = vperm.xlu0 %1766, %v384
    %v1768 = vpop.permute.xlu0 %1767
    %1769 = vset.pattern.permute.xlu0 12
    %1770 = vperm.xlu0 %1769, %v385
    %v1771 = vpop.permute.xlu0 %1770
    %1772 = vset.pattern.permute.xlu0 12
    %1773 = vperm.xlu0 %1772, %v386
    %v1774 = vpop.permute.xlu0 %1773
    %1775 = vset.pattern.permute.xlu0 12
    %1776 = vperm.xlu0 %1775, %v387
    %v1777 = vpop.permute.xlu0 %1776
    %1778 = vset.pattern.permute.xlu0 12
    %1779 = vperm.xlu0 %1778, %v388
    %v1780 = vpop.permute.xlu0 %1779
    %1781 = vset.pattern.permute.xlu0 12
    %1782 = vperm.xlu0 %1781, %v389
    %v1783 = vpop.permute.xlu0 %1782
    %vm1784 = vcmp.eq.s32.totalorder %v1738, %v391
    %vm1785 = vcmp.eq.s32.totalorder %v1741, %v391
    %vm1786 = vcmp.eq.s32.totalorder %v1744, %v391
    %vm1787 = vcmp.eq.s32.totalorder %v1747, %v391
    %vm1788 = vcmp.eq.s32.totalorder %v1750, %v391
    %vm1789 = vcmp.eq.s32.totalorder %v1753, %v391
    %vm1790 = vcmp.eq.s32.totalorder %v1756, %v391
    %vm1791 = vcmp.eq.s32.totalorder %v1759, %v391
    %vm1792 = vcmp.eq.s32.totalorder %v1762, %v391
    %vm1793 = vcmp.eq.s32.totalorder %v1765, %v391
    %vm1794 = vcmp.eq.s32.totalorder %v1768, %v391
    %vm1795 = vcmp.eq.s32.totalorder %v1771, %v391
    %vm1796 = vcmp.eq.s32.totalorder %v1774, %v391
    %vm1797 = vcmp.eq.s32.totalorder %v1777, %v391
    %vm1798 = vcmp.eq.s32.totalorder %v1780, %v391
    %vm1799 = vcmp.eq.s32.totalorder %v1783, %v391
    %v1800 = vsel %vm1784, 1, 0
    %v1801 = vsel %vm1785, 1, 0
    %v1802 = vsel %vm1786, 1, 0
    %v1803 = vsel %vm1787, 1, 0
    %v1804 = vsel %vm1788, 1, 0
    %v1805 = vsel %vm1789, 1, 0
    %v1806 = vsel %vm1790, 1, 0
    %v1807 = vsel %vm1791, 1, 0
    %v1808 = vsel %vm1792, 1, 0
    %v1809 = vsel %vm1793, 1, 0
    %v1810 = vsel %vm1794, 1, 0
    %v1811 = vsel %vm1795, 1, 0
    %v1812 = vsel %vm1796, 1, 0
    %v1813 = vsel %vm1797, 1, 0
    %v1814 = vsel %vm1798, 1, 0
    %v1815 = vsel %vm1799, 1, 0
    %v1816 = vcvt.s32.f32 %v1800
    %v1817 = vcvt.s32.f32 %v1801
    %v1818 = vcvt.s32.f32 %v1802
    %v1819 = vcvt.s32.f32 %v1803
    %v1820 = vcvt.s32.f32 %v1804
    %v1821 = vcvt.s32.f32 %v1805
    %v1822 = vcvt.s32.f32 %v1806
    %v1823 = vcvt.s32.f32 %v1807
    %v1824 = vcvt.s32.f32 %v1808
    %v1825 = vcvt.s32.f32 %v1809
    %v1826 = vcvt.s32.f32 %v1810
    %v1827 = vcvt.s32.f32 %v1811
    %v1828 = vcvt.s32.f32 %v1812
    %v1829 = vcvt.s32.f32 %v1813
    %v1830 = vcvt.s32.f32 %v1814
    %v1831 = vcvt.s32.f32 %v1815
    %v1832 = vadd.f32 %v1720, %v1816
    %v1833 = vadd.f32 %v1721, %v1817
    %v1834 = vadd.f32 %v1722, %v1818
    %v1835 = vadd.f32 %v1723, %v1819
    %v1836 = vadd.f32 %v1724, %v1820
    %v1837 = vadd.f32 %v1725, %v1821
    %v1838 = vadd.f32 %v1726, %v1822
    %v1839 = vadd.f32 %v1727, %v1823
    %v1840 = vadd.f32 %v1728, %v1824
    %v1841 = vadd.f32 %v1729, %v1825
    %v1842 = vadd.f32 %v1730, %v1826
    %v1843 = vadd.f32 %v1731, %v1827
    %v1844 = vadd.f32 %v1732, %v1828
    %v1845 = vadd.f32 %v1733, %v1829
    %v1846 = vadd.f32 %v1734, %v1830
    %v1847 = vadd.f32 %v1735, %v1831
    %1848 = vset.pattern.permute.xlu0 13
    %1849 = vperm.xlu0 %1848, %v374
    %v1850 = vpop.permute.xlu0 %1849
    %1851 = vset.pattern.permute.xlu0 13
    %1852 = vperm.xlu0 %1851, %v375
    %v1853 = vpop.permute.xlu0 %1852
    %1854 = vset.pattern.permute.xlu0 13
    %1855 = vperm.xlu0 %1854, %v376
    %v1856 = vpop.permute.xlu0 %1855
    %1857 = vset.pattern.permute.xlu0 13
    %1858 = vperm.xlu0 %1857, %v377
    %v1859 = vpop.permute.xlu0 %1858
    %1860 = vset.pattern.permute.xlu0 13
    %1861 = vperm.xlu0 %1860, %v378
    %v1862 = vpop.permute.xlu0 %1861
    %1863 = vset.pattern.permute.xlu0 13
    %1864 = vperm.xlu0 %1863, %v379
    %v1865 = vpop.permute.xlu0 %1864
    %1866 = vset.pattern.permute.xlu0 13
    %1867 = vperm.xlu0 %1866, %v380
    %v1868 = vpop.permute.xlu0 %1867
    %1869 = vset.pattern.permute.xlu0 13
    %1870 = vperm.xlu0 %1869, %v381
    %v1871 = vpop.permute.xlu0 %1870
    %1872 = vset.pattern.permute.xlu0 13
    %1873 = vperm.xlu0 %1872, %v382
    %v1874 = vpop.permute.xlu0 %1873
    %1875 = vset.pattern.permute.xlu0 13
    %1876 = vperm.xlu0 %1875, %v383
    %v1877 = vpop.permute.xlu0 %1876
    %1878 = vset.pattern.permute.xlu0 13
    %1879 = vperm.xlu0 %1878, %v384
    %v1880 = vpop.permute.xlu0 %1879
    %1881 = vset.pattern.permute.xlu0 13
    %1882 = vperm.xlu0 %1881, %v385
    %v1883 = vpop.permute.xlu0 %1882
    %1884 = vset.pattern.permute.xlu0 13
    %1885 = vperm.xlu0 %1884, %v386
    %v1886 = vpop.permute.xlu0 %1885
    %1887 = vset.pattern.permute.xlu0 13
    %1888 = vperm.xlu0 %1887, %v387
    %v1889 = vpop.permute.xlu0 %1888
    %1890 = vset.pattern.permute.xlu0 13
    %1891 = vperm.xlu0 %1890, %v388
    %v1892 = vpop.permute.xlu0 %1891
    %1893 = vset.pattern.permute.xlu0 13
    %1894 = vperm.xlu0 %1893, %v389
    %v1895 = vpop.permute.xlu0 %1894
    %vm1896 = vcmp.eq.s32.totalorder %v1850, %v391
    %vm1897 = vcmp.eq.s32.totalorder %v1853, %v391
    %vm1898 = vcmp.eq.s32.totalorder %v1856, %v391
    %vm1899 = vcmp.eq.s32.totalorder %v1859, %v391
    %vm1900 = vcmp.eq.s32.totalorder %v1862, %v391
    %vm1901 = vcmp.eq.s32.totalorder %v1865, %v391
    %vm1902 = vcmp.eq.s32.totalorder %v1868, %v391
    %vm1903 = vcmp.eq.s32.totalorder %v1871, %v391
    %vm1904 = vcmp.eq.s32.totalorder %v1874, %v391
    %vm1905 = vcmp.eq.s32.totalorder %v1877, %v391
    %vm1906 = vcmp.eq.s32.totalorder %v1880, %v391
    %vm1907 = vcmp.eq.s32.totalorder %v1883, %v391
    %vm1908 = vcmp.eq.s32.totalorder %v1886, %v391
    %vm1909 = vcmp.eq.s32.totalorder %v1889, %v391
    %vm1910 = vcmp.eq.s32.totalorder %v1892, %v391
    %vm1911 = vcmp.eq.s32.totalorder %v1895, %v391
    %v1912 = vsel %vm1896, 1, 0
    %v1913 = vsel %vm1897, 1, 0
    %v1914 = vsel %vm1898, 1, 0
    %v1915 = vsel %vm1899, 1, 0
    %v1916 = vsel %vm1900, 1, 0
    %v1917 = vsel %vm1901, 1, 0
    %v1918 = vsel %vm1902, 1, 0
    %v1919 = vsel %vm1903, 1, 0
    %v1920 = vsel %vm1904, 1, 0
    %v1921 = vsel %vm1905, 1, 0
    %v1922 = vsel %vm1906, 1, 0
    %v1923 = vsel %vm1907, 1, 0
    %v1924 = vsel %vm1908, 1, 0
    %v1925 = vsel %vm1909, 1, 0
    %v1926 = vsel %vm1910, 1, 0
    %v1927 = vsel %vm1911, 1, 0
    %v1928 = vcvt.s32.f32 %v1912
    %v1929 = vcvt.s32.f32 %v1913
    %v1930 = vcvt.s32.f32 %v1914
    %v1931 = vcvt.s32.f32 %v1915
    %v1932 = vcvt.s32.f32 %v1916
    %v1933 = vcvt.s32.f32 %v1917
    %v1934 = vcvt.s32.f32 %v1918
    %v1935 = vcvt.s32.f32 %v1919
    %v1936 = vcvt.s32.f32 %v1920
    %v1937 = vcvt.s32.f32 %v1921
    %v1938 = vcvt.s32.f32 %v1922
    %v1939 = vcvt.s32.f32 %v1923
    %v1940 = vcvt.s32.f32 %v1924
    %v1941 = vcvt.s32.f32 %v1925
    %v1942 = vcvt.s32.f32 %v1926
    %v1943 = vcvt.s32.f32 %v1927
    %v1944 = vadd.f32 %v1832, %v1928
    %v1945 = vadd.f32 %v1833, %v1929
    %v1946 = vadd.f32 %v1834, %v1930
    %v1947 = vadd.f32 %v1835, %v1931
    %v1948 = vadd.f32 %v1836, %v1932
    %v1949 = vadd.f32 %v1837, %v1933
    %v1950 = vadd.f32 %v1838, %v1934
    %v1951 = vadd.f32 %v1839, %v1935
    %v1952 = vadd.f32 %v1840, %v1936
    %v1953 = vadd.f32 %v1841, %v1937
    %v1954 = vadd.f32 %v1842, %v1938
    %v1955 = vadd.f32 %v1843, %v1939
    %v1956 = vadd.f32 %v1844, %v1940
    %v1957 = vadd.f32 %v1845, %v1941
    %v1958 = vadd.f32 %v1846, %v1942
    %v1959 = vadd.f32 %v1847, %v1943
    %1960 = vset.pattern.permute.xlu0 14
    %1961 = vperm.xlu0 %1960, %v374
    %v1962 = vpop.permute.xlu0 %1961
    %1963 = vset.pattern.permute.xlu0 14
    %1964 = vperm.xlu0 %1963, %v375
    %v1965 = vpop.permute.xlu0 %1964
    %1966 = vset.pattern.permute.xlu0 14
    %1967 = vperm.xlu0 %1966, %v376
    %v1968 = vpop.permute.xlu0 %1967
    %1969 = vset.pattern.permute.xlu0 14
    %1970 = vperm.xlu0 %1969, %v377
    %v1971 = vpop.permute.xlu0 %1970
    %1972 = vset.pattern.permute.xlu0 14
    %1973 = vperm.xlu0 %1972, %v378
    %v1974 = vpop.permute.xlu0 %1973
    %1975 = vset.pattern.permute.xlu0 14
    %1976 = vperm.xlu0 %1975, %v379
    %v1977 = vpop.permute.xlu0 %1976
    %1978 = vset.pattern.permute.xlu0 14
    %1979 = vperm.xlu0 %1978, %v380
    %v1980 = vpop.permute.xlu0 %1979
    %1981 = vset.pattern.permute.xlu0 14
    %1982 = vperm.xlu0 %1981, %v381
    %v1983 = vpop.permute.xlu0 %1982
    %1984 = vset.pattern.permute.xlu0 14
    %1985 = vperm.xlu0 %1984, %v382
    %v1986 = vpop.permute.xlu0 %1985
    %1987 = vset.pattern.permute.xlu0 14
    %1988 = vperm.xlu0 %1987, %v383
    %v1989 = vpop.permute.xlu0 %1988
    %1990 = vset.pattern.permute.xlu0 14
    %1991 = vperm.xlu0 %1990, %v384
    %v1992 = vpop.permute.xlu0 %1991
    %1993 = vset.pattern.permute.xlu0 14
    %1994 = vperm.xlu0 %1993, %v385
    %v1995 = vpop.permute.xlu0 %1994
    %1996 = vset.pattern.permute.xlu0 14
    %1997 = vperm.xlu0 %1996, %v386
    %v1998 = vpop.permute.xlu0 %1997
    %1999 = vset.pattern.permute.xlu0 14
    %2000 = vperm.xlu0 %1999, %v387
    %v2001 = vpop.permute.xlu0 %2000
    %2002 = vset.pattern.permute.xlu0 14
    %2003 = vperm.xlu0 %2002, %v388
    %v2004 = vpop.permute.xlu0 %2003
    %2005 = vset.pattern.permute.xlu0 14
    %2006 = vperm.xlu0 %2005, %v389
    %v2007 = vpop.permute.xlu0 %2006
    %vm2008 = vcmp.eq.s32.totalorder %v1962, %v391
    %vm2009 = vcmp.eq.s32.totalorder %v1965, %v391
    %vm2010 = vcmp.eq.s32.totalorder %v1968, %v391
    %vm2011 = vcmp.eq.s32.totalorder %v1971, %v391
    %vm2012 = vcmp.eq.s32.totalorder %v1974, %v391
    %vm2013 = vcmp.eq.s32.totalorder %v1977, %v391
    %vm2014 = vcmp.eq.s32.totalorder %v1980, %v391
    %vm2015 = vcmp.eq.s32.totalorder %v1983, %v391
    %vm2016 = vcmp.eq.s32.totalorder %v1986, %v391
    %vm2017 = vcmp.eq.s32.totalorder %v1989, %v391
    %vm2018 = vcmp.eq.s32.totalorder %v1992, %v391
    %vm2019 = vcmp.eq.s32.totalorder %v1995, %v391
    %vm2020 = vcmp.eq.s32.totalorder %v1998, %v391
    %vm2021 = vcmp.eq.s32.totalorder %v2001, %v391
    %vm2022 = vcmp.eq.s32.totalorder %v2004, %v391
    %vm2023 = vcmp.eq.s32.totalorder %v2007, %v391
    %v2024 = vsel %vm2008, 1, 0
    %v2025 = vsel %vm2009, 1, 0
    %v2026 = vsel %vm2010, 1, 0
    %v2027 = vsel %vm2011, 1, 0
    %v2028 = vsel %vm2012, 1, 0
    %v2029 = vsel %vm2013, 1, 0
    %v2030 = vsel %vm2014, 1, 0
    %v2031 = vsel %vm2015, 1, 0
    %v2032 = vsel %vm2016, 1, 0
    %v2033 = vsel %vm2017, 1, 0
    %v2034 = vsel %vm2018, 1, 0
    %v2035 = vsel %vm2019, 1, 0
    %v2036 = vsel %vm2020, 1, 0
    %v2037 = vsel %vm2021, 1, 0
    %v2038 = vsel %vm2022, 1, 0
    %v2039 = vsel %vm2023, 1, 0
    %v2040 = vcvt.s32.f32 %v2024
    %v2041 = vcvt.s32.f32 %v2025
    %v2042 = vcvt.s32.f32 %v2026
    %v2043 = vcvt.s32.f32 %v2027
    %v2044 = vcvt.s32.f32 %v2028
    %v2045 = vcvt.s32.f32 %v2029
    %v2046 = vcvt.s32.f32 %v2030
    %v2047 = vcvt.s32.f32 %v2031
    %v2048 = vcvt.s32.f32 %v2032
    %v2049 = vcvt.s32.f32 %v2033
    %v2050 = vcvt.s32.f32 %v2034
    %v2051 = vcvt.s32.f32 %v2035
    %v2052 = vcvt.s32.f32 %v2036
    %v2053 = vcvt.s32.f32 %v2037
    %v2054 = vcvt.s32.f32 %v2038
    %v2055 = vcvt.s32.f32 %v2039
    %v2056 = vadd.f32 %v1944, %v2040
    %v2057 = vadd.f32 %v1945, %v2041
    %v2058 = vadd.f32 %v1946, %v2042
    %v2059 = vadd.f32 %v1947, %v2043
    %v2060 = vadd.f32 %v1948, %v2044
    %v2061 = vadd.f32 %v1949, %v2045
    %v2062 = vadd.f32 %v1950, %v2046
    %v2063 = vadd.f32 %v1951, %v2047
    %v2064 = vadd.f32 %v1952, %v2048
    %v2065 = vadd.f32 %v1953, %v2049
    %v2066 = vadd.f32 %v1954, %v2050
    %v2067 = vadd.f32 %v1955, %v2051
    %v2068 = vadd.f32 %v1956, %v2052
    %v2069 = vadd.f32 %v1957, %v2053
    %v2070 = vadd.f32 %v1958, %v2054
    %v2071 = vadd.f32 %v1959, %v2055
    %2072 = vset.pattern.permute.xlu0 15
    %2073 = vperm.xlu0 %2072, %v374
    %v2074 = vpop.permute.xlu0 %2073
    %2075 = vset.pattern.permute.xlu0 15
    %2076 = vperm.xlu0 %2075, %v375
    %v2077 = vpop.permute.xlu0 %2076
    %2078 = vset.pattern.permute.xlu0 15
    %2079 = vperm.xlu0 %2078, %v376
    %v2080 = vpop.permute.xlu0 %2079
    %2081 = vset.pattern.permute.xlu0 15
    %2082 = vperm.xlu0 %2081, %v377
    %v2083 = vpop.permute.xlu0 %2082
    %2084 = vset.pattern.permute.xlu0 15
    %2085 = vperm.xlu0 %2084, %v378
    %v2086 = vpop.permute.xlu0 %2085
    %2087 = vset.pattern.permute.xlu0 15
    %2088 = vperm.xlu0 %2087, %v379
    %v2089 = vpop.permute.xlu0 %2088
    %2090 = vset.pattern.permute.xlu0 15
    %2091 = vperm.xlu0 %2090, %v380
    %v2092 = vpop.permute.xlu0 %2091
    %2093 = vset.pattern.permute.xlu0 15
    %2094 = vperm.xlu0 %2093, %v381
    %v2095 = vpop.permute.xlu0 %2094
    %2096 = vset.pattern.permute.xlu0 15
    %2097 = vperm.xlu0 %2096, %v382
    %v2098 = vpop.permute.xlu0 %2097
    %2099 = vset.pattern.permute.xlu0 15
    %2100 = vperm.xlu0 %2099, %v383
    %v2101 = vpop.permute.xlu0 %2100
    %2102 = vset.pattern.permute.xlu0 15
    %2103 = vperm.xlu0 %2102, %v384
    %v2104 = vpop.permute.xlu0 %2103
    %2105 = vset.pattern.permute.xlu0 15
    %2106 = vperm.xlu0 %2105, %v385
    %v2107 = vpop.permute.xlu0 %2106
    %2108 = vset.pattern.permute.xlu0 15
    %2109 = vperm.xlu0 %2108, %v386
    %v2110 = vpop.permute.xlu0 %2109
    %2111 = vset.pattern.permute.xlu0 15
    %2112 = vperm.xlu0 %2111, %v387
    %v2113 = vpop.permute.xlu0 %2112
    %2114 = vset.pattern.permute.xlu0 15
    %2115 = vperm.xlu0 %2114, %v388
    %v2116 = vpop.permute.xlu0 %2115
    %2117 = vset.pattern.permute.xlu0 15
    %2118 = vperm.xlu0 %2117, %v389
    %v2119 = vpop.permute.xlu0 %2118
    %vm2120 = vcmp.eq.s32.totalorder %v2074, %v391
    %vm2121 = vcmp.eq.s32.totalorder %v2077, %v391
    %vm2122 = vcmp.eq.s32.totalorder %v2080, %v391
    %vm2123 = vcmp.eq.s32.totalorder %v2083, %v391
    %vm2124 = vcmp.eq.s32.totalorder %v2086, %v391
    %vm2125 = vcmp.eq.s32.totalorder %v2089, %v391
    %vm2126 = vcmp.eq.s32.totalorder %v2092, %v391
    %vm2127 = vcmp.eq.s32.totalorder %v2095, %v391
    %vm2128 = vcmp.eq.s32.totalorder %v2098, %v391
    %vm2129 = vcmp.eq.s32.totalorder %v2101, %v391
    %vm2130 = vcmp.eq.s32.totalorder %v2104, %v391
    %vm2131 = vcmp.eq.s32.totalorder %v2107, %v391
    %vm2132 = vcmp.eq.s32.totalorder %v2110, %v391
    %vm2133 = vcmp.eq.s32.totalorder %v2113, %v391
    %vm2134 = vcmp.eq.s32.totalorder %v2116, %v391
    %vm2135 = vcmp.eq.s32.totalorder %v2119, %v391
    %v2136 = vsel %vm2120, 1, 0
    %v2137 = vsel %vm2121, 1, 0
    %v2138 = vsel %vm2122, 1, 0
    %v2139 = vsel %vm2123, 1, 0
    %v2140 = vsel %vm2124, 1, 0
    %v2141 = vsel %vm2125, 1, 0
    %v2142 = vsel %vm2126, 1, 0
    %v2143 = vsel %vm2127, 1, 0
    %v2144 = vsel %vm2128, 1, 0
    %v2145 = vsel %vm2129, 1, 0
    %v2146 = vsel %vm2130, 1, 0
    %v2147 = vsel %vm2131, 1, 0
    %v2148 = vsel %vm2132, 1, 0
    %v2149 = vsel %vm2133, 1, 0
    %v2150 = vsel %vm2134, 1, 0
    %v2151 = vsel %vm2135, 1, 0
    %v2152 = vcvt.s32.f32 %v2136
    %v2153 = vcvt.s32.f32 %v2137
    %v2154 = vcvt.s32.f32 %v2138
    %v2155 = vcvt.s32.f32 %v2139
    %v2156 = vcvt.s32.f32 %v2140
    %v2157 = vcvt.s32.f32 %v2141
    %v2158 = vcvt.s32.f32 %v2142
    %v2159 = vcvt.s32.f32 %v2143
    %v2160 = vcvt.s32.f32 %v2144
    %v2161 = vcvt.s32.f32 %v2145
    %v2162 = vcvt.s32.f32 %v2146
    %v2163 = vcvt.s32.f32 %v2147
    %v2164 = vcvt.s32.f32 %v2148
    %v2165 = vcvt.s32.f32 %v2149
    %v2166 = vcvt.s32.f32 %v2150
    %v2167 = vcvt.s32.f32 %v2151
    %v2168 = vadd.f32 %v2056, %v2152
    %v2169 = vadd.f32 %v2057, %v2153
    %v2170 = vadd.f32 %v2058, %v2154
    %v2171 = vadd.f32 %v2059, %v2155
    %v2172 = vadd.f32 %v2060, %v2156
    %v2173 = vadd.f32 %v2061, %v2157
    %v2174 = vadd.f32 %v2062, %v2158
    %v2175 = vadd.f32 %v2063, %v2159
    %v2176 = vadd.f32 %v2064, %v2160
    %v2177 = vadd.f32 %v2065, %v2161
    %v2178 = vadd.f32 %v2066, %v2162
    %v2179 = vadd.f32 %v2067, %v2163
    %v2180 = vadd.f32 %v2068, %v2164
    %v2181 = vadd.f32 %v2069, %v2165
    %v2182 = vadd.f32 %v2070, %v2166
    %v2183 = vadd.f32 %v2071, %v2167
    %2184 = vset.pattern.permute.xlu0 16
    %2185 = vperm.xlu0 %2184, %v374
    %v2186 = vpop.permute.xlu0 %2185
    %2187 = vset.pattern.permute.xlu0 16
    %2188 = vperm.xlu0 %2187, %v375
    %v2189 = vpop.permute.xlu0 %2188
    %2190 = vset.pattern.permute.xlu0 16
    %2191 = vperm.xlu0 %2190, %v376
    %v2192 = vpop.permute.xlu0 %2191
    %2193 = vset.pattern.permute.xlu0 16
    %2194 = vperm.xlu0 %2193, %v377
    %v2195 = vpop.permute.xlu0 %2194
    %2196 = vset.pattern.permute.xlu0 16
    %2197 = vperm.xlu0 %2196, %v378
    %v2198 = vpop.permute.xlu0 %2197
    %2199 = vset.pattern.permute.xlu0 16
    %2200 = vperm.xlu0 %2199, %v379
    %v2201 = vpop.permute.xlu0 %2200
    %2202 = vset.pattern.permute.xlu0 16
    %2203 = vperm.xlu0 %2202, %v380
    %v2204 = vpop.permute.xlu0 %2203
    %2205 = vset.pattern.permute.xlu0 16
    %2206 = vperm.xlu0 %2205, %v381
    %v2207 = vpop.permute.xlu0 %2206
    %2208 = vset.pattern.permute.xlu0 16
    %2209 = vperm.xlu0 %2208, %v382
    %v2210 = vpop.permute.xlu0 %2209
    %2211 = vset.pattern.permute.xlu0 16
    %2212 = vperm.xlu0 %2211, %v383
    %v2213 = vpop.permute.xlu0 %2212
    %2214 = vset.pattern.permute.xlu0 16
    %2215 = vperm.xlu0 %2214, %v384
    %v2216 = vpop.permute.xlu0 %2215
    %2217 = vset.pattern.permute.xlu0 16
    %2218 = vperm.xlu0 %2217, %v385
    %v2219 = vpop.permute.xlu0 %2218
    %2220 = vset.pattern.permute.xlu0 16
    %2221 = vperm.xlu0 %2220, %v386
    %v2222 = vpop.permute.xlu0 %2221
    %2223 = vset.pattern.permute.xlu0 16
    %2224 = vperm.xlu0 %2223, %v387
    %v2225 = vpop.permute.xlu0 %2224
    %2226 = vset.pattern.permute.xlu0 16
    %2227 = vperm.xlu0 %2226, %v388
    %v2228 = vpop.permute.xlu0 %2227
    %2229 = vset.pattern.permute.xlu0 16
    %2230 = vperm.xlu0 %2229, %v389
    %v2231 = vpop.permute.xlu0 %2230
    %vm2232 = vcmp.eq.s32.totalorder %v2186, %v391
    %vm2233 = vcmp.eq.s32.totalorder %v2189, %v391
    %vm2234 = vcmp.eq.s32.totalorder %v2192, %v391
    %vm2235 = vcmp.eq.s32.totalorder %v2195, %v391
    %vm2236 = vcmp.eq.s32.totalorder %v2198, %v391
    %vm2237 = vcmp.eq.s32.totalorder %v2201, %v391
    %vm2238 = vcmp.eq.s32.totalorder %v2204, %v391
    %vm2239 = vcmp.eq.s32.totalorder %v2207, %v391
    %vm2240 = vcmp.eq.s32.totalorder %v2210, %v391
    %vm2241 = vcmp.eq.s32.totalorder %v2213, %v391
    %vm2242 = vcmp.eq.s32.totalorder %v2216, %v391
    %vm2243 = vcmp.eq.s32.totalorder %v2219, %v391
    %vm2244 = vcmp.eq.s32.totalorder %v2222, %v391
    %vm2245 = vcmp.eq.s32.totalorder %v2225, %v391
    %vm2246 = vcmp.eq.s32.totalorder %v2228, %v391
    %vm2247 = vcmp.eq.s32.totalorder %v2231, %v391
    %v2248 = vsel %vm2232, 1, 0
    %v2249 = vsel %vm2233, 1, 0
    %v2250 = vsel %vm2234, 1, 0
    %v2251 = vsel %vm2235, 1, 0
    %v2252 = vsel %vm2236, 1, 0
    %v2253 = vsel %vm2237, 1, 0
    %v2254 = vsel %vm2238, 1, 0
    %v2255 = vsel %vm2239, 1, 0
    %v2256 = vsel %vm2240, 1, 0
    %v2257 = vsel %vm2241, 1, 0
    %v2258 = vsel %vm2242, 1, 0
    %v2259 = vsel %vm2243, 1, 0
    %v2260 = vsel %vm2244, 1, 0
    %v2261 = vsel %vm2245, 1, 0
    %v2262 = vsel %vm2246, 1, 0
    %v2263 = vsel %vm2247, 1, 0
    %v2264 = vcvt.s32.f32 %v2248
    %v2265 = vcvt.s32.f32 %v2249
    %v2266 = vcvt.s32.f32 %v2250
    %v2267 = vcvt.s32.f32 %v2251
    %v2268 = vcvt.s32.f32 %v2252
    %v2269 = vcvt.s32.f32 %v2253
    %v2270 = vcvt.s32.f32 %v2254
    %v2271 = vcvt.s32.f32 %v2255
    %v2272 = vcvt.s32.f32 %v2256
    %v2273 = vcvt.s32.f32 %v2257
    %v2274 = vcvt.s32.f32 %v2258
    %v2275 = vcvt.s32.f32 %v2259
    %v2276 = vcvt.s32.f32 %v2260
    %v2277 = vcvt.s32.f32 %v2261
    %v2278 = vcvt.s32.f32 %v2262
    %v2279 = vcvt.s32.f32 %v2263
    %v2280 = vadd.f32 %v2168, %v2264
    %v2281 = vadd.f32 %v2169, %v2265
    %v2282 = vadd.f32 %v2170, %v2266
    %v2283 = vadd.f32 %v2171, %v2267
    %v2284 = vadd.f32 %v2172, %v2268
    %v2285 = vadd.f32 %v2173, %v2269
    %v2286 = vadd.f32 %v2174, %v2270
    %v2287 = vadd.f32 %v2175, %v2271
    %v2288 = vadd.f32 %v2176, %v2272
    %v2289 = vadd.f32 %v2177, %v2273
    %v2290 = vadd.f32 %v2178, %v2274
    %v2291 = vadd.f32 %v2179, %v2275
    %v2292 = vadd.f32 %v2180, %v2276
    %v2293 = vadd.f32 %v2181, %v2277
    %v2294 = vadd.f32 %v2182, %v2278
    %v2295 = vadd.f32 %v2183, %v2279
    %2296 = vset.pattern.permute.xlu0 17
    %2297 = vperm.xlu0 %2296, %v374
    %v2298 = vpop.permute.xlu0 %2297
    %2299 = vset.pattern.permute.xlu0 17
    %2300 = vperm.xlu0 %2299, %v375
    %v2301 = vpop.permute.xlu0 %2300
    %2302 = vset.pattern.permute.xlu0 17
    %2303 = vperm.xlu0 %2302, %v376
    %v2304 = vpop.permute.xlu0 %2303
    %2305 = vset.pattern.permute.xlu0 17
    %2306 = vperm.xlu0 %2305, %v377
    %v2307 = vpop.permute.xlu0 %2306
    %2308 = vset.pattern.permute.xlu0 17
    %2309 = vperm.xlu0 %2308, %v378
    %v2310 = vpop.permute.xlu0 %2309
    %2311 = vset.pattern.permute.xlu0 17
    %2312 = vperm.xlu0 %2311, %v379
    %v2313 = vpop.permute.xlu0 %2312
    %2314 = vset.pattern.permute.xlu0 17
    %2315 = vperm.xlu0 %2314, %v380
    %v2316 = vpop.permute.xlu0 %2315
    %2317 = vset.pattern.permute.xlu0 17
    %2318 = vperm.xlu0 %2317, %v381
    %v2319 = vpop.permute.xlu0 %2318
    %2320 = vset.pattern.permute.xlu0 17
    %2321 = vperm.xlu0 %2320, %v382
    %v2322 = vpop.permute.xlu0 %2321
    %2323 = vset.pattern.permute.xlu0 17
    %2324 = vperm.xlu0 %2323, %v383
    %v2325 = vpop.permute.xlu0 %2324
    %2326 = vset.pattern.permute.xlu0 17
    %2327 = vperm.xlu0 %2326, %v384
    %v2328 = vpop.permute.xlu0 %2327
    %2329 = vset.pattern.permute.xlu0 17
    %2330 = vperm.xlu0 %2329, %v385
    %v2331 = vpop.permute.xlu0 %2330
    %2332 = vset.pattern.permute.xlu0 17
    %2333 = vperm.xlu0 %2332, %v386
    %v2334 = vpop.permute.xlu0 %2333
    %2335 = vset.pattern.permute.xlu0 17
    %2336 = vperm.xlu0 %2335, %v387
    %v2337 = vpop.permute.xlu0 %2336
    %2338 = vset.pattern.permute.xlu0 17
    %2339 = vperm.xlu0 %2338, %v388
    %v2340 = vpop.permute.xlu0 %2339
    %2341 = vset.pattern.permute.xlu0 17
    %2342 = vperm.xlu0 %2341, %v389
    %v2343 = vpop.permute.xlu0 %2342
    %vm2344 = vcmp.eq.s32.totalorder %v2298, %v391
    %vm2345 = vcmp.eq.s32.totalorder %v2301, %v391
    %vm2346 = vcmp.eq.s32.totalorder %v2304, %v391
    %vm2347 = vcmp.eq.s32.totalorder %v2307, %v391
    %vm2348 = vcmp.eq.s32.totalorder %v2310, %v391
    %vm2349 = vcmp.eq.s32.totalorder %v2313, %v391
    %vm2350 = vcmp.eq.s32.totalorder %v2316, %v391
    %vm2351 = vcmp.eq.s32.totalorder %v2319, %v391
    %vm2352 = vcmp.eq.s32.totalorder %v2322, %v391
    %vm2353 = vcmp.eq.s32.totalorder %v2325, %v391
    %vm2354 = vcmp.eq.s32.totalorder %v2328, %v391
    %vm2355 = vcmp.eq.s32.totalorder %v2331, %v391
    %vm2356 = vcmp.eq.s32.totalorder %v2334, %v391
    %vm2357 = vcmp.eq.s32.totalorder %v2337, %v391
    %vm2358 = vcmp.eq.s32.totalorder %v2340, %v391
    %vm2359 = vcmp.eq.s32.totalorder %v2343, %v391
    %v2360 = vsel %vm2344, 1, 0
    %v2361 = vsel %vm2345, 1, 0
    %v2362 = vsel %vm2346, 1, 0
    %v2363 = vsel %vm2347, 1, 0
    %v2364 = vsel %vm2348, 1, 0
    %v2365 = vsel %vm2349, 1, 0
    %v2366 = vsel %vm2350, 1, 0
    %v2367 = vsel %vm2351, 1, 0
    %v2368 = vsel %vm2352, 1, 0
    %v2369 = vsel %vm2353, 1, 0
    %v2370 = vsel %vm2354, 1, 0
    %v2371 = vsel %vm2355, 1, 0
    %v2372 = vsel %vm2356, 1, 0
    %v2373 = vsel %vm2357, 1, 0
    %v2374 = vsel %vm2358, 1, 0
    %v2375 = vsel %vm2359, 1, 0
    %v2376 = vcvt.s32.f32 %v2360
    %v2377 = vcvt.s32.f32 %v2361
    %v2378 = vcvt.s32.f32 %v2362
    %v2379 = vcvt.s32.f32 %v2363
    %v2380 = vcvt.s32.f32 %v2364
    %v2381 = vcvt.s32.f32 %v2365
    %v2382 = vcvt.s32.f32 %v2366
    %v2383 = vcvt.s32.f32 %v2367
    %v2384 = vcvt.s32.f32 %v2368
    %v2385 = vcvt.s32.f32 %v2369
    %v2386 = vcvt.s32.f32 %v2370
    %v2387 = vcvt.s32.f32 %v2371
    %v2388 = vcvt.s32.f32 %v2372
    %v2389 = vcvt.s32.f32 %v2373
    %v2390 = vcvt.s32.f32 %v2374
    %v2391 = vcvt.s32.f32 %v2375
    %v2392 = vadd.f32 %v2280, %v2376
    %v2393 = vadd.f32 %v2281, %v2377
    %v2394 = vadd.f32 %v2282, %v2378
    %v2395 = vadd.f32 %v2283, %v2379
    %v2396 = vadd.f32 %v2284, %v2380
    %v2397 = vadd.f32 %v2285, %v2381
    %v2398 = vadd.f32 %v2286, %v2382
    %v2399 = vadd.f32 %v2287, %v2383
    %v2400 = vadd.f32 %v2288, %v2384
    %v2401 = vadd.f32 %v2289, %v2385
    %v2402 = vadd.f32 %v2290, %v2386
    %v2403 = vadd.f32 %v2291, %v2387
    %v2404 = vadd.f32 %v2292, %v2388
    %v2405 = vadd.f32 %v2293, %v2389
    %v2406 = vadd.f32 %v2294, %v2390
    %v2407 = vadd.f32 %v2295, %v2391
    %2408 = vset.pattern.permute.xlu0 18
    %2409 = vperm.xlu0 %2408, %v374
    %v2410 = vpop.permute.xlu0 %2409
    %2411 = vset.pattern.permute.xlu0 18
    %2412 = vperm.xlu0 %2411, %v375
    %v2413 = vpop.permute.xlu0 %2412
    %2414 = vset.pattern.permute.xlu0 18
    %2415 = vperm.xlu0 %2414, %v376
    %v2416 = vpop.permute.xlu0 %2415
    %2417 = vset.pattern.permute.xlu0 18
    %2418 = vperm.xlu0 %2417, %v377
    %v2419 = vpop.permute.xlu0 %2418
    %2420 = vset.pattern.permute.xlu0 18
    %2421 = vperm.xlu0 %2420, %v378
    %v2422 = vpop.permute.xlu0 %2421
    %2423 = vset.pattern.permute.xlu0 18
    %2424 = vperm.xlu0 %2423, %v379
    %v2425 = vpop.permute.xlu0 %2424
    %2426 = vset.pattern.permute.xlu0 18
    %2427 = vperm.xlu0 %2426, %v380
    %v2428 = vpop.permute.xlu0 %2427
    %2429 = vset.pattern.permute.xlu0 18
    %2430 = vperm.xlu0 %2429, %v381
    %v2431 = vpop.permute.xlu0 %2430
    %2432 = vset.pattern.permute.xlu0 18
    %2433 = vperm.xlu0 %2432, %v382
    %v2434 = vpop.permute.xlu0 %2433
    %2435 = vset.pattern.permute.xlu0 18
    %2436 = vperm.xlu0 %2435, %v383
    %v2437 = vpop.permute.xlu0 %2436
    %2438 = vset.pattern.permute.xlu0 18
    %2439 = vperm.xlu0 %2438, %v384
    %v2440 = vpop.permute.xlu0 %2439
    %2441 = vset.pattern.permute.xlu0 18
    %2442 = vperm.xlu0 %2441, %v385
    %v2443 = vpop.permute.xlu0 %2442
    %2444 = vset.pattern.permute.xlu0 18
    %2445 = vperm.xlu0 %2444, %v386
    %v2446 = vpop.permute.xlu0 %2445
    %2447 = vset.pattern.permute.xlu0 18
    %2448 = vperm.xlu0 %2447, %v387
    %v2449 = vpop.permute.xlu0 %2448
    %2450 = vset.pattern.permute.xlu0 18
    %2451 = vperm.xlu0 %2450, %v388
    %v2452 = vpop.permute.xlu0 %2451
    %2453 = vset.pattern.permute.xlu0 18
    %2454 = vperm.xlu0 %2453, %v389
    %v2455 = vpop.permute.xlu0 %2454
    %vm2456 = vcmp.eq.s32.totalorder %v2410, %v391
    %vm2457 = vcmp.eq.s32.totalorder %v2413, %v391
    %vm2458 = vcmp.eq.s32.totalorder %v2416, %v391
    %vm2459 = vcmp.eq.s32.totalorder %v2419, %v391
    %vm2460 = vcmp.eq.s32.totalorder %v2422, %v391
    %vm2461 = vcmp.eq.s32.totalorder %v2425, %v391
    %vm2462 = vcmp.eq.s32.totalorder %v2428, %v391
    %vm2463 = vcmp.eq.s32.totalorder %v2431, %v391
    %vm2464 = vcmp.eq.s32.totalorder %v2434, %v391
    %vm2465 = vcmp.eq.s32.totalorder %v2437, %v391
    %vm2466 = vcmp.eq.s32.totalorder %v2440, %v391
    %vm2467 = vcmp.eq.s32.totalorder %v2443, %v391
    %vm2468 = vcmp.eq.s32.totalorder %v2446, %v391
    %vm2469 = vcmp.eq.s32.totalorder %v2449, %v391
    %vm2470 = vcmp.eq.s32.totalorder %v2452, %v391
    %vm2471 = vcmp.eq.s32.totalorder %v2455, %v391
    %v2472 = vsel %vm2456, 1, 0
    %v2473 = vsel %vm2457, 1, 0
    %v2474 = vsel %vm2458, 1, 0
    %v2475 = vsel %vm2459, 1, 0
    %v2476 = vsel %vm2460, 1, 0
    %v2477 = vsel %vm2461, 1, 0
    %v2478 = vsel %vm2462, 1, 0
    %v2479 = vsel %vm2463, 1, 0
    %v2480 = vsel %vm2464, 1, 0
    %v2481 = vsel %vm2465, 1, 0
    %v2482 = vsel %vm2466, 1, 0
    %v2483 = vsel %vm2467, 1, 0
    %v2484 = vsel %vm2468, 1, 0
    %v2485 = vsel %vm2469, 1, 0
    %v2486 = vsel %vm2470, 1, 0
    %v2487 = vsel %vm2471, 1, 0
    %v2488 = vcvt.s32.f32 %v2472
    %v2489 = vcvt.s32.f32 %v2473
    %v2490 = vcvt.s32.f32 %v2474
    %v2491 = vcvt.s32.f32 %v2475
    %v2492 = vcvt.s32.f32 %v2476
    %v2493 = vcvt.s32.f32 %v2477
    %v2494 = vcvt.s32.f32 %v2478
    %v2495 = vcvt.s32.f32 %v2479
    %v2496 = vcvt.s32.f32 %v2480
    %v2497 = vcvt.s32.f32 %v2481
    %v2498 = vcvt.s32.f32 %v2482
    %v2499 = vcvt.s32.f32 %v2483
    %v2500 = vcvt.s32.f32 %v2484
    %v2501 = vcvt.s32.f32 %v2485
    %v2502 = vcvt.s32.f32 %v2486
    %v2503 = vcvt.s32.f32 %v2487
    %v2504 = vadd.f32 %v2392, %v2488
    %v2505 = vadd.f32 %v2393, %v2489
    %v2506 = vadd.f32 %v2394, %v2490
    %v2507 = vadd.f32 %v2395, %v2491
    %v2508 = vadd.f32 %v2396, %v2492
    %v2509 = vadd.f32 %v2397, %v2493
    %v2510 = vadd.f32 %v2398, %v2494
    %v2511 = vadd.f32 %v2399, %v2495
    %v2512 = vadd.f32 %v2400, %v2496
    %v2513 = vadd.f32 %v2401, %v2497
    %v2514 = vadd.f32 %v2402, %v2498
    %v2515 = vadd.f32 %v2403, %v2499
    %v2516 = vadd.f32 %v2404, %v2500
    %v2517 = vadd.f32 %v2405, %v2501
    %v2518 = vadd.f32 %v2406, %v2502
    %v2519 = vadd.f32 %v2407, %v2503
    %2520 = vset.pattern.permute.xlu0 19
    %2521 = vperm.xlu0 %2520, %v374
    %v2522 = vpop.permute.xlu0 %2521
    %2523 = vset.pattern.permute.xlu0 19
    %2524 = vperm.xlu0 %2523, %v375
    %v2525 = vpop.permute.xlu0 %2524
    %2526 = vset.pattern.permute.xlu0 19
    %2527 = vperm.xlu0 %2526, %v376
    %v2528 = vpop.permute.xlu0 %2527
    %2529 = vset.pattern.permute.xlu0 19
    %2530 = vperm.xlu0 %2529, %v377
    %v2531 = vpop.permute.xlu0 %2530
    %2532 = vset.pattern.permute.xlu0 19
    %2533 = vperm.xlu0 %2532, %v378
    %v2534 = vpop.permute.xlu0 %2533
    %2535 = vset.pattern.permute.xlu0 19
    %2536 = vperm.xlu0 %2535, %v379
    %v2537 = vpop.permute.xlu0 %2536
    %2538 = vset.pattern.permute.xlu0 19
    %2539 = vperm.xlu0 %2538, %v380
    %v2540 = vpop.permute.xlu0 %2539
    %2541 = vset.pattern.permute.xlu0 19
    %2542 = vperm.xlu0 %2541, %v381
    %v2543 = vpop.permute.xlu0 %2542
    %2544 = vset.pattern.permute.xlu0 19
    %2545 = vperm.xlu0 %2544, %v382
    %v2546 = vpop.permute.xlu0 %2545
    %2547 = vset.pattern.permute.xlu0 19
    %2548 = vperm.xlu0 %2547, %v383
    %v2549 = vpop.permute.xlu0 %2548
    %2550 = vset.pattern.permute.xlu0 19
    %2551 = vperm.xlu0 %2550, %v384
    %v2552 = vpop.permute.xlu0 %2551
    %2553 = vset.pattern.permute.xlu0 19
    %2554 = vperm.xlu0 %2553, %v385
    %v2555 = vpop.permute.xlu0 %2554
    %2556 = vset.pattern.permute.xlu0 19
    %2557 = vperm.xlu0 %2556, %v386
    %v2558 = vpop.permute.xlu0 %2557
    %2559 = vset.pattern.permute.xlu0 19
    %2560 = vperm.xlu0 %2559, %v387
    %v2561 = vpop.permute.xlu0 %2560
    %2562 = vset.pattern.permute.xlu0 19
    %2563 = vperm.xlu0 %2562, %v388
    %v2564 = vpop.permute.xlu0 %2563
    %2565 = vset.pattern.permute.xlu0 19
    %2566 = vperm.xlu0 %2565, %v389
    %v2567 = vpop.permute.xlu0 %2566
    %vm2568 = vcmp.eq.s32.totalorder %v2522, %v391
    %vm2569 = vcmp.eq.s32.totalorder %v2525, %v391
    %vm2570 = vcmp.eq.s32.totalorder %v2528, %v391
    %vm2571 = vcmp.eq.s32.totalorder %v2531, %v391
    %vm2572 = vcmp.eq.s32.totalorder %v2534, %v391
    %vm2573 = vcmp.eq.s32.totalorder %v2537, %v391
    %vm2574 = vcmp.eq.s32.totalorder %v2540, %v391
    %vm2575 = vcmp.eq.s32.totalorder %v2543, %v391
    %vm2576 = vcmp.eq.s32.totalorder %v2546, %v391
    %vm2577 = vcmp.eq.s32.totalorder %v2549, %v391
    %vm2578 = vcmp.eq.s32.totalorder %v2552, %v391
    %vm2579 = vcmp.eq.s32.totalorder %v2555, %v391
    %vm2580 = vcmp.eq.s32.totalorder %v2558, %v391
    %vm2581 = vcmp.eq.s32.totalorder %v2561, %v391
    %vm2582 = vcmp.eq.s32.totalorder %v2564, %v391
    %vm2583 = vcmp.eq.s32.totalorder %v2567, %v391
    %v2584 = vsel %vm2568, 1, 0
    %v2585 = vsel %vm2569, 1, 0
    %v2586 = vsel %vm2570, 1, 0
    %v2587 = vsel %vm2571, 1, 0
    %v2588 = vsel %vm2572, 1, 0
    %v2589 = vsel %vm2573, 1, 0
    %v2590 = vsel %vm2574, 1, 0
    %v2591 = vsel %vm2575, 1, 0
    %v2592 = vsel %vm2576, 1, 0
    %v2593 = vsel %vm2577, 1, 0
    %v2594 = vsel %vm2578, 1, 0
    %v2595 = vsel %vm2579, 1, 0
    %v2596 = vsel %vm2580, 1, 0
    %v2597 = vsel %vm2581, 1, 0
    %v2598 = vsel %vm2582, 1, 0
    %v2599 = vsel %vm2583, 1, 0
    %v2600 = vcvt.s32.f32 %v2584
    %v2601 = vcvt.s32.f32 %v2585
    %v2602 = vcvt.s32.f32 %v2586
    %v2603 = vcvt.s32.f32 %v2587
    %v2604 = vcvt.s32.f32 %v2588
    %v2605 = vcvt.s32.f32 %v2589
    %v2606 = vcvt.s32.f32 %v2590
    %v2607 = vcvt.s32.f32 %v2591
    %v2608 = vcvt.s32.f32 %v2592
    %v2609 = vcvt.s32.f32 %v2593
    %v2610 = vcvt.s32.f32 %v2594
    %v2611 = vcvt.s32.f32 %v2595
    %v2612 = vcvt.s32.f32 %v2596
    %v2613 = vcvt.s32.f32 %v2597
    %v2614 = vcvt.s32.f32 %v2598
    %v2615 = vcvt.s32.f32 %v2599
    %v2616 = vadd.f32 %v2504, %v2600
    %v2617 = vadd.f32 %v2505, %v2601
    %v2618 = vadd.f32 %v2506, %v2602
    %v2619 = vadd.f32 %v2507, %v2603
    %v2620 = vadd.f32 %v2508, %v2604
    %v2621 = vadd.f32 %v2509, %v2605
    %v2622 = vadd.f32 %v2510, %v2606
    %v2623 = vadd.f32 %v2511, %v2607
    %v2624 = vadd.f32 %v2512, %v2608
    %v2625 = vadd.f32 %v2513, %v2609
    %v2626 = vadd.f32 %v2514, %v2610
    %v2627 = vadd.f32 %v2515, %v2611
    %v2628 = vadd.f32 %v2516, %v2612
    %v2629 = vadd.f32 %v2517, %v2613
    %v2630 = vadd.f32 %v2518, %v2614
    %v2631 = vadd.f32 %v2519, %v2615
    %2632 = vset.pattern.permute.xlu0 20
    %2633 = vperm.xlu0 %2632, %v374
    %v2634 = vpop.permute.xlu0 %2633
    %2635 = vset.pattern.permute.xlu0 20
    %2636 = vperm.xlu0 %2635, %v375
    %v2637 = vpop.permute.xlu0 %2636
    %2638 = vset.pattern.permute.xlu0 20
    %2639 = vperm.xlu0 %2638, %v376
    %v2640 = vpop.permute.xlu0 %2639
    %2641 = vset.pattern.permute.xlu0 20
    %2642 = vperm.xlu0 %2641, %v377
    %v2643 = vpop.permute.xlu0 %2642
    %2644 = vset.pattern.permute.xlu0 20
    %2645 = vperm.xlu0 %2644, %v378
    %v2646 = vpop.permute.xlu0 %2645
    %2647 = vset.pattern.permute.xlu0 20
    %2648 = vperm.xlu0 %2647, %v379
    %v2649 = vpop.permute.xlu0 %2648
    %2650 = vset.pattern.permute.xlu0 20
    %2651 = vperm.xlu0 %2650, %v380
    %v2652 = vpop.permute.xlu0 %2651
    %2653 = vset.pattern.permute.xlu0 20
    %2654 = vperm.xlu0 %2653, %v381
    %v2655 = vpop.permute.xlu0 %2654
    %2656 = vset.pattern.permute.xlu0 20
    %2657 = vperm.xlu0 %2656, %v382
    %v2658 = vpop.permute.xlu0 %2657
    %2659 = vset.pattern.permute.xlu0 20
    %2660 = vperm.xlu0 %2659, %v383
    %v2661 = vpop.permute.xlu0 %2660
    %2662 = vset.pattern.permute.xlu0 20
    %2663 = vperm.xlu0 %2662, %v384
    %v2664 = vpop.permute.xlu0 %2663
    %2665 = vset.pattern.permute.xlu0 20
    %2666 = vperm.xlu0 %2665, %v385
    %v2667 = vpop.permute.xlu0 %2666
    %2668 = vset.pattern.permute.xlu0 20
    %2669 = vperm.xlu0 %2668, %v386
    %v2670 = vpop.permute.xlu0 %2669
    %2671 = vset.pattern.permute.xlu0 20
    %2672 = vperm.xlu0 %2671, %v387
    %v2673 = vpop.permute.xlu0 %2672
    %2674 = vset.pattern.permute.xlu0 20
    %2675 = vperm.xlu0 %2674, %v388
    %v2676 = vpop.permute.xlu0 %2675
    %2677 = vset.pattern.permute.xlu0 20
    %2678 = vperm.xlu0 %2677, %v389
    %v2679 = vpop.permute.xlu0 %2678
    %vm2680 = vcmp.eq.s32.totalorder %v2634, %v391
    %vm2681 = vcmp.eq.s32.totalorder %v2637, %v391
    %vm2682 = vcmp.eq.s32.totalorder %v2640, %v391
    %vm2683 = vcmp.eq.s32.totalorder %v2643, %v391
    %vm2684 = vcmp.eq.s32.totalorder %v2646, %v391
    %vm2685 = vcmp.eq.s32.totalorder %v2649, %v391
    %vm2686 = vcmp.eq.s32.totalorder %v2652, %v391
    %vm2687 = vcmp.eq.s32.totalorder %v2655, %v391
    %vm2688 = vcmp.eq.s32.totalorder %v2658, %v391
    %vm2689 = vcmp.eq.s32.totalorder %v2661, %v391
    %vm2690 = vcmp.eq.s32.totalorder %v2664, %v391
    %vm2691 = vcmp.eq.s32.totalorder %v2667, %v391
    %vm2692 = vcmp.eq.s32.totalorder %v2670, %v391
    %vm2693 = vcmp.eq.s32.totalorder %v2673, %v391
    %vm2694 = vcmp.eq.s32.totalorder %v2676, %v391
    %vm2695 = vcmp.eq.s32.totalorder %v2679, %v391
    %v2696 = vsel %vm2680, 1, 0
    %v2697 = vsel %vm2681, 1, 0
    %v2698 = vsel %vm2682, 1, 0
    %v2699 = vsel %vm2683, 1, 0
    %v2700 = vsel %vm2684, 1, 0
    %v2701 = vsel %vm2685, 1, 0
    %v2702 = vsel %vm2686, 1, 0
    %v2703 = vsel %vm2687, 1, 0
    %v2704 = vsel %vm2688, 1, 0
    %v2705 = vsel %vm2689, 1, 0
    %v2706 = vsel %vm2690, 1, 0
    %v2707 = vsel %vm2691, 1, 0
    %v2708 = vsel %vm2692, 1, 0
    %v2709 = vsel %vm2693, 1, 0
    %v2710 = vsel %vm2694, 1, 0
    %v2711 = vsel %vm2695, 1, 0
    %v2712 = vcvt.s32.f32 %v2696
    %v2713 = vcvt.s32.f32 %v2697
    %v2714 = vcvt.s32.f32 %v2698
    %v2715 = vcvt.s32.f32 %v2699
    %v2716 = vcvt.s32.f32 %v2700
    %v2717 = vcvt.s32.f32 %v2701
    %v2718 = vcvt.s32.f32 %v2702
    %v2719 = vcvt.s32.f32 %v2703
    %v2720 = vcvt.s32.f32 %v2704
    %v2721 = vcvt.s32.f32 %v2705
    %v2722 = vcvt.s32.f32 %v2706
    %v2723 = vcvt.s32.f32 %v2707
    %v2724 = vcvt.s32.f32 %v2708
    %v2725 = vcvt.s32.f32 %v2709
    %v2726 = vcvt.s32.f32 %v2710
    %v2727 = vcvt.s32.f32 %v2711
    %v2728 = vadd.f32 %v2616, %v2712
    %v2729 = vadd.f32 %v2617, %v2713
    %v2730 = vadd.f32 %v2618, %v2714
    %v2731 = vadd.f32 %v2619, %v2715
    %v2732 = vadd.f32 %v2620, %v2716
    %v2733 = vadd.f32 %v2621, %v2717
    %v2734 = vadd.f32 %v2622, %v2718
    %v2735 = vadd.f32 %v2623, %v2719
    %v2736 = vadd.f32 %v2624, %v2720
    %v2737 = vadd.f32 %v2625, %v2721
    %v2738 = vadd.f32 %v2626, %v2722
    %v2739 = vadd.f32 %v2627, %v2723
    %v2740 = vadd.f32 %v2628, %v2724
    %v2741 = vadd.f32 %v2629, %v2725
    %v2742 = vadd.f32 %v2630, %v2726
    %v2743 = vadd.f32 %v2631, %v2727
    %2744 = vset.pattern.permute.xlu0 21
    %2745 = vperm.xlu0 %2744, %v374
    %v2746 = vpop.permute.xlu0 %2745
    %2747 = vset.pattern.permute.xlu0 21
    %2748 = vperm.xlu0 %2747, %v375
    %v2749 = vpop.permute.xlu0 %2748
    %2750 = vset.pattern.permute.xlu0 21
    %2751 = vperm.xlu0 %2750, %v376
    %v2752 = vpop.permute.xlu0 %2751
    %2753 = vset.pattern.permute.xlu0 21
    %2754 = vperm.xlu0 %2753, %v377
    %v2755 = vpop.permute.xlu0 %2754
    %2756 = vset.pattern.permute.xlu0 21
    %2757 = vperm.xlu0 %2756, %v378
    %v2758 = vpop.permute.xlu0 %2757
    %2759 = vset.pattern.permute.xlu0 21
    %2760 = vperm.xlu0 %2759, %v379
    %v2761 = vpop.permute.xlu0 %2760
    %2762 = vset.pattern.permute.xlu0 21
    %2763 = vperm.xlu0 %2762, %v380
    %v2764 = vpop.permute.xlu0 %2763
    %2765 = vset.pattern.permute.xlu0 21
    %2766 = vperm.xlu0 %2765, %v381
    %v2767 = vpop.permute.xlu0 %2766
    %2768 = vset.pattern.permute.xlu0 21
    %2769 = vperm.xlu0 %2768, %v382
    %v2770 = vpop.permute.xlu0 %2769
    %2771 = vset.pattern.permute.xlu0 21
    %2772 = vperm.xlu0 %2771, %v383
    %v2773 = vpop.permute.xlu0 %2772
    %2774 = vset.pattern.permute.xlu0 21
    %2775 = vperm.xlu0 %2774, %v384
    %v2776 = vpop.permute.xlu0 %2775
    %2777 = vset.pattern.permute.xlu0 21
    %2778 = vperm.xlu0 %2777, %v385
    %v2779 = vpop.permute.xlu0 %2778
    %2780 = vset.pattern.permute.xlu0 21
    %2781 = vperm.xlu0 %2780, %v386
    %v2782 = vpop.permute.xlu0 %2781
    %2783 = vset.pattern.permute.xlu0 21
    %2784 = vperm.xlu0 %2783, %v387
    %v2785 = vpop.permute.xlu0 %2784
    %2786 = vset.pattern.permute.xlu0 21
    %2787 = vperm.xlu0 %2786, %v388
    %v2788 = vpop.permute.xlu0 %2787
    %2789 = vset.pattern.permute.xlu0 21
    %2790 = vperm.xlu0 %2789, %v389
    %v2791 = vpop.permute.xlu0 %2790
    %vm2792 = vcmp.eq.s32.totalorder %v2746, %v391
    %vm2793 = vcmp.eq.s32.totalorder %v2749, %v391
    %vm2794 = vcmp.eq.s32.totalorder %v2752, %v391
    %vm2795 = vcmp.eq.s32.totalorder %v2755, %v391
    %vm2796 = vcmp.eq.s32.totalorder %v2758, %v391
    %vm2797 = vcmp.eq.s32.totalorder %v2761, %v391
    %vm2798 = vcmp.eq.s32.totalorder %v2764, %v391
    %vm2799 = vcmp.eq.s32.totalorder %v2767, %v391
    %vm2800 = vcmp.eq.s32.totalorder %v2770, %v391
    %vm2801 = vcmp.eq.s32.totalorder %v2773, %v391
    %vm2802 = vcmp.eq.s32.totalorder %v2776, %v391
    %vm2803 = vcmp.eq.s32.totalorder %v2779, %v391
    %vm2804 = vcmp.eq.s32.totalorder %v2782, %v391
    %vm2805 = vcmp.eq.s32.totalorder %v2785, %v391
    %vm2806 = vcmp.eq.s32.totalorder %v2788, %v391
    %vm2807 = vcmp.eq.s32.totalorder %v2791, %v391
    %v2808 = vsel %vm2792, 1, 0
    %v2809 = vsel %vm2793, 1, 0
    %v2810 = vsel %vm2794, 1, 0
    %v2811 = vsel %vm2795, 1, 0
    %v2812 = vsel %vm2796, 1, 0
    %v2813 = vsel %vm2797, 1, 0
    %v2814 = vsel %vm2798, 1, 0
    %v2815 = vsel %vm2799, 1, 0
    %v2816 = vsel %vm2800, 1, 0
    %v2817 = vsel %vm2801, 1, 0
    %v2818 = vsel %vm2802, 1, 0
    %v2819 = vsel %vm2803, 1, 0
    %v2820 = vsel %vm2804, 1, 0
    %v2821 = vsel %vm2805, 1, 0
    %v2822 = vsel %vm2806, 1, 0
    %v2823 = vsel %vm2807, 1, 0
    %v2824 = vcvt.s32.f32 %v2808
    %v2825 = vcvt.s32.f32 %v2809
    %v2826 = vcvt.s32.f32 %v2810
    %v2827 = vcvt.s32.f32 %v2811
    %v2828 = vcvt.s32.f32 %v2812
    %v2829 = vcvt.s32.f32 %v2813
    %v2830 = vcvt.s32.f32 %v2814
    %v2831 = vcvt.s32.f32 %v2815
    %v2832 = vcvt.s32.f32 %v2816
    %v2833 = vcvt.s32.f32 %v2817
    %v2834 = vcvt.s32.f32 %v2818
    %v2835 = vcvt.s32.f32 %v2819
    %v2836 = vcvt.s32.f32 %v2820
    %v2837 = vcvt.s32.f32 %v2821
    %v2838 = vcvt.s32.f32 %v2822
    %v2839 = vcvt.s32.f32 %v2823
    %v2840 = vadd.f32 %v2728, %v2824
    %v2841 = vadd.f32 %v2729, %v2825
    %v2842 = vadd.f32 %v2730, %v2826
    %v2843 = vadd.f32 %v2731, %v2827
    %v2844 = vadd.f32 %v2732, %v2828
    %v2845 = vadd.f32 %v2733, %v2829
    %v2846 = vadd.f32 %v2734, %v2830
    %v2847 = vadd.f32 %v2735, %v2831
    %v2848 = vadd.f32 %v2736, %v2832
    %v2849 = vadd.f32 %v2737, %v2833
    %v2850 = vadd.f32 %v2738, %v2834
    %v2851 = vadd.f32 %v2739, %v2835
    %v2852 = vadd.f32 %v2740, %v2836
    %v2853 = vadd.f32 %v2741, %v2837
    %v2854 = vadd.f32 %v2742, %v2838
    %v2855 = vadd.f32 %v2743, %v2839
    %2856 = vset.pattern.permute.xlu0 22
    %2857 = vperm.xlu0 %2856, %v374
    %v2858 = vpop.permute.xlu0 %2857
    %2859 = vset.pattern.permute.xlu0 22
    %2860 = vperm.xlu0 %2859, %v375
    %v2861 = vpop.permute.xlu0 %2860
    %2862 = vset.pattern.permute.xlu0 22
    %2863 = vperm.xlu0 %2862, %v376
    %v2864 = vpop.permute.xlu0 %2863
    %2865 = vset.pattern.permute.xlu0 22
    %2866 = vperm.xlu0 %2865, %v377
    %v2867 = vpop.permute.xlu0 %2866
    %2868 = vset.pattern.permute.xlu0 22
    %2869 = vperm.xlu0 %2868, %v378
    %v2870 = vpop.permute.xlu0 %2869
    %2871 = vset.pattern.permute.xlu0 22
    %2872 = vperm.xlu0 %2871, %v379
    %v2873 = vpop.permute.xlu0 %2872
    %2874 = vset.pattern.permute.xlu0 22
    %2875 = vperm.xlu0 %2874, %v380
    %v2876 = vpop.permute.xlu0 %2875
    %2877 = vset.pattern.permute.xlu0 22
    %2878 = vperm.xlu0 %2877, %v381
    %v2879 = vpop.permute.xlu0 %2878
    %2880 = vset.pattern.permute.xlu0 22
    %2881 = vperm.xlu0 %2880, %v382
    %v2882 = vpop.permute.xlu0 %2881
    %2883 = vset.pattern.permute.xlu0 22
    %2884 = vperm.xlu0 %2883, %v383
    %v2885 = vpop.permute.xlu0 %2884
    %2886 = vset.pattern.permute.xlu0 22
    %2887 = vperm.xlu0 %2886, %v384
    %v2888 = vpop.permute.xlu0 %2887
    %2889 = vset.pattern.permute.xlu0 22
    %2890 = vperm.xlu0 %2889, %v385
    %v2891 = vpop.permute.xlu0 %2890
    %2892 = vset.pattern.permute.xlu0 22
    %2893 = vperm.xlu0 %2892, %v386
    %v2894 = vpop.permute.xlu0 %2893
    %2895 = vset.pattern.permute.xlu0 22
    %2896 = vperm.xlu0 %2895, %v387
    %v2897 = vpop.permute.xlu0 %2896
    %2898 = vset.pattern.permute.xlu0 22
    %2899 = vperm.xlu0 %2898, %v388
    %v2900 = vpop.permute.xlu0 %2899
    %2901 = vset.pattern.permute.xlu0 22
    %2902 = vperm.xlu0 %2901, %v389
    %v2903 = vpop.permute.xlu0 %2902
    %vm2904 = vcmp.eq.s32.totalorder %v2858, %v391
    %vm2905 = vcmp.eq.s32.totalorder %v2861, %v391
    %vm2906 = vcmp.eq.s32.totalorder %v2864, %v391
    %vm2907 = vcmp.eq.s32.totalorder %v2867, %v391
    %vm2908 = vcmp.eq.s32.totalorder %v2870, %v391
    %vm2909 = vcmp.eq.s32.totalorder %v2873, %v391
    %vm2910 = vcmp.eq.s32.totalorder %v2876, %v391
    %vm2911 = vcmp.eq.s32.totalorder %v2879, %v391
    %vm2912 = vcmp.eq.s32.totalorder %v2882, %v391
    %vm2913 = vcmp.eq.s32.totalorder %v2885, %v391
    %vm2914 = vcmp.eq.s32.totalorder %v2888, %v391
    %vm2915 = vcmp.eq.s32.totalorder %v2891, %v391
    %vm2916 = vcmp.eq.s32.totalorder %v2894, %v391
    %vm2917 = vcmp.eq.s32.totalorder %v2897, %v391
    %vm2918 = vcmp.eq.s32.totalorder %v2900, %v391
    %vm2919 = vcmp.eq.s32.totalorder %v2903, %v391
    %v2920 = vsel %vm2904, 1, 0
    %v2921 = vsel %vm2905, 1, 0
    %v2922 = vsel %vm2906, 1, 0
    %v2923 = vsel %vm2907, 1, 0
    %v2924 = vsel %vm2908, 1, 0
    %v2925 = vsel %vm2909, 1, 0
    %v2926 = vsel %vm2910, 1, 0
    %v2927 = vsel %vm2911, 1, 0
    %v2928 = vsel %vm2912, 1, 0
    %v2929 = vsel %vm2913, 1, 0
    %v2930 = vsel %vm2914, 1, 0
    %v2931 = vsel %vm2915, 1, 0
    %v2932 = vsel %vm2916, 1, 0
    %v2933 = vsel %vm2917, 1, 0
    %v2934 = vsel %vm2918, 1, 0
    %v2935 = vsel %vm2919, 1, 0
    %v2936 = vcvt.s32.f32 %v2920
    %v2937 = vcvt.s32.f32 %v2921
    %v2938 = vcvt.s32.f32 %v2922
    %v2939 = vcvt.s32.f32 %v2923
    %v2940 = vcvt.s32.f32 %v2924
    %v2941 = vcvt.s32.f32 %v2925
    %v2942 = vcvt.s32.f32 %v2926
    %v2943 = vcvt.s32.f32 %v2927
    %v2944 = vcvt.s32.f32 %v2928
    %v2945 = vcvt.s32.f32 %v2929
    %v2946 = vcvt.s32.f32 %v2930
    %v2947 = vcvt.s32.f32 %v2931
    %v2948 = vcvt.s32.f32 %v2932
    %v2949 = vcvt.s32.f32 %v2933
    %v2950 = vcvt.s32.f32 %v2934
    %v2951 = vcvt.s32.f32 %v2935
    %v2952 = vadd.f32 %v2840, %v2936
    %v2953 = vadd.f32 %v2841, %v2937
    %v2954 = vadd.f32 %v2842, %v2938
    %v2955 = vadd.f32 %v2843, %v2939
    %v2956 = vadd.f32 %v2844, %v2940
    %v2957 = vadd.f32 %v2845, %v2941
    %v2958 = vadd.f32 %v2846, %v2942
    %v2959 = vadd.f32 %v2847, %v2943
    %v2960 = vadd.f32 %v2848, %v2944
    %v2961 = vadd.f32 %v2849, %v2945
    %v2962 = vadd.f32 %v2850, %v2946
    %v2963 = vadd.f32 %v2851, %v2947
    %v2964 = vadd.f32 %v2852, %v2948
    %v2965 = vadd.f32 %v2853, %v2949
    %v2966 = vadd.f32 %v2854, %v2950
    %v2967 = vadd.f32 %v2855, %v2951
    %2968 = vset.pattern.permute.xlu0 23
    %2969 = vperm.xlu0 %2968, %v374
    %v2970 = vpop.permute.xlu0 %2969
    %2971 = vset.pattern.permute.xlu0 23
    %2972 = vperm.xlu0 %2971, %v375
    %v2973 = vpop.permute.xlu0 %2972
    %2974 = vset.pattern.permute.xlu0 23
    %2975 = vperm.xlu0 %2974, %v376
    %v2976 = vpop.permute.xlu0 %2975
    %2977 = vset.pattern.permute.xlu0 23
    %2978 = vperm.xlu0 %2977, %v377
    %v2979 = vpop.permute.xlu0 %2978
    %2980 = vset.pattern.permute.xlu0 23
    %2981 = vperm.xlu0 %2980, %v378
    %v2982 = vpop.permute.xlu0 %2981
    %2983 = vset.pattern.permute.xlu0 23
    %2984 = vperm.xlu0 %2983, %v379
    %v2985 = vpop.permute.xlu0 %2984
    %2986 = vset.pattern.permute.xlu0 23
    %2987 = vperm.xlu0 %2986, %v380
    %v2988 = vpop.permute.xlu0 %2987
    %2989 = vset.pattern.permute.xlu0 23
    %2990 = vperm.xlu0 %2989, %v381
    %v2991 = vpop.permute.xlu0 %2990
    %2992 = vset.pattern.permute.xlu0 23
    %2993 = vperm.xlu0 %2992, %v382
    %v2994 = vpop.permute.xlu0 %2993
    %2995 = vset.pattern.permute.xlu0 23
    %2996 = vperm.xlu0 %2995, %v383
    %v2997 = vpop.permute.xlu0 %2996
    %2998 = vset.pattern.permute.xlu0 23
    %2999 = vperm.xlu0 %2998, %v384
    %v3000 = vpop.permute.xlu0 %2999
    %3001 = vset.pattern.permute.xlu0 23
    %3002 = vperm.xlu0 %3001, %v385
    %v3003 = vpop.permute.xlu0 %3002
    %3004 = vset.pattern.permute.xlu0 23
    %3005 = vperm.xlu0 %3004, %v386
    %v3006 = vpop.permute.xlu0 %3005
    %3007 = vset.pattern.permute.xlu0 23
    %3008 = vperm.xlu0 %3007, %v387
    %v3009 = vpop.permute.xlu0 %3008
    %3010 = vset.pattern.permute.xlu0 23
    %3011 = vperm.xlu0 %3010, %v388
    %v3012 = vpop.permute.xlu0 %3011
    %3013 = vset.pattern.permute.xlu0 23
    %3014 = vperm.xlu0 %3013, %v389
    %v3015 = vpop.permute.xlu0 %3014
    %vm3016 = vcmp.eq.s32.totalorder %v2970, %v391
    %vm3017 = vcmp.eq.s32.totalorder %v2973, %v391
    %vm3018 = vcmp.eq.s32.totalorder %v2976, %v391
    %vm3019 = vcmp.eq.s32.totalorder %v2979, %v391
    %vm3020 = vcmp.eq.s32.totalorder %v2982, %v391
    %vm3021 = vcmp.eq.s32.totalorder %v2985, %v391
    %vm3022 = vcmp.eq.s32.totalorder %v2988, %v391
    %vm3023 = vcmp.eq.s32.totalorder %v2991, %v391
    %vm3024 = vcmp.eq.s32.totalorder %v2994, %v391
    %vm3025 = vcmp.eq.s32.totalorder %v2997, %v391
    %vm3026 = vcmp.eq.s32.totalorder %v3000, %v391
    %vm3027 = vcmp.eq.s32.totalorder %v3003, %v391
    %vm3028 = vcmp.eq.s32.totalorder %v3006, %v391
    %vm3029 = vcmp.eq.s32.totalorder %v3009, %v391
    %vm3030 = vcmp.eq.s32.totalorder %v3012, %v391
    %vm3031 = vcmp.eq.s32.totalorder %v3015, %v391
    %v3032 = vsel %vm3016, 1, 0
    %v3033 = vsel %vm3017, 1, 0
    %v3034 = vsel %vm3018, 1, 0
    %v3035 = vsel %vm3019, 1, 0
    %v3036 = vsel %vm3020, 1, 0
    %v3037 = vsel %vm3021, 1, 0
    %v3038 = vsel %vm3022, 1, 0
    %v3039 = vsel %vm3023, 1, 0
    %v3040 = vsel %vm3024, 1, 0
    %v3041 = vsel %vm3025, 1, 0
    %v3042 = vsel %vm3026, 1, 0
    %v3043 = vsel %vm3027, 1, 0
    %v3044 = vsel %vm3028, 1, 0
    %v3045 = vsel %vm3029, 1, 0
    %v3046 = vsel %vm3030, 1, 0
    %v3047 = vsel %vm3031, 1, 0
    %v3048 = vcvt.s32.f32 %v3032
    %v3049 = vcvt.s32.f32 %v3033
    %v3050 = vcvt.s32.f32 %v3034
    %v3051 = vcvt.s32.f32 %v3035
    %v3052 = vcvt.s32.f32 %v3036
    %v3053 = vcvt.s32.f32 %v3037
    %v3054 = vcvt.s32.f32 %v3038
    %v3055 = vcvt.s32.f32 %v3039
    %v3056 = vcvt.s32.f32 %v3040
    %v3057 = vcvt.s32.f32 %v3041
    %v3058 = vcvt.s32.f32 %v3042
    %v3059 = vcvt.s32.f32 %v3043
    %v3060 = vcvt.s32.f32 %v3044
    %v3061 = vcvt.s32.f32 %v3045
    %v3062 = vcvt.s32.f32 %v3046
    %v3063 = vcvt.s32.f32 %v3047
    %v3064 = vadd.f32 %v2952, %v3048
    %v3065 = vadd.f32 %v2953, %v3049
    %v3066 = vadd.f32 %v2954, %v3050
    %v3067 = vadd.f32 %v2955, %v3051
    %v3068 = vadd.f32 %v2956, %v3052
    %v3069 = vadd.f32 %v2957, %v3053
    %v3070 = vadd.f32 %v2958, %v3054
    %v3071 = vadd.f32 %v2959, %v3055
    %v3072 = vadd.f32 %v2960, %v3056
    %v3073 = vadd.f32 %v2961, %v3057
    %v3074 = vadd.f32 %v2962, %v3058
    %v3075 = vadd.f32 %v2963, %v3059
    %v3076 = vadd.f32 %v2964, %v3060
    %v3077 = vadd.f32 %v2965, %v3061
    %v3078 = vadd.f32 %v2966, %v3062
    %v3079 = vadd.f32 %v2967, %v3063
    %3080 = vset.pattern.permute.xlu0 24
    %3081 = vperm.xlu0 %3080, %v374
    %v3082 = vpop.permute.xlu0 %3081
    %3083 = vset.pattern.permute.xlu0 24
    %3084 = vperm.xlu0 %3083, %v375
    %v3085 = vpop.permute.xlu0 %3084
    %3086 = vset.pattern.permute.xlu0 24
    %3087 = vperm.xlu0 %3086, %v376
    %v3088 = vpop.permute.xlu0 %3087
    %3089 = vset.pattern.permute.xlu0 24
    %3090 = vperm.xlu0 %3089, %v377
    %v3091 = vpop.permute.xlu0 %3090
    %3092 = vset.pattern.permute.xlu0 24
    %3093 = vperm.xlu0 %3092, %v378
    %v3094 = vpop.permute.xlu0 %3093
    %3095 = vset.pattern.permute.xlu0 24
    %3096 = vperm.xlu0 %3095, %v379
    %v3097 = vpop.permute.xlu0 %3096
    %3098 = vset.pattern.permute.xlu0 24
    %3099 = vperm.xlu0 %3098, %v380
    %v3100 = vpop.permute.xlu0 %3099
    %3101 = vset.pattern.permute.xlu0 24
    %3102 = vperm.xlu0 %3101, %v381
    %v3103 = vpop.permute.xlu0 %3102
    %3104 = vset.pattern.permute.xlu0 24
    %3105 = vperm.xlu0 %3104, %v382
    %v3106 = vpop.permute.xlu0 %3105
    %3107 = vset.pattern.permute.xlu0 24
    %3108 = vperm.xlu0 %3107, %v383
    %v3109 = vpop.permute.xlu0 %3108
    %3110 = vset.pattern.permute.xlu0 24
    %3111 = vperm.xlu0 %3110, %v384
    %v3112 = vpop.permute.xlu0 %3111
    %3113 = vset.pattern.permute.xlu0 24
    %3114 = vperm.xlu0 %3113, %v385
    %v3115 = vpop.permute.xlu0 %3114
    %3116 = vset.pattern.permute.xlu0 24
    %3117 = vperm.xlu0 %3116, %v386
    %v3118 = vpop.permute.xlu0 %3117
    %3119 = vset.pattern.permute.xlu0 24
    %3120 = vperm.xlu0 %3119, %v387
    %v3121 = vpop.permute.xlu0 %3120
    %3122 = vset.pattern.permute.xlu0 24
    %3123 = vperm.xlu0 %3122, %v388
    %v3124 = vpop.permute.xlu0 %3123
    %3125 = vset.pattern.permute.xlu0 24
    %3126 = vperm.xlu0 %3125, %v389
    %v3127 = vpop.permute.xlu0 %3126
    %vm3128 = vcmp.eq.s32.totalorder %v3082, %v391
    %vm3129 = vcmp.eq.s32.totalorder %v3085, %v391
    %vm3130 = vcmp.eq.s32.totalorder %v3088, %v391
    %vm3131 = vcmp.eq.s32.totalorder %v3091, %v391
    %vm3132 = vcmp.eq.s32.totalorder %v3094, %v391
    %vm3133 = vcmp.eq.s32.totalorder %v3097, %v391
    %vm3134 = vcmp.eq.s32.totalorder %v3100, %v391
    %vm3135 = vcmp.eq.s32.totalorder %v3103, %v391
    %vm3136 = vcmp.eq.s32.totalorder %v3106, %v391
    %vm3137 = vcmp.eq.s32.totalorder %v3109, %v391
    %vm3138 = vcmp.eq.s32.totalorder %v3112, %v391
    %vm3139 = vcmp.eq.s32.totalorder %v3115, %v391
    %vm3140 = vcmp.eq.s32.totalorder %v3118, %v391
    %vm3141 = vcmp.eq.s32.totalorder %v3121, %v391
    %vm3142 = vcmp.eq.s32.totalorder %v3124, %v391
    %vm3143 = vcmp.eq.s32.totalorder %v3127, %v391
    %v3144 = vsel %vm3128, 1, 0
    %v3145 = vsel %vm3129, 1, 0
    %v3146 = vsel %vm3130, 1, 0
    %v3147 = vsel %vm3131, 1, 0
    %v3148 = vsel %vm3132, 1, 0
    %v3149 = vsel %vm3133, 1, 0
    %v3150 = vsel %vm3134, 1, 0
    %v3151 = vsel %vm3135, 1, 0
    %v3152 = vsel %vm3136, 1, 0
    %v3153 = vsel %vm3137, 1, 0
    %v3154 = vsel %vm3138, 1, 0
    %v3155 = vsel %vm3139, 1, 0
    %v3156 = vsel %vm3140, 1, 0
    %v3157 = vsel %vm3141, 1, 0
    %v3158 = vsel %vm3142, 1, 0
    %v3159 = vsel %vm3143, 1, 0
    %v3160 = vcvt.s32.f32 %v3144
    %v3161 = vcvt.s32.f32 %v3145
    %v3162 = vcvt.s32.f32 %v3146
    %v3163 = vcvt.s32.f32 %v3147
    %v3164 = vcvt.s32.f32 %v3148
    %v3165 = vcvt.s32.f32 %v3149
    %v3166 = vcvt.s32.f32 %v3150
    %v3167 = vcvt.s32.f32 %v3151
    %v3168 = vcvt.s32.f32 %v3152
    %v3169 = vcvt.s32.f32 %v3153
    %v3170 = vcvt.s32.f32 %v3154
    %v3171 = vcvt.s32.f32 %v3155
    %v3172 = vcvt.s32.f32 %v3156
    %v3173 = vcvt.s32.f32 %v3157
    %v3174 = vcvt.s32.f32 %v3158
    %v3175 = vcvt.s32.f32 %v3159
    %v3176 = vadd.f32 %v3064, %v3160
    %v3177 = vadd.f32 %v3065, %v3161
    %v3178 = vadd.f32 %v3066, %v3162
    %v3179 = vadd.f32 %v3067, %v3163
    %v3180 = vadd.f32 %v3068, %v3164
    %v3181 = vadd.f32 %v3069, %v3165
    %v3182 = vadd.f32 %v3070, %v3166
    %v3183 = vadd.f32 %v3071, %v3167
    %v3184 = vadd.f32 %v3072, %v3168
    %v3185 = vadd.f32 %v3073, %v3169
    %v3186 = vadd.f32 %v3074, %v3170
    %v3187 = vadd.f32 %v3075, %v3171
    %v3188 = vadd.f32 %v3076, %v3172
    %v3189 = vadd.f32 %v3077, %v3173
    %v3190 = vadd.f32 %v3078, %v3174
    %v3191 = vadd.f32 %v3079, %v3175
    %3192 = vset.pattern.permute.xlu0 25
    %3193 = vperm.xlu0 %3192, %v374
    %v3194 = vpop.permute.xlu0 %3193
    %3195 = vset.pattern.permute.xlu0 25
    %3196 = vperm.xlu0 %3195, %v375
    %v3197 = vpop.permute.xlu0 %3196
    %3198 = vset.pattern.permute.xlu0 25
    %3199 = vperm.xlu0 %3198, %v376
    %v3200 = vpop.permute.xlu0 %3199
    %3201 = vset.pattern.permute.xlu0 25
    %3202 = vperm.xlu0 %3201, %v377
    %v3203 = vpop.permute.xlu0 %3202
    %3204 = vset.pattern.permute.xlu0 25
    %3205 = vperm.xlu0 %3204, %v378
    %v3206 = vpop.permute.xlu0 %3205
    %3207 = vset.pattern.permute.xlu0 25
    %3208 = vperm.xlu0 %3207, %v379
    %v3209 = vpop.permute.xlu0 %3208
    %3210 = vset.pattern.permute.xlu0 25
    %3211 = vperm.xlu0 %3210, %v380
    %v3212 = vpop.permute.xlu0 %3211
    %3213 = vset.pattern.permute.xlu0 25
    %3214 = vperm.xlu0 %3213, %v381
    %v3215 = vpop.permute.xlu0 %3214
    %3216 = vset.pattern.permute.xlu0 25
    %3217 = vperm.xlu0 %3216, %v382
    %v3218 = vpop.permute.xlu0 %3217
    %3219 = vset.pattern.permute.xlu0 25
    %3220 = vperm.xlu0 %3219, %v383
    %v3221 = vpop.permute.xlu0 %3220
    %3222 = vset.pattern.permute.xlu0 25
    %3223 = vperm.xlu0 %3222, %v384
    %v3224 = vpop.permute.xlu0 %3223
    %3225 = vset.pattern.permute.xlu0 25
    %3226 = vperm.xlu0 %3225, %v385
    %v3227 = vpop.permute.xlu0 %3226
    %3228 = vset.pattern.permute.xlu0 25
    %3229 = vperm.xlu0 %3228, %v386
    %v3230 = vpop.permute.xlu0 %3229
    %3231 = vset.pattern.permute.xlu0 25
    %3232 = vperm.xlu0 %3231, %v387
    %v3233 = vpop.permute.xlu0 %3232
    %3234 = vset.pattern.permute.xlu0 25
    %3235 = vperm.xlu0 %3234, %v388
    %v3236 = vpop.permute.xlu0 %3235
    %3237 = vset.pattern.permute.xlu0 25
    %3238 = vperm.xlu0 %3237, %v389
    %v3239 = vpop.permute.xlu0 %3238
    %vm3240 = vcmp.eq.s32.totalorder %v3194, %v391
    %vm3241 = vcmp.eq.s32.totalorder %v3197, %v391
    %vm3242 = vcmp.eq.s32.totalorder %v3200, %v391
    %vm3243 = vcmp.eq.s32.totalorder %v3203, %v391
    %vm3244 = vcmp.eq.s32.totalorder %v3206, %v391
    %vm3245 = vcmp.eq.s32.totalorder %v3209, %v391
    %vm3246 = vcmp.eq.s32.totalorder %v3212, %v391
    %vm3247 = vcmp.eq.s32.totalorder %v3215, %v391
    %vm3248 = vcmp.eq.s32.totalorder %v3218, %v391
    %vm3249 = vcmp.eq.s32.totalorder %v3221, %v391
    %vm3250 = vcmp.eq.s32.totalorder %v3224, %v391
    %vm3251 = vcmp.eq.s32.totalorder %v3227, %v391
    %vm3252 = vcmp.eq.s32.totalorder %v3230, %v391
    %vm3253 = vcmp.eq.s32.totalorder %v3233, %v391
    %vm3254 = vcmp.eq.s32.totalorder %v3236, %v391
    %vm3255 = vcmp.eq.s32.totalorder %v3239, %v391
    %v3256 = vsel %vm3240, 1, 0
    %v3257 = vsel %vm3241, 1, 0
    %v3258 = vsel %vm3242, 1, 0
    %v3259 = vsel %vm3243, 1, 0
    %v3260 = vsel %vm3244, 1, 0
    %v3261 = vsel %vm3245, 1, 0
    %v3262 = vsel %vm3246, 1, 0
    %v3263 = vsel %vm3247, 1, 0
    %v3264 = vsel %vm3248, 1, 0
    %v3265 = vsel %vm3249, 1, 0
    %v3266 = vsel %vm3250, 1, 0
    %v3267 = vsel %vm3251, 1, 0
    %v3268 = vsel %vm3252, 1, 0
    %v3269 = vsel %vm3253, 1, 0
    %v3270 = vsel %vm3254, 1, 0
    %v3271 = vsel %vm3255, 1, 0
    %v3272 = vcvt.s32.f32 %v3256
    %v3273 = vcvt.s32.f32 %v3257
    %v3274 = vcvt.s32.f32 %v3258
    %v3275 = vcvt.s32.f32 %v3259
    %v3276 = vcvt.s32.f32 %v3260
    %v3277 = vcvt.s32.f32 %v3261
    %v3278 = vcvt.s32.f32 %v3262
    %v3279 = vcvt.s32.f32 %v3263
    %v3280 = vcvt.s32.f32 %v3264
    %v3281 = vcvt.s32.f32 %v3265
    %v3282 = vcvt.s32.f32 %v3266
    %v3283 = vcvt.s32.f32 %v3267
    %v3284 = vcvt.s32.f32 %v3268
    %v3285 = vcvt.s32.f32 %v3269
    %v3286 = vcvt.s32.f32 %v3270
    %v3287 = vcvt.s32.f32 %v3271
    %v3288 = vadd.f32 %v3176, %v3272
    %v3289 = vadd.f32 %v3177, %v3273
    %v3290 = vadd.f32 %v3178, %v3274
    %v3291 = vadd.f32 %v3179, %v3275
    %v3292 = vadd.f32 %v3180, %v3276
    %v3293 = vadd.f32 %v3181, %v3277
    %v3294 = vadd.f32 %v3182, %v3278
    %v3295 = vadd.f32 %v3183, %v3279
    %v3296 = vadd.f32 %v3184, %v3280
    %v3297 = vadd.f32 %v3185, %v3281
    %v3298 = vadd.f32 %v3186, %v3282
    %v3299 = vadd.f32 %v3187, %v3283
    %v3300 = vadd.f32 %v3188, %v3284
    %v3301 = vadd.f32 %v3189, %v3285
    %v3302 = vadd.f32 %v3190, %v3286
    %v3303 = vadd.f32 %v3191, %v3287
    %3304 = vset.pattern.permute.xlu0 26
    %3305 = vperm.xlu0 %3304, %v374
    %v3306 = vpop.permute.xlu0 %3305
    %3307 = vset.pattern.permute.xlu0 26
    %3308 = vperm.xlu0 %3307, %v375
    %v3309 = vpop.permute.xlu0 %3308
    %3310 = vset.pattern.permute.xlu0 26
    %3311 = vperm.xlu0 %3310, %v376
    %v3312 = vpop.permute.xlu0 %3311
    %3313 = vset.pattern.permute.xlu0 26
    %3314 = vperm.xlu0 %3313, %v377
    %v3315 = vpop.permute.xlu0 %3314
    %3316 = vset.pattern.permute.xlu0 26
    %3317 = vperm.xlu0 %3316, %v378
    %v3318 = vpop.permute.xlu0 %3317
    %3319 = vset.pattern.permute.xlu0 26
    %3320 = vperm.xlu0 %3319, %v379
    %v3321 = vpop.permute.xlu0 %3320
    %3322 = vset.pattern.permute.xlu0 26
    %3323 = vperm.xlu0 %3322, %v380
    %v3324 = vpop.permute.xlu0 %3323
    %3325 = vset.pattern.permute.xlu0 26
    %3326 = vperm.xlu0 %3325, %v381
    %v3327 = vpop.permute.xlu0 %3326
    %3328 = vset.pattern.permute.xlu0 26
    %3329 = vperm.xlu0 %3328, %v382
    %v3330 = vpop.permute.xlu0 %3329
    %3331 = vset.pattern.permute.xlu0 26
    %3332 = vperm.xlu0 %3331, %v383
    %v3333 = vpop.permute.xlu0 %3332
    %3334 = vset.pattern.permute.xlu0 26
    %3335 = vperm.xlu0 %3334, %v384
    %v3336 = vpop.permute.xlu0 %3335
    %3337 = vset.pattern.permute.xlu0 26
    %3338 = vperm.xlu0 %3337, %v385
    %v3339 = vpop.permute.xlu0 %3338
    %3340 = vset.pattern.permute.xlu0 26
    %3341 = vperm.xlu0 %3340, %v386
    %v3342 = vpop.permute.xlu0 %3341
    %3343 = vset.pattern.permute.xlu0 26
    %3344 = vperm.xlu0 %3343, %v387
    %v3345 = vpop.permute.xlu0 %3344
    %3346 = vset.pattern.permute.xlu0 26
    %3347 = vperm.xlu0 %3346, %v388
    %v3348 = vpop.permute.xlu0 %3347
    %3349 = vset.pattern.permute.xlu0 26
    %3350 = vperm.xlu0 %3349, %v389
    %v3351 = vpop.permute.xlu0 %3350
    %vm3352 = vcmp.eq.s32.totalorder %v3306, %v391
    %vm3353 = vcmp.eq.s32.totalorder %v3309, %v391
    %vm3354 = vcmp.eq.s32.totalorder %v3312, %v391
    %vm3355 = vcmp.eq.s32.totalorder %v3315, %v391
    %vm3356 = vcmp.eq.s32.totalorder %v3318, %v391
    %vm3357 = vcmp.eq.s32.totalorder %v3321, %v391
    %vm3358 = vcmp.eq.s32.totalorder %v3324, %v391
    %vm3359 = vcmp.eq.s32.totalorder %v3327, %v391
    %vm3360 = vcmp.eq.s32.totalorder %v3330, %v391
    %vm3361 = vcmp.eq.s32.totalorder %v3333, %v391
    %vm3362 = vcmp.eq.s32.totalorder %v3336, %v391
    %vm3363 = vcmp.eq.s32.totalorder %v3339, %v391
    %vm3364 = vcmp.eq.s32.totalorder %v3342, %v391
    %vm3365 = vcmp.eq.s32.totalorder %v3345, %v391
    %vm3366 = vcmp.eq.s32.totalorder %v3348, %v391
    %vm3367 = vcmp.eq.s32.totalorder %v3351, %v391
    %v3368 = vsel %vm3352, 1, 0
    %v3369 = vsel %vm3353, 1, 0
    %v3370 = vsel %vm3354, 1, 0
    %v3371 = vsel %vm3355, 1, 0
    %v3372 = vsel %vm3356, 1, 0
    %v3373 = vsel %vm3357, 1, 0
    %v3374 = vsel %vm3358, 1, 0
    %v3375 = vsel %vm3359, 1, 0
    %v3376 = vsel %vm3360, 1, 0
    %v3377 = vsel %vm3361, 1, 0
    %v3378 = vsel %vm3362, 1, 0
    %v3379 = vsel %vm3363, 1, 0
    %v3380 = vsel %vm3364, 1, 0
    %v3381 = vsel %vm3365, 1, 0
    %v3382 = vsel %vm3366, 1, 0
    %v3383 = vsel %vm3367, 1, 0
    %v3384 = vcvt.s32.f32 %v3368
    %v3385 = vcvt.s32.f32 %v3369
    %v3386 = vcvt.s32.f32 %v3370
    %v3387 = vcvt.s32.f32 %v3371
    %v3388 = vcvt.s32.f32 %v3372
    %v3389 = vcvt.s32.f32 %v3373
    %v3390 = vcvt.s32.f32 %v3374
    %v3391 = vcvt.s32.f32 %v3375
    %v3392 = vcvt.s32.f32 %v3376
    %v3393 = vcvt.s32.f32 %v3377
    %v3394 = vcvt.s32.f32 %v3378
    %v3395 = vcvt.s32.f32 %v3379
    %v3396 = vcvt.s32.f32 %v3380
    %v3397 = vcvt.s32.f32 %v3381
    %v3398 = vcvt.s32.f32 %v3382
    %v3399 = vcvt.s32.f32 %v3383
    %v3400 = vadd.f32 %v3288, %v3384
    %v3401 = vadd.f32 %v3289, %v3385
    %v3402 = vadd.f32 %v3290, %v3386
    %v3403 = vadd.f32 %v3291, %v3387
    %v3404 = vadd.f32 %v3292, %v3388
    %v3405 = vadd.f32 %v3293, %v3389
    %v3406 = vadd.f32 %v3294, %v3390
    %v3407 = vadd.f32 %v3295, %v3391
    %v3408 = vadd.f32 %v3296, %v3392
    %v3409 = vadd.f32 %v3297, %v3393
    %v3410 = vadd.f32 %v3298, %v3394
    %v3411 = vadd.f32 %v3299, %v3395
    %v3412 = vadd.f32 %v3300, %v3396
    %v3413 = vadd.f32 %v3301, %v3397
    %v3414 = vadd.f32 %v3302, %v3398
    %v3415 = vadd.f32 %v3303, %v3399
    %3416 = vset.pattern.permute.xlu0 27
    %3417 = vperm.xlu0 %3416, %v374
    %v3418 = vpop.permute.xlu0 %3417
    %3419 = vset.pattern.permute.xlu0 27
    %3420 = vperm.xlu0 %3419, %v375
    %v3421 = vpop.permute.xlu0 %3420
    %3422 = vset.pattern.permute.xlu0 27
    %3423 = vperm.xlu0 %3422, %v376
    %v3424 = vpop.permute.xlu0 %3423
    %3425 = vset.pattern.permute.xlu0 27
    %3426 = vperm.xlu0 %3425, %v377
    %v3427 = vpop.permute.xlu0 %3426
    %3428 = vset.pattern.permute.xlu0 27
    %3429 = vperm.xlu0 %3428, %v378
    %v3430 = vpop.permute.xlu0 %3429
    %3431 = vset.pattern.permute.xlu0 27
    %3432 = vperm.xlu0 %3431, %v379
    %v3433 = vpop.permute.xlu0 %3432
    %3434 = vset.pattern.permute.xlu0 27
    %3435 = vperm.xlu0 %3434, %v380
    %v3436 = vpop.permute.xlu0 %3435
    %3437 = vset.pattern.permute.xlu0 27
    %3438 = vperm.xlu0 %3437, %v381
    %v3439 = vpop.permute.xlu0 %3438
    %3440 = vset.pattern.permute.xlu0 27
    %3441 = vperm.xlu0 %3440, %v382
    %v3442 = vpop.permute.xlu0 %3441
    %3443 = vset.pattern.permute.xlu0 27
    %3444 = vperm.xlu0 %3443, %v383
    %v3445 = vpop.permute.xlu0 %3444
    %3446 = vset.pattern.permute.xlu0 27
    %3447 = vperm.xlu0 %3446, %v384
    %v3448 = vpop.permute.xlu0 %3447
    %3449 = vset.pattern.permute.xlu0 27
    %3450 = vperm.xlu0 %3449, %v385
    %v3451 = vpop.permute.xlu0 %3450
    %3452 = vset.pattern.permute.xlu0 27
    %3453 = vperm.xlu0 %3452, %v386
    %v3454 = vpop.permute.xlu0 %3453
    %3455 = vset.pattern.permute.xlu0 27
    %3456 = vperm.xlu0 %3455, %v387
    %v3457 = vpop.permute.xlu0 %3456
    %3458 = vset.pattern.permute.xlu0 27
    %3459 = vperm.xlu0 %3458, %v388
    %v3460 = vpop.permute.xlu0 %3459
    %3461 = vset.pattern.permute.xlu0 27
    %3462 = vperm.xlu0 %3461, %v389
    %v3463 = vpop.permute.xlu0 %3462
    %vm3464 = vcmp.eq.s32.totalorder %v3418, %v391
    %vm3465 = vcmp.eq.s32.totalorder %v3421, %v391
    %vm3466 = vcmp.eq.s32.totalorder %v3424, %v391
    %vm3467 = vcmp.eq.s32.totalorder %v3427, %v391
    %vm3468 = vcmp.eq.s32.totalorder %v3430, %v391
    %vm3469 = vcmp.eq.s32.totalorder %v3433, %v391
    %vm3470 = vcmp.eq.s32.totalorder %v3436, %v391
    %vm3471 = vcmp.eq.s32.totalorder %v3439, %v391
    %vm3472 = vcmp.eq.s32.totalorder %v3442, %v391
    %vm3473 = vcmp.eq.s32.totalorder %v3445, %v391
    %vm3474 = vcmp.eq.s32.totalorder %v3448, %v391
    %vm3475 = vcmp.eq.s32.totalorder %v3451, %v391
    %vm3476 = vcmp.eq.s32.totalorder %v3454, %v391
    %vm3477 = vcmp.eq.s32.totalorder %v3457, %v391
    %vm3478 = vcmp.eq.s32.totalorder %v3460, %v391
    %vm3479 = vcmp.eq.s32.totalorder %v3463, %v391
    %v3480 = vsel %vm3464, 1, 0
    %v3481 = vsel %vm3465, 1, 0
    %v3482 = vsel %vm3466, 1, 0
    %v3483 = vsel %vm3467, 1, 0
    %v3484 = vsel %vm3468, 1, 0
    %v3485 = vsel %vm3469, 1, 0
    %v3486 = vsel %vm3470, 1, 0
    %v3487 = vsel %vm3471, 1, 0
    %v3488 = vsel %vm3472, 1, 0
    %v3489 = vsel %vm3473, 1, 0
    %v3490 = vsel %vm3474, 1, 0
    %v3491 = vsel %vm3475, 1, 0
    %v3492 = vsel %vm3476, 1, 0
    %v3493 = vsel %vm3477, 1, 0
    %v3494 = vsel %vm3478, 1, 0
    %v3495 = vsel %vm3479, 1, 0
    %v3496 = vcvt.s32.f32 %v3480
    %v3497 = vcvt.s32.f32 %v3481
    %v3498 = vcvt.s32.f32 %v3482
    %v3499 = vcvt.s32.f32 %v3483
    %v3500 = vcvt.s32.f32 %v3484
    %v3501 = vcvt.s32.f32 %v3485
    %v3502 = vcvt.s32.f32 %v3486
    %v3503 = vcvt.s32.f32 %v3487
    %v3504 = vcvt.s32.f32 %v3488
    %v3505 = vcvt.s32.f32 %v3489
    %v3506 = vcvt.s32.f32 %v3490
    %v3507 = vcvt.s32.f32 %v3491
    %v3508 = vcvt.s32.f32 %v3492
    %v3509 = vcvt.s32.f32 %v3493
    %v3510 = vcvt.s32.f32 %v3494
    %v3511 = vcvt.s32.f32 %v3495
    %v3512 = vadd.f32 %v3400, %v3496
    %v3513 = vadd.f32 %v3401, %v3497
    %v3514 = vadd.f32 %v3402, %v3498
    %v3515 = vadd.f32 %v3403, %v3499
    %v3516 = vadd.f32 %v3404, %v3500
    %v3517 = vadd.f32 %v3405, %v3501
    %v3518 = vadd.f32 %v3406, %v3502
    %v3519 = vadd.f32 %v3407, %v3503
    %v3520 = vadd.f32 %v3408, %v3504
    %v3521 = vadd.f32 %v3409, %v3505
    %v3522 = vadd.f32 %v3410, %v3506
    %v3523 = vadd.f32 %v3411, %v3507
    %v3524 = vadd.f32 %v3412, %v3508
    %v3525 = vadd.f32 %v3413, %v3509
    %v3526 = vadd.f32 %v3414, %v3510
    %v3527 = vadd.f32 %v3415, %v3511
    %3528 = vset.pattern.permute.xlu0 28
    %3529 = vperm.xlu0 %3528, %v374
    %v3530 = vpop.permute.xlu0 %3529
    %3531 = vset.pattern.permute.xlu0 28
    %3532 = vperm.xlu0 %3531, %v375
    %v3533 = vpop.permute.xlu0 %3532
    %3534 = vset.pattern.permute.xlu0 28
    %3535 = vperm.xlu0 %3534, %v376
    %v3536 = vpop.permute.xlu0 %3535
    %3537 = vset.pattern.permute.xlu0 28
    %3538 = vperm.xlu0 %3537, %v377
    %v3539 = vpop.permute.xlu0 %3538
    %3540 = vset.pattern.permute.xlu0 28
    %3541 = vperm.xlu0 %3540, %v378
    %v3542 = vpop.permute.xlu0 %3541
    %3543 = vset.pattern.permute.xlu0 28
    %3544 = vperm.xlu0 %3543, %v379
    %v3545 = vpop.permute.xlu0 %3544
    %3546 = vset.pattern.permute.xlu0 28
    %3547 = vperm.xlu0 %3546, %v380
    %v3548 = vpop.permute.xlu0 %3547
    %3549 = vset.pattern.permute.xlu0 28
    %3550 = vperm.xlu0 %3549, %v381
    %v3551 = vpop.permute.xlu0 %3550
    %3552 = vset.pattern.permute.xlu0 28
    %3553 = vperm.xlu0 %3552, %v382
    %v3554 = vpop.permute.xlu0 %3553
    %3555 = vset.pattern.permute.xlu0 28
    %3556 = vperm.xlu0 %3555, %v383
    %v3557 = vpop.permute.xlu0 %3556
    %3558 = vset.pattern.permute.xlu0 28
    %3559 = vperm.xlu0 %3558, %v384
    %v3560 = vpop.permute.xlu0 %3559
    %3561 = vset.pattern.permute.xlu0 28
    %3562 = vperm.xlu0 %3561, %v385
    %v3563 = vpop.permute.xlu0 %3562
    %3564 = vset.pattern.permute.xlu0 28
    %3565 = vperm.xlu0 %3564, %v386
    %v3566 = vpop.permute.xlu0 %3565
    %3567 = vset.pattern.permute.xlu0 28
    %3568 = vperm.xlu0 %3567, %v387
    %v3569 = vpop.permute.xlu0 %3568
    %3570 = vset.pattern.permute.xlu0 28
    %3571 = vperm.xlu0 %3570, %v388
    %v3572 = vpop.permute.xlu0 %3571
    %3573 = vset.pattern.permute.xlu0 28
    %3574 = vperm.xlu0 %3573, %v389
    %v3575 = vpop.permute.xlu0 %3574
    %vm3576 = vcmp.eq.s32.totalorder %v3530, %v391
    %vm3577 = vcmp.eq.s32.totalorder %v3533, %v391
    %vm3578 = vcmp.eq.s32.totalorder %v3536, %v391
    %vm3579 = vcmp.eq.s32.totalorder %v3539, %v391
    %vm3580 = vcmp.eq.s32.totalorder %v3542, %v391
    %vm3581 = vcmp.eq.s32.totalorder %v3545, %v391
    %vm3582 = vcmp.eq.s32.totalorder %v3548, %v391
    %vm3583 = vcmp.eq.s32.totalorder %v3551, %v391
    %vm3584 = vcmp.eq.s32.totalorder %v3554, %v391
    %vm3585 = vcmp.eq.s32.totalorder %v3557, %v391
    %vm3586 = vcmp.eq.s32.totalorder %v3560, %v391
    %vm3587 = vcmp.eq.s32.totalorder %v3563, %v391
    %vm3588 = vcmp.eq.s32.totalorder %v3566, %v391
    %vm3589 = vcmp.eq.s32.totalorder %v3569, %v391
    %vm3590 = vcmp.eq.s32.totalorder %v3572, %v391
    %vm3591 = vcmp.eq.s32.totalorder %v3575, %v391
    %v3592 = vsel %vm3576, 1, 0
    %v3593 = vsel %vm3577, 1, 0
    %v3594 = vsel %vm3578, 1, 0
    %v3595 = vsel %vm3579, 1, 0
    %v3596 = vsel %vm3580, 1, 0
    %v3597 = vsel %vm3581, 1, 0
    %v3598 = vsel %vm3582, 1, 0
    %v3599 = vsel %vm3583, 1, 0
    %v3600 = vsel %vm3584, 1, 0
    %v3601 = vsel %vm3585, 1, 0
    %v3602 = vsel %vm3586, 1, 0
    %v3603 = vsel %vm3587, 1, 0
    %v3604 = vsel %vm3588, 1, 0
    %v3605 = vsel %vm3589, 1, 0
    %v3606 = vsel %vm3590, 1, 0
    %v3607 = vsel %vm3591, 1, 0
    %v3608 = vcvt.s32.f32 %v3592
    %v3609 = vcvt.s32.f32 %v3593
    %v3610 = vcvt.s32.f32 %v3594
    %v3611 = vcvt.s32.f32 %v3595
    %v3612 = vcvt.s32.f32 %v3596
    %v3613 = vcvt.s32.f32 %v3597
    %v3614 = vcvt.s32.f32 %v3598
    %v3615 = vcvt.s32.f32 %v3599
    %v3616 = vcvt.s32.f32 %v3600
    %v3617 = vcvt.s32.f32 %v3601
    %v3618 = vcvt.s32.f32 %v3602
    %v3619 = vcvt.s32.f32 %v3603
    %v3620 = vcvt.s32.f32 %v3604
    %v3621 = vcvt.s32.f32 %v3605
    %v3622 = vcvt.s32.f32 %v3606
    %v3623 = vcvt.s32.f32 %v3607
    %v3624 = vadd.f32 %v3512, %v3608
    %v3625 = vadd.f32 %v3513, %v3609
    %v3626 = vadd.f32 %v3514, %v3610
    %v3627 = vadd.f32 %v3515, %v3611
    %v3628 = vadd.f32 %v3516, %v3612
    %v3629 = vadd.f32 %v3517, %v3613
    %v3630 = vadd.f32 %v3518, %v3614
    %v3631 = vadd.f32 %v3519, %v3615
    %v3632 = vadd.f32 %v3520, %v3616
    %v3633 = vadd.f32 %v3521, %v3617
    %v3634 = vadd.f32 %v3522, %v3618
    %v3635 = vadd.f32 %v3523, %v3619
    %v3636 = vadd.f32 %v3524, %v3620
    %v3637 = vadd.f32 %v3525, %v3621
    %v3638 = vadd.f32 %v3526, %v3622
    %v3639 = vadd.f32 %v3527, %v3623
    %3640 = vset.pattern.permute.xlu0 29
    %3641 = vperm.xlu0 %3640, %v374
    %v3642 = vpop.permute.xlu0 %3641
    %3643 = vset.pattern.permute.xlu0 29
    %3644 = vperm.xlu0 %3643, %v375
    %v3645 = vpop.permute.xlu0 %3644
    %3646 = vset.pattern.permute.xlu0 29
    %3647 = vperm.xlu0 %3646, %v376
    %v3648 = vpop.permute.xlu0 %3647
    %3649 = vset.pattern.permute.xlu0 29
    %3650 = vperm.xlu0 %3649, %v377
    %v3651 = vpop.permute.xlu0 %3650
    %3652 = vset.pattern.permute.xlu0 29
    %3653 = vperm.xlu0 %3652, %v378
    %v3654 = vpop.permute.xlu0 %3653
    %3655 = vset.pattern.permute.xlu0 29
    %3656 = vperm.xlu0 %3655, %v379
    %v3657 = vpop.permute.xlu0 %3656
    %3658 = vset.pattern.permute.xlu0 29
    %3659 = vperm.xlu0 %3658, %v380
    %v3660 = vpop.permute.xlu0 %3659
    %3661 = vset.pattern.permute.xlu0 29
    %3662 = vperm.xlu0 %3661, %v381
    %v3663 = vpop.permute.xlu0 %3662
    %3664 = vset.pattern.permute.xlu0 29
    %3665 = vperm.xlu0 %3664, %v382
    %v3666 = vpop.permute.xlu0 %3665
    %3667 = vset.pattern.permute.xlu0 29
    %3668 = vperm.xlu0 %3667, %v383
    %v3669 = vpop.permute.xlu0 %3668
    %3670 = vset.pattern.permute.xlu0 29
    %3671 = vperm.xlu0 %3670, %v384
    %v3672 = vpop.permute.xlu0 %3671
    %3673 = vset.pattern.permute.xlu0 29
    %3674 = vperm.xlu0 %3673, %v385
    %v3675 = vpop.permute.xlu0 %3674
    %3676 = vset.pattern.permute.xlu0 29
    %3677 = vperm.xlu0 %3676, %v386
    %v3678 = vpop.permute.xlu0 %3677
    %3679 = vset.pattern.permute.xlu0 29
    %3680 = vperm.xlu0 %3679, %v387
    %v3681 = vpop.permute.xlu0 %3680
    %3682 = vset.pattern.permute.xlu0 29
    %3683 = vperm.xlu0 %3682, %v388
    %v3684 = vpop.permute.xlu0 %3683
    %3685 = vset.pattern.permute.xlu0 29
    %3686 = vperm.xlu0 %3685, %v389
    %v3687 = vpop.permute.xlu0 %3686
    %vm3688 = vcmp.eq.s32.totalorder %v3642, %v391
    %vm3689 = vcmp.eq.s32.totalorder %v3645, %v391
    %vm3690 = vcmp.eq.s32.totalorder %v3648, %v391
    %vm3691 = vcmp.eq.s32.totalorder %v3651, %v391
    %vm3692 = vcmp.eq.s32.totalorder %v3654, %v391
    %vm3693 = vcmp.eq.s32.totalorder %v3657, %v391
    %vm3694 = vcmp.eq.s32.totalorder %v3660, %v391
    %vm3695 = vcmp.eq.s32.totalorder %v3663, %v391
    %vm3696 = vcmp.eq.s32.totalorder %v3666, %v391
    %vm3697 = vcmp.eq.s32.totalorder %v3669, %v391
    %vm3698 = vcmp.eq.s32.totalorder %v3672, %v391
    %vm3699 = vcmp.eq.s32.totalorder %v3675, %v391
    %vm3700 = vcmp.eq.s32.totalorder %v3678, %v391
    %vm3701 = vcmp.eq.s32.totalorder %v3681, %v391
    %vm3702 = vcmp.eq.s32.totalorder %v3684, %v391
    %vm3703 = vcmp.eq.s32.totalorder %v3687, %v391
    %v3704 = vsel %vm3688, 1, 0
    %v3705 = vsel %vm3689, 1, 0
    %v3706 = vsel %vm3690, 1, 0
    %v3707 = vsel %vm3691, 1, 0
    %v3708 = vsel %vm3692, 1, 0
    %v3709 = vsel %vm3693, 1, 0
    %v3710 = vsel %vm3694, 1, 0
    %v3711 = vsel %vm3695, 1, 0
    %v3712 = vsel %vm3696, 1, 0
    %v3713 = vsel %vm3697, 1, 0
    %v3714 = vsel %vm3698, 1, 0
    %v3715 = vsel %vm3699, 1, 0
    %v3716 = vsel %vm3700, 1, 0
    %v3717 = vsel %vm3701, 1, 0
    %v3718 = vsel %vm3702, 1, 0
    %v3719 = vsel %vm3703, 1, 0
    %v3720 = vcvt.s32.f32 %v3704
    %v3721 = vcvt.s32.f32 %v3705
    %v3722 = vcvt.s32.f32 %v3706
    %v3723 = vcvt.s32.f32 %v3707
    %v3724 = vcvt.s32.f32 %v3708
    %v3725 = vcvt.s32.f32 %v3709
    %v3726 = vcvt.s32.f32 %v3710
    %v3727 = vcvt.s32.f32 %v3711
    %v3728 = vcvt.s32.f32 %v3712
    %v3729 = vcvt.s32.f32 %v3713
    %v3730 = vcvt.s32.f32 %v3714
    %v3731 = vcvt.s32.f32 %v3715
    %v3732 = vcvt.s32.f32 %v3716
    %v3733 = vcvt.s32.f32 %v3717
    %v3734 = vcvt.s32.f32 %v3718
    %v3735 = vcvt.s32.f32 %v3719
    %v3736 = vadd.f32 %v3624, %v3720
    %v3737 = vadd.f32 %v3625, %v3721
    %v3738 = vadd.f32 %v3626, %v3722
    %v3739 = vadd.f32 %v3627, %v3723
    %v3740 = vadd.f32 %v3628, %v3724
    %v3741 = vadd.f32 %v3629, %v3725
    %v3742 = vadd.f32 %v3630, %v3726
    %v3743 = vadd.f32 %v3631, %v3727
    %v3744 = vadd.f32 %v3632, %v3728
    %v3745 = vadd.f32 %v3633, %v3729
    %v3746 = vadd.f32 %v3634, %v3730
    %v3747 = vadd.f32 %v3635, %v3731
    %v3748 = vadd.f32 %v3636, %v3732
    %v3749 = vadd.f32 %v3637, %v3733
    %v3750 = vadd.f32 %v3638, %v3734
    %v3751 = vadd.f32 %v3639, %v3735
    %v3752 = vpack.c.bf16 %v3737, %v3736
    %v3753 = vpack.c.bf16 %v3739, %v3738
    %v3754 = vpack.c.bf16 %v3741, %v3740
    %v3755 = vpack.c.bf16 %v3743, %v3742
    %v3756 = vpack.c.bf16 %v3745, %v3744
    %v3757 = vpack.c.bf16 %v3747, %v3746
    %v3758 = vpack.c.bf16 %v3749, %v3748
    %v3759 = vpack.c.bf16 %v3751, %v3750
    %v3760 = vld [vmem:[%s2] sm:$0xf]
    %v3761 = vld [vmem:[%s2 + $0x4] sm:$0xf]
    %v3762 = vld [vmem:[%s2 + $0x8] sm:$0xf]
    %v3763 = vld [vmem:[%s2 + $0xc] sm:$0xf]
    %v3764 = vld [vmem:[%s2 + $0x10] sm:$0xf]
    %v3765 = vld [vmem:[%s2 + $0x14] sm:$0xf]
    %v3766 = vld [vmem:[%s2 + $0x18] sm:$0xf]
    %v3767 = vld [vmem:[%s2 + $0x1c] sm:$0xf]
    %v3768 = vld [vmem:[%s2 + $0x20] sm:$0xf]
    %v3769 = vld [vmem:[%s2 + $0x24] sm:$0xf]
    %v3770 = vld [vmem:[%s2 + $0x28] sm:$0xf]
    %v3771 = vld [vmem:[%s2 + $0x2c] sm:$0xf]
    %v3772 = vld [vmem:[%s2 + $0x30] sm:$0xf]
    %v3773 = vld [vmem:[%s2 + $0x34] sm:$0xf]
    %v3774 = vld [vmem:[%s2 + $0x38] sm:$0xf]
    %v3775 = vld [vmem:[%s2 + $0x3c] sm:$0xf]
    %v3792 = vunpack.c.l.b16 %v3760
    %v3793 = vunpack.c.l.b16 %v3761
    %v3794 = vunpack.c.l.b16 %v3762
    %v3795 = vunpack.c.l.b16 %v3763
    %v3796 = vunpack.c.l.b16 %v3764
    %v3797 = vunpack.c.l.b16 %v3765
    %v3798 = vunpack.c.l.b16 %v3766
    %v3799 = vunpack.c.l.b16 %v3767
    %v3800 = vunpack.c.l.b16 %v3768
    %v3801 = vunpack.c.l.b16 %v3769
    %v3802 = vunpack.c.l.b16 %v3770
    %v3803 = vunpack.c.l.b16 %v3771
    %v3804 = vunpack.c.l.b16 %v3772
    %v3805 = vunpack.c.l.b16 %v3773
    %v3806 = vunpack.c.l.b16 %v3774
    %v3807 = vunpack.c.l.b16 %v3775
    %v3808 = vpack.c.b16 %v3793, %v3792
    %v3809 = vpack.c.b16 %v3795, %v3794
    %v3810 = vpack.c.b16 %v3797, %v3796
    %v3811 = vpack.c.b16 %v3799, %v3798
    %v3812 = vpack.c.b16 %v3801, %v3800
    %v3813 = vpack.c.b16 %v3803, %v3802
    %v3814 = vpack.c.b16 %v3805, %v3804
    %v3815 = vpack.c.b16 %v3807, %v3806
    %3824 = vmatprep.subr.bf16.mxu0 0
    %3825 = vmatpush1.bf16.msra.mxu0 %v3815
    %3826 = vmatprep.subr.bf16.mxu0 0
    %3827 = vmatpush1.bf16.msra.mxu0 %v3814
    %3828 = vmatprep.subr.bf16.mxu0 0
    %3829 = vmatpush1.bf16.msra.mxu0 %v3813
    %3830 = vmatprep.subr.bf16.mxu0 0
    %3831 = vmatpush1.bf16.msra.mxu0 %v3812
    %3832 = vmatprep.subr.bf16.mxu0 0
    %3833 = vmatpush1.bf16.msra.mxu0 %v3811
    %3834 = vmatprep.subr.bf16.mxu0 0
    %3835 = vmatpush1.bf16.msra.mxu0 %v3810
    %3836 = vmatprep.subr.bf16.mxu0 0
    %3837 = vmatpush1.bf16.msra.mxu0 %v3809
    %3838 = vmatprep.subr.bf16.mxu0 0
    %3839 = vmatpush1.bf16.msra.mxu0 %v3808
    %3840 = vmatprep.subr.bf16.mxu0 0
    %3841 = vmatpush2.bf16.msra.mxu0 0
    %3842 = vmatprep.subr.bf16.mxu0 0
    %3843 = vmatpush2.bf16.msra.mxu0 0
    %3844 = vmatprep.subr.bf16.mxu0 0
    %3845 = vmatpush2.bf16.msra.mxu0 0
    %3846 = vmatprep.subr.bf16.mxu0 0
    %3847 = vmatpush2.bf16.msra.mxu0 0
    %3848 = vmatprep.subr.bf16.mxu0 0
    %3849 = vmatpush2.bf16.msra.mxu0 0
    %3850 = vmatprep.subr.bf16.mxu0 0
    %3851 = vmatpush2.bf16.msra.mxu0 0
    %3852 = vmatprep.subr.bf16.mxu0 0
    %3853 = vmatpush2.bf16.msra.mxu0 0
    %3854 = vmatprep.subr.bf16.mxu0 0
    %3855 = vmatpush2.bf16.msra.mxu0 0
    %3856 = vmatprep.mubr.bf16.mxu0 0
    %3857 = vmatmul.mubr.bf16.gmra.mxu0 %v3752
    %v3858 = vpop.f32.mrf.mxu0
    %v3859 = vadd.f32 0.0, %v3858
    %v3860 = vpop.f32.mrf.mxu0
    %v3861 = vpop.f32.mrf.mxu0
    %v3862 = vadd.f32 0.0, %v3861
    %v3863 = vpop.f32.mrf.mxu0
    %3864 = vmatprep.mubr.bf16.mxu0 0
    %3865 = vmatmul.mubr.bf16.gmra.mxu0 %v3753
    %v3866 = vpop.f32.mrf.mxu0
    %v3867 = vadd.f32 0.0, %v3866
    %v3868 = vpop.f32.mrf.mxu0
    %v3869 = vpop.f32.mrf.mxu0
    %v3870 = vadd.f32 0.0, %v3869
    %v3871 = vpop.f32.mrf.mxu0
    %3872 = vmatprep.mubr.bf16.mxu0 0
    %3873 = vmatmul.mubr.bf16.gmra.mxu0 %v3754
    %v3874 = vpop.f32.mrf.mxu0
    %v3875 = vadd.f32 0.0, %v3874
    %v3876 = vpop.f32.mrf.mxu0
    %v3877 = vpop.f32.mrf.mxu0
    %v3878 = vadd.f32 0.0, %v3877
    %v3879 = vpop.f32.mrf.mxu0
    %3880 = vmatprep.mubr.bf16.mxu0 0
    %3881 = vmatmul.mubr.bf16.gmra.mxu0 %v3755
    %v3882 = vpop.f32.mrf.mxu0
    %v3883 = vadd.f32 0.0, %v3882
    %v3884 = vpop.f32.mrf.mxu0
    %v3885 = vpop.f32.mrf.mxu0
    %v3886 = vadd.f32 0.0, %v3885
    %v3887 = vpop.f32.mrf.mxu0
    %3888 = vmatprep.mubr.bf16.mxu0 0
    %3889 = vmatmul.mubr.bf16.gmra.mxu0 %v3756
    %v3890 = vpop.f32.mrf.mxu0
    %v3891 = vadd.f32 0.0, %v3890
    %v3892 = vpop.f32.mrf.mxu0
    %v3893 = vpop.f32.mrf.mxu0
    %v3894 = vadd.f32 0.0, %v3893
    %v3895 = vpop.f32.mrf.mxu0
    %3896 = vmatprep.mubr.bf16.mxu0 0
    %3897 = vmatmul.mubr.bf16.gmra.mxu0 %v3757
    %v3898 = vpop.f32.mrf.mxu0
    %v3899 = vadd.f32 0.0, %v3898
    %v3900 = vpop.f32.mrf.mxu0
    %v3901 = vpop.f32.mrf.mxu0
    %v3902 = vadd.f32 0.0, %v3901
    %v3903 = vpop.f32.mrf.mxu0
    %3904 = vmatprep.mubr.bf16.mxu0 0
    %3905 = vmatmul.mubr.bf16.gmra.mxu0 %v3758
    %v3906 = vpop.f32.mrf.mxu0
    %v3907 = vadd.f32 0.0, %v3906
    %v3908 = vpop.f32.mrf.mxu0
    %v3909 = vpop.f32.mrf.mxu0
    %v3910 = vadd.f32 0.0, %v3909
    %v3911 = vpop.f32.mrf.mxu0
    %3912 = vmatprep.mubr.bf16.mxu0 0
    %3913 = vmatmul.mubr.bf16.gmra.mxu0 %v3759
    %v3914 = vpop.f32.mrf.mxu0
    %v3915 = vadd.f32 0.0, %v3914
    %v3916 = vpop.f32.mrf.mxu0
    %v3917 = vpop.f32.mrf.mxu0
    %v3918 = vadd.f32 0.0, %v3917
    %v3919 = vpop.f32.mrf.mxu0
    %3920 = vdwg.mxu0
    %3921 = vst [vmem:[#allocation8] sm:$0xff] %v3859
    %3922 = vst [vmem:[#allocation8 + $0x8] sm:$0xff] %v3862
    %3923 = vst [vmem:[#allocation8 + $0x10] sm:$0xff] %v3867
    %3924 = vst [vmem:[#allocation8 + $0x18] sm:$0xff] %v3870
    %3925 = vst [vmem:[#allocation8 + $0x20] sm:$0xff] %v3875
    %3926 = vst [vmem:[#allocation8 + $0x28] sm:$0xff] %v3878
    %3927 = vst [vmem:[#allocation8 + $0x30] sm:$0xff] %v3883
    %3928 = vst [vmem:[#allocation8 + $0x38] sm:$0xff] %v3886
    %3929 = vst [vmem:[#allocation8 + $0x40] sm:$0xff] %v3891
    %3930 = vst [vmem:[#allocation8 + $0x48] sm:$0xff] %v3894
    %3931 = vst [vmem:[#allocation8 + $0x50] sm:$0xff] %v3899
    %3932 = vst [vmem:[#allocation8 + $0x58] sm:$0xff] %v3902
    %3933 = vst [vmem:[#allocation8 + $0x60] sm:$0xff] %v3907
    %3934 = vst [vmem:[#allocation8 + $0x68] sm:$0xff] %v3910
    %3935 = vst [vmem:[#allocation8 + $0x70] sm:$0xff] %v3915
    %3936 = vst [vmem:[#allocation8 + $0x78] sm:$0xff] %v3918
    // Predicated region
    $region22: #{tpu_custom_call.1} parent=1 // pred_check
      _
    $region23: #{tpu_custom_call.1} parent=1 // pred_check_branch
      %3938 = sbr.rel (0) target = $region25
    $region24: #{tpu_custom_call.1} parent=1 // pred_region
      %s3940 = ssub.s32 2048, 2048
      %3941 = vsyncadd [#allocation4], %s3940
      %s3942 = sshll.u32 [#allocation5], 4
      %s3943 = int_to_ptr.vmem [resolvable:$true] %s3942
      %3948 = dma.vmem_to_hbm [thread:$0]  %s3943, 2048, %s4, [#allocation4], 128, 128, 8
    $region25: #{tpu_custom_call.1} parent=1 // pred_fallthru
      _
    // Predicated region
    $region26: #{tpu_custom_call.1} parent=1 // pred_check
      _
    $region27: #{tpu_custom_call.1} parent=1 // pred_check_branch
      %3950 = sbr.rel (0) target = $region29
    $region28: #{tpu_custom_call.1} parent=1 // pred_region
      %s3952 = ssub.s32 1024, 1024
      %3953 = vsyncadd [#allocation7], %s3952
      %s3954 = sshll.u32 [#allocation6], 4
      %s3955 = int_to_ptr.vmem [resolvable:$true] %s3954
      %3960 = dma.vmem_to_hbm [thread:$0]  %s3955, 1024, %s5, [#allocation7], 64, 64, 4
    $region29: #{tpu_custom_call.1} parent=1 // pred_fallthru
      _
    // Predicated region
    $region30: #{tpu_custom_call.1} parent=1 // pred_check
      _
    $region31: #{tpu_custom_call.1} parent=1 // pred_check_branch
      %3962 = sbr.rel (0) target = $region33
    $region32: #{tpu_custom_call.1} parent=1 // pred_region
      %s3964 = ssub.s32 2048, 2048
      %3965 = vsyncadd [#allocation7], %s3964
      %s3966 = sshll.u32 [#allocation8], 4
      %s3967 = int_to_ptr.vmem [resolvable:$true] %s3966
      %3972 = dma.vmem_to_hbm [thread:$0]  %s3967, 2048, %s6, [#allocation7], 128, 128, 8
    $region33: #{tpu_custom_call.1} parent=1 // pred_fallthru
      _
    // Predicated region
    $region34: #{tpu_custom_call.1} parent=1 // pred_check
      _
    $region35: #{tpu_custom_call.1} parent=1 // pred_check_branch
      %3974 = sbr.rel (0) target = $region37
    $region36: #{tpu_custom_call.1} parent=1 // pred_region
      %3975 = dma.done [#allocation4], 2048
    $region37: #{tpu_custom_call.1} parent=1 // pred_fallthru
      _
    // Predicated region
    $region38: #{tpu_custom_call.1} parent=1 // pred_check
      _
    $region39: #{tpu_custom_call.1} parent=1 // pred_check_branch
      %3977 = sbr.rel (0) target = $region41
    $region40: #{tpu_custom_call.1} parent=1 // pred_region
      %3978 = dma.done [#allocation7], 1024
    $region41: #{tpu_custom_call.1} parent=1 // pred_fallthru
      _
    // Predicated region
    $region42: #{tpu_custom_call.1} parent=1 // pred_check
      _
    $region43: #{tpu_custom_call.1} parent=1 // pred_check_branch
      %3980 = sbr.rel (0) target = $region45
    $region44: #{tpu_custom_call.1} parent=1 // pred_region
      %3981 = dma.done [#allocation7], 2048
    $region45: #{tpu_custom_call.1} parent=1 // pred_fallthru
      _
    %3982 = vsyncpa [#allocation3], 1
    %3983 = vsyncpa [#allocation4], 1
    %3984 = vsyncpa [#allocation7], 1

</llo_original>
